<compile_context>
chip_gen: v5e
topology: v5e:2x2
jax: 0.10.0
libtpu: 0.0.40
codegen_flags: <defaults>
</compile_context>

<pallas_src>
import functools
import math

import jax
import jax.numpy as jnp
from jax.experimental import pallas as pl
from jax.experimental.pallas import tpu as pltpu


def _round_up(x, m):
    return ((x + m - 1) // m) * m


# ----------------------------------------------------------------------------
# Pallas kernels: matmul with fused +shift (+ReLU) epilogue
# ----------------------------------------------------------------------------
def _mm_kernel(a_ref, b_ref, t_ref, o_ref, *, relu):
    # Fast path: the whole K extent is one block, so a single MXU dot suffices
    # (no accumulator scratch, no k-loop, no pl.when phases).
    y = jnp.dot(a_ref[...], b_ref[...], preferred_element_type=jnp.float32)
    y = y + t_ref[...]
    if relu:
        y = jnp.maximum(y, 0.0)
    o_ref[...] = y.astype(o_ref.dtype)


def _mm_acc_kernel(a_ref, b_ref, t_ref, o_ref, acc_ref, *, relu):
    # General path (only used when K is too large for a single block; never
    # triggered at DeepLab's sizes, kept for robustness).
    k = pl.program_id(2)

    @pl.when(k == 0)
    def _():
        acc_ref[...] = jnp.zeros_like(acc_ref)

    acc_ref[...] += jnp.dot(a_ref[...], b_ref[...],
                            preferred_element_type=jnp.float32)

    @pl.when(k == pl.num_programs(2) - 1)
    def _():
        y = acc_ref[...] + t_ref[...]
        if relu:
            y = jnp.maximum(y, 0.0)
        o_ref[...] = y.astype(o_ref.dtype)


def _m_tiling(M):
    """Return (padded M, M tile). Split M only when it is big enough to matter;
    give >=2 blocks for 128..512-row layers so both v7x TensorCores get work."""
    Mp = _round_up(M, 16)
    if Mp <= 64:
        return Mp, Mp
    if Mp <= 256:
        tm = _round_up((Mp + 1) // 2, 16)
        return 2 * tm, tm
    return _round_up(M, 128), 128


_K_SINGLE_BLOCK_MAX = 2048  # full-K single block up to this size (plenty of VMEM)


def pallas_matmul(A, B, shift=None, relu=False):
    """out = relu_opt(A @ B + shift), f32 output.

    A: (M, K) any float dtype.  B: (Kb, N) with Kb >= K (B may be pre-padded
    along K to a multiple of 16 and pre-cast to bf16).  shift: (N,) or None.
    Inputs are fed to the MXU as bf16 with f32 accumulation."""
    M, K = A.shape
    Kb, N = B.shape
    assert Kb >= K

    if shift is None:
        shift = jnp.zeros((N,), jnp.float32)

    Kp = _round_up(Kb, 16)
    Mp, TM = _m_tiling(M)
    if N <= 128:
        Np, TN = N, N
    else:
        Np, TN = _round_up(N, 128), 128

    Ap = jnp.pad(A.astype(jnp.bfloat16), ((0, Mp - M), (0, Kp - K)))
    Bp = jnp.pad(B.astype(jnp.bfloat16), ((0, Kp - Kb), (0, Np - N)))
    tp = jnp.pad(shift.astype(jnp.float32), (0, Np - N)).reshape(1, Np)

    if Kp <= _K_SINGLE_BLOCK_MAX:
        grid = (Mp // TM, Np // TN)
        out = pl.pallas_call(
            functools.partial(_mm_kernel, relu=relu),
            out_shape=jax.ShapeDtypeStruct((Mp, Np), jnp.float32),
            grid_spec=pltpu.PrefetchScalarGridSpec(
                num_scalar_prefetch=0,
                grid=grid,
                in_specs=[
                    pl.BlockSpec((TM, Kp), lambda i, j: (i, 0)),
                    pl.BlockSpec((Kp, TN), lambda i, j: (0, j)),
                    pl.BlockSpec((1, TN), lambda i, j: (0, j)),
                ],
                out_specs=pl.BlockSpec((TM, TN), lambda i, j: (i, j)),
            ),
            compiler_params=pltpu.CompilerParams(
                dimension_semantics=("parallel", "parallel")),
        )(Ap, Bp, tp)
    else:
        TK = 512
        Kpp = _round_up(Kp, TK)
        Ap = jnp.pad(Ap, ((0, 0), (0, Kpp - Kp)))
        Bp = jnp.pad(Bp, ((0, Kpp - Kp), (0, 0)))
        grid = (Mp // TM, Np // TN, Kpp // TK)
        out = pl.pallas_call(
            functools.partial(_mm_acc_kernel, relu=relu),
            out_shape=jax.ShapeDtypeStruct((Mp, Np), jnp.float32),
            grid_spec=pltpu.PrefetchScalarGridSpec(
                num_scalar_prefetch=0,
                grid=grid,
                in_specs=[
                    pl.BlockSpec((TM, TK), lambda i, j, k: (i, k)),
                    pl.BlockSpec((TK, TN), lambda i, j, k: (k, j)),
                    pl.BlockSpec((1, TN), lambda i, j, k: (0, j)),
                ],
                out_specs=pl.BlockSpec((TM, TN), lambda i, j, k: (i, j)),
                scratch_shapes=[pltpu.VMEM((TM, TN), jnp.float32)],
            ),
            compiler_params=pltpu.CompilerParams(
                dimension_semantics=("parallel", "parallel", "arbitrary")),
        )(Ap, Bp, tp)

    return out[:M, :N]


# ----------------------------------------------------------------------------
# Convolution = padding-aware im2col (glue) + Pallas matmul (hot path)
# ----------------------------------------------------------------------------
def _kept_taps(kh, kw, stride, dilation, pad, H, W, Ho, Wo):
    """Static list of kernel taps whose receptive window touches the valid
    (non-zero-padded) region for at least one output position."""
    def contributes(i, size, osize):
        first = i * dilation
        last = first + stride * (osize - 1)
        return (first < pad + size) and (last >= pad)

    rows = [i for i in range(kh) if contributes(i, H, Ho)]
    cols = [j for j in range(kw) if contributes(j, W, Wo)]
    return [(i, j) for i in rows for j in cols]


def _im2col(x, taps, stride, dilation, pad, Ho, Wo):
    N, H, W, C = x.shape
    xp = jnp.pad(x, ((0, 0), (pad, pad), (pad, pad), (0, 0))) if pad else x
    pieces = []
    for (i, j) in taps:
        r0, c0 = i * dilation, j * dilation
        pieces.append(xp[:, r0:r0 + stride * (Ho - 1) + 1:stride,
                            c0:c0 + stride * (Wo - 1) + 1:stride, :])
    cols = pieces[0] if len(pieces) == 1 else jnp.concatenate(pieces, axis=-1)
    return cols.reshape(N * Ho * Wo, len(taps) * C)


def conv_block(x, layer, stride=1, dilation=1, relu=True):
    """Conv2d (no bias) + folded BatchNorm + optional ReLU.
    layer['w']: (kh,kw,cin,cout) with BN scale already folded in;
    layer['wp']: pre-reshaped (Kpad,cout) bf16; layer['shift']: (cout,)."""
    w = layer['w']
    kh, kw, cin, cout = w.shape
    N, H, W, C = x.shape
    pad = dilation * (kh // 2)  # padding used by all DeepLab convs
    Ho = (H + 2 * pad - dilation * (kh - 1) - 1) // stride + 1
    Wo = (W + 2 * pad - dilation * (kw - 1) - 1) // stride + 1

    taps = _kept_taps(kh, kw, stride, dilation, pad, H, W, Ho, Wo)
    cols = _im2col(x, taps, stride, dilation, pad, Ho, Wo)

    if len(taps) == kh * kw:
        B = layer['wp']                       # pre-padded / pre-cast at init
    else:
        idx = jnp.asarray([i * kw + j for (i, j) in taps], jnp.int32)
        B = w.reshape(kh * kw, cin, cout)[idx].reshape(len(taps) * cin, cout)

    y = pallas_matmul(cols, B, layer['shift'], relu=relu)
    return y.reshape(N, Ho, Wo, cout)


# ----------------------------------------------------------------------------
# Bilinear upsample (align_corners=True) as ONE fused Pallas matmul
# ----------------------------------------------------------------------------
def _bilin_matrix(out_size, in_size):
    if in_size == 1:
        return jnp.ones((out_size, 1), jnp.float32)
    if out_size == 1:
        return jnp.zeros((1, in_size), jnp.float32).at[0, 0].set(1.0)
    src = jnp.arange(out_size, dtype=jnp.float32) * (in_size - 1) / (out_size - 1)
    i0 = jnp.clip(jnp.floor(src).astype(jnp.int32), 0, in_size - 2)
    frac = src - i0.astype(jnp.float32)
    m = (jax.nn.one_hot(i0, in_size) * (1.0 - frac)[:, None]
         + jax.nn.one_hot(i0 + 1, in_size) * frac[:, None])
    return m.astype(jnp.float32)


def bilinear_upsample(x, out_h, out_w):
    # x: (N, H, W, C);  y = kron(Ah, Aw) applied over the flattened HW axis.
    N, H, W, C = x.shape
    if (H, W) == (out_h, out_w):
        return x
    Ah = _bilin_matrix(out_h, H)                        # (out_h, H)
    Aw = _bilin_matrix(out_w, W)                        # (out_w, W)
    A = jnp.einsum('ab,cd->acbd', Ah, Aw).reshape(out_h * out_w, H * W)
    x2 = x.reshape(N, H * W, C).transpose(0, 2, 1).reshape(N * C, H * W)
    y = pallas_matmul(x2, A.T)                          # (N*C, out_h*out_w)
    return y.reshape(N, C, out_h, out_w).transpose(0, 2, 3, 1)


# ----------------------------------------------------------------------------
# Deterministic synthetic parameters (Conv weights with folded BN scale, + shift)
# ----------------------------------------------------------------------------
def _prep(w, shift):
    kh, kw, cin, cout = w.shape
    K = kh * kw * cin
    Kp = _round_up(K, 16)
    wp = jnp.pad(w.reshape(K, cout).astype(jnp.bfloat16), ((0, Kp - K), (0, 0)))
    return {'w': w, 'wp': wp, 'shift': shift.astype(jnp.float32)}


def _make_conv(key, kh, kw, cin, cout):
    k1, k2, k3, k4 = jax.random.split(key, 4)
    fan_in = kh * kw * cin
    w = jax.random.normal(k1, (kh, kw, cin, cout), jnp.float32) / math.sqrt(fan_in)
    gamma = 1.0 + 0.1 * jax.random.normal(k2, (cout,), jnp.float32)
    beta = 0.1 * jax.random.normal(k3, (cout,), jnp.float32)
    mean = 0.1 * jax.random.normal(k4, (cout,), jnp.float32)
    var = jnp.ones((cout,), jnp.float32)
    scale = gamma / jnp.sqrt(var + 1e-5)
    shift = beta - mean * scale
    return _prep(w * scale, shift)      # fold BN scale into the conv weight


def init_params(key, num_classes=21):
    ks = jax.random.split(key, 16)
    p = {}
    # backbone (simplified ResNet-style stem, output_stride=16; low-level at stride 4)
    p['bb1'] = _make_conv(ks[0], 3, 3, 3, 16)
    p['bb2'] = _make_conv(ks[1], 3, 3, 16, 16)
    p['bb3'] = _make_conv(ks[2], 3, 3, 16, 32)
    p['bb4'] = _make_conv(ks[3], 3, 3, 32, 32)
    # ASPP (rates 1/6/12/18 + global pooling branch, then 1x1 projection)
    p['aspp1'] = _make_conv(ks[4], 1, 1, 32, 32)
    p['aspp2'] = _make_conv(ks[5], 3, 3, 32, 32)
    p['aspp3'] = _make_conv(ks[6], 3, 3, 32, 32)
    p['aspp4'] = _make_conv(ks[7], 3, 3, 32, 32)
    p['aspp_pool'] = _make_conv(ks[8], 1, 1, 32, 32)
    p['aspp_proj'] = _make_conv(ks[9], 1, 1, 5 * 32, 32)
    # decoder
    p['dec_low'] = _make_conv(ks[10], 1, 1, 16, 8)
    p['dec1'] = _make_conv(ks[11], 3, 3, 32 + 8, 32)
    p['dec2'] = _make_conv(ks[12], 3, 3, 32, 32)
    # final classifier: 1x1 conv WITH bias, no BN / ReLU
    w_cls = 0.1 * jax.random.normal(ks[13], (1, 1, 32, num_classes), jnp.float32)
    b_cls = 0.1 * jax.random.normal(ks[14], (num_classes,), jnp.float32)
    p['cls'] = _prep(w_cls, b_cls)
    return p


# ----------------------------------------------------------------------------
# ASPP with fused conv branches when the dilated 3x3s collapse to their centre tap
# ----------------------------------------------------------------------------
def aspp(h, params):
    Nb, Ho, Wo, C = h.shape
    rates = (6, 12, 18)

    def center_only(d):
        return _kept_taps(3, 3, 1, d, d, Ho, Wo, Ho, Wo) == [(1, 1)]

    if all(center_only(d) for d in rates):
        # On this feature map every non-centre tap of the dilated convs reads only
        # zero padding, so all four conv branches share the same im2col (= h itself)
        # -> ONE Pallas matmul with a 128-lane-dense output.
        ws, shifts = [], []
        for name in ('aspp1', 'aspp2', 'aspp3', 'aspp4'):
            w = params[name]['w']
            ws.append(w[w.shape[0] // 2, w.shape[1] // 2])       # centre tap (cin,cout)
            shifts.append(params[name]['shift'])
        Wcat = jnp.concatenate(ws, axis=1)
        Scat = jnp.concatenate(shifts)
        b1234 = pallas_matmul(h.reshape(Nb * Ho * Wo, C), Wcat, Scat, relu=True)
        b1234 = b1234.reshape(Nb, Ho, Wo, Wcat.shape[1])
    else:
        b1234 = jnp.concatenate(
            [conv_block(h, params['aspp1']),
             conv_block(h, params['aspp2'], dilation=6),
             conv_block(h, params['aspp3'], dilation=12),
             conv_block(h, params['aspp4'], dilation=18)], axis=-1)

    # Global-average-pool branch: AdaptiveAvgPool2d(1) -> 1x1 conv -> BN -> ReLU ->
    # bilinear up (== broadcast).  Kept in XLA: a Pallas launch would be pure
    # overhead for a (batch x 32) @ (32 x 32) matmul.
    pooled = jnp.mean(h, axis=(1, 2))                                  # (Nb, C)
    wpool = params['aspp_pool']['w'].reshape(C, -1)                    # scale folded
    b5 = jnp.maximum(pooled @ wpool + params['aspp_pool']['shift'], 0.0)
    b5 = jnp.broadcast_to(b5[:, None, None, :], (Nb, Ho, Wo, b5.shape[-1]))

    cat = jnp.concatenate([b1234, b5], axis=-1)
    x_a = conv_block(cat, params['aspp_proj'])
    # TODO(synk): Dropout(0.5) after the ASPP projection is identity in eval mode.
    return x_a


# ----------------------------------------------------------------------------
# DeepLab.forward  (train_height=False  ->  returns (segmentation_logits, None))
# ----------------------------------------------------------------------------
def deeplab_forward(x_nchw, params):
    x = jnp.transpose(x_nchw, (0, 2, 3, 1))        # NCHW -> NHWC

    # -- backbone: (x, low_level_feat) --
    h = conv_block(x, params['bb1'], stride=2)     # H/2
    h = conv_block(h, params['bb2'], stride=2)     # H/4
    low_level_feat = h
    h = conv_block(h, params['bb3'], stride=2)     # H/8
    h = conv_block(h, params['bb4'], stride=2)     # H/16

    # -- ASPP --
    x_a = aspp(h, params)

    # -- decoder --
    low = conv_block(low_level_feat, params['dec_low'])
    x_up = bilinear_upsample(x_a, low.shape[1], low.shape[2])   # align_corners=True
    d = jnp.concatenate([x_up, low], axis=-1)
    d = conv_block(d, params['dec1'])
    d = conv_block(d, params['dec2'])
    # TODO(synk): decoder Dropout(0.5)/Dropout(0.1) are identity in eval mode.
    out = conv_block(d, params['cls'], relu=False)              # classifier (bias in shift)

    out = jnp.transpose(out, (0, 3, 1, 2))                      # NHWC -> NCHW
    return out, None


if __name__ == "__main__":
    key = jax.random.PRNGKey(0)
    k_in, k_par = jax.random.split(key)
    # small-but-consistent shapes: batch=2, RGB input 32x32, num_classes=21
    x = jax.random.normal(k_in, (2, 3, 32, 32), jnp.float32)
    params = init_params(k_par, num_classes=21)

    fwd = jax.jit(deeplab_forward)
    seg, height = fwd(x, params)
    seg = jax.block_until_ready(seg)

    assert seg.shape == (2, 21, 8, 8), seg.shape      # output stride 4 (decoder output)
    assert height is None
    assert bool(jnp.all(jnp.isfinite(seg)))
    print("KERNEL_OK")
</pallas_src>

<mosaic_0001>
module attributes {stable_mosaic.version = 11 : i64} {
  func.func @_mm_kernel(%arg0: i32, %arg1: i32, %arg2: memref<128x32xbf16, #tpu.memory_space<vmem>>, %arg3: memref<32x16xbf16, #tpu.memory_space<vmem>>, %arg4: memref<1x16xf32, #tpu.memory_space<vmem>>, %arg5: memref<128x16xf32, #tpu.memory_space<vmem>>) attributes {dimension_semantics = [#tpu.dimension_semantics<parallel>, #tpu.dimension_semantics<parallel>], iteration_bounds = array<i64: 4, 1>, scalar_prefetch = 0 : i64, scratch_operands = 0 : i64, tpu.core_type = #tpu.core_type<tc>, window_params = [{transform_indices = @transform_0, window_bounds = array<i64: 128, 32>}, {transform_indices = @transform_1, window_bounds = array<i64: 32, 16>}, {transform_indices = @transform_2, window_bounds = array<i64: 1, 16>}, {transform_indices = @transform_3, window_bounds = array<i64: 128, 16>}]} {
    %c0 = arith.constant 0 : index
    %c0_0 = arith.constant 0 : index
    %0 = vector.load %arg2[%c0, %c0_0] : memref<128x32xbf16, #tpu.memory_space<vmem>>, vector<128x32xbf16>
    %c0_1 = arith.constant 0 : index
    %c0_2 = arith.constant 0 : index
    %1 = vector.load %arg3[%c0_1, %c0_2] : memref<32x16xbf16, #tpu.memory_space<vmem>>, vector<32x16xbf16>
    %cst = arith.constant dense<0.000000e+00> : vector<128x16xf32>
    %2 = tpu.matmul %0, %1, %cst {dimension_numbers = #tpu.dot_dimension_numbers<[1], [0], [0], [1], [0, 0, 1, 1], [], []>} : vector<128x32xbf16>, vector<32x16xbf16>, vector<128x16xf32> -> vector<128x16xf32>
    %c0_3 = arith.constant 0 : index
    %c0_4 = arith.constant 0 : index
    %3 = vector.load %arg4[%c0_3, %c0_4] : memref<1x16xf32, #tpu.memory_space<vmem>>, vector<1x16xf32>
    %4 = vector.broadcast %3 : vector<1x16xf32> to vector<128x16xf32>
    %5 = arith.addf %2, %4 : vector<128x16xf32>
    %cst_5 = arith.constant 0.000000e+00 : f32
    %6 = vector.broadcast %cst_5 : f32 to vector<128x16xf32>
    %7 = arith.maximumf %5, %6 : vector<128x16xf32>
    %c0_6 = arith.constant 0 : index
    %c0_7 = arith.constant 0 : index
    %8 = vector.load %arg5[%c0_6, %c0_7] : memref<128x16xf32, #tpu.memory_space<vmem>>, vector<128x16xf32>
    tpu.vector_store %arg5[%c0_6, %c0_7], %7 {strides = array<i32>} : memref<128x16xf32, #tpu.memory_space<vmem>>, vector<128x16xf32>,
    return
  }
  func.func @transform_0(%arg0: i32, %arg1: i32) -> (i32, i32) {
    %c0_i32 = arith.constant 0 : i32
    %c0_i32_0 = arith.constant 0 : i32
    return %arg0, %c0_i32 : i32, i32
  }
  func.func @transform_1(%arg0: i32, %arg1: i32) -> (i32, i32) {
    %c0_i32 = arith.constant 0 : i32
    %c0_i32_0 = arith.constant 0 : i32
    return %c0_i32, %arg1 : i32, i32
  }
  func.func @transform_2(%arg0: i32, %arg1: i32) -> (i32, i32) {
    %c0_i32 = arith.constant 0 : i32
    %c0_i32_0 = arith.constant 0 : i32
    return %c0_i32, %arg1 : i32, i32
  }
  func.func @transform_3(%arg0: i32, %arg1: i32) -> (i32, i32) {
    %c0_i32 = arith.constant 0 : i32
    return %arg0, %arg1 : i32, i32
  }
}

module attributes {stable_mosaic.version = 11 : i64} {
  func.func @_mm_kernel(%arg0: i32, %arg1: i32, %arg2: memref<64x144xbf16, #tpu.memory_space<vmem>>, %arg3: memref<144x16xbf16, #tpu.memory_space<vmem>>, %arg4: memref<1x16xf32, #tpu.memory_space<vmem>>, %arg5: memref<64x16xf32, #tpu.memory_space<vmem>>) attributes {dimension_semantics = [#tpu.dimension_semantics<parallel>, #tpu.dimension_semantics<parallel>], iteration_bounds = array<i64: 2, 1>, scalar_prefetch = 0 : i64, scratch_operands = 0 : i64, tpu.core_type = #tpu.core_type<tc>, window_params = [{transform_indices = @transform_0, window_bounds = array<i64: 64, 144>}, {transform_indices = @transform_1, window_bounds = array<i64: 144, 16>}, {transform_indices = @transform_2, window_bounds = array<i64: 1, 16>}, {transform_indices = @transform_3, window_bounds = array<i64: 64, 16>}]} {
    %c0 = arith.constant 0 : index
    %c0_0 = arith.constant 0 : index
    %0 = vector.load %arg2[%c0, %c0_0] : memref<64x144xbf16, #tpu.memory_space<vmem>>, vector<64x144xbf16>
    %c0_1 = arith.constant 0 : index
    %c0_2 = arith.constant 0 : index
    %1 = vector.load %arg3[%c0_1, %c0_2] : memref<144x16xbf16, #tpu.memory_space<vmem>>, vector<144x16xbf16>
    %cst = arith.constant dense<0.000000e+00> : vector<64x16xf32>
    %2 = tpu.matmul %0, %1, %cst {dimension_numbers = #tpu.dot_dimension_numbers<[1], [0], [0], [1], [0, 0, 1, 1], [], []>} : vector<64x144xbf16>, vector<144x16xbf16>, vector<64x16xf32> -> vector<64x16xf32>
    %c0_3 = arith.constant 0 : index
    %c0_4 = arith.constant 0 : index
    %3 = vector.load %arg4[%c0_3, %c0_4] : memref<1x16xf32, #tpu.memory_space<vmem>>, vector<1x16xf32>
    %4 = vector.broadcast %3 : vector<1x16xf32> to vector<64x16xf32>
    %5 = arith.addf %2, %4 : vector<64x16xf32>
    %cst_5 = arith.constant 0.000000e+00 : f32
    %6 = vector.broadcast %cst_5 : f32 to vector<64x16xf32>
    %7 = arith.maximumf %5, %6 : vector<64x16xf32>
    %c0_6 = arith.constant 0 : index
    %c0_7 = arith.constant 0 : index
    %8 = vector.load %arg5[%c0_6, %c0_7] : memref<64x16xf32, #tpu.memory_space<vmem>>, vector<64x16xf32>
    tpu.vector_store %arg5[%c0_6, %c0_7], %7 {strides = array<i32>} : memref<64x16xf32, #tpu.memory_space<vmem>>, vector<64x16xf32>,
    return
  }
  func.func @transform_0(%arg0: i32, %arg1: i32) -> (i32, i32) {
    %c0_i32 = arith.constant 0 : i32
    %c0_i32_0 = arith.constant 0 : i32
    return %arg0, %c0_i32 : i32, i32
  }
  func.func @transform_1(%arg0: i32, %arg1: i32) -> (i32, i32) {
    %c0_i32 = arith.constant 0 : i32
    %c0_i32_0 = arith.constant 0 : i32
    return %c0_i32, %arg1 : i32, i32
  }
  func.func @transform_2(%arg0: i32, %arg1: i32) -> (i32, i32) {
    %c0_i32 = arith.constant 0 : i32
    %c0_i32_0 = arith.constant 0 : i32
    return %c0_i32, %arg1 : i32, i32
  }
  func.func @transform_3(%arg0: i32, %arg1: i32) -> (i32, i32) {
    %c0_i32 = arith.constant 0 : i32
    return %arg0, %arg1 : i32, i32
  }
}

module attributes {stable_mosaic.version = 11 : i64} {
  func.func @_mm_kernel(%arg0: i32, %arg1: i32, %arg2: memref<32x144xbf16, #tpu.memory_space<vmem>>, %arg3: memref<144x32xbf16, #tpu.memory_space<vmem>>, %arg4: memref<1x32xf32, #tpu.memory_space<vmem>>, %arg5: memref<32x32xf32, #tpu.memory_space<vmem>>) attributes {dimension_semantics = [#tpu.dimension_semantics<parallel>, #tpu.dimension_semantics<parallel>], iteration_bounds = array<i64: 1, 1>, scalar_prefetch = 0 : i64, scratch_operands = 0 : i64, tpu.core_type = #tpu.core_type<tc>, window_params = [{transform_indices = @transform_0, window_bounds = array<i64: 32, 144>}, {transform_indices = @transform_1, window_bounds = array<i64: 144, 32>}, {transform_indices = @transform_2, window_bounds = array<i64: 1, 32>}, {transform_indices = @transform_3, window_bounds = array<i64: 32, 32>}]} {
    %c0 = arith.constant 0 : index
    %c0_0 = arith.constant 0 : index
    %0 = vector.load %arg2[%c0, %c0_0] : memref<32x144xbf16, #tpu.memory_space<vmem>>, vector<32x144xbf16>
    %c0_1 = arith.constant 0 : index
    %c0_2 = arith.constant 0 : index
    %1 = vector.load %arg3[%c0_1, %c0_2] : memref<144x32xbf16, #tpu.memory_space<vmem>>, vector<144x32xbf16>
    %cst = arith.constant dense<0.000000e+00> : vector<32x32xf32>
    %2 = tpu.matmul %0, %1, %cst {dimension_numbers = #tpu.dot_dimension_numbers<[1], [0], [0], [1], [0, 0, 1, 1], [], []>} : vector<32x144xbf16>, vector<144x32xbf16>, vector<32x32xf32> -> vector<32x32xf32>
    %c0_3 = arith.constant 0 : index
    %c0_4 = arith.constant 0 : index
    %3 = vector.load %arg4[%c0_3, %c0_4] : memref<1x32xf32, #tpu.memory_space<vmem>>, vector<1x32xf32>
    %4 = vector.broadcast %3 : vector<1x32xf32> to vector<32x32xf32>
    %5 = arith.addf %2, %4 : vector<32x32xf32>
    %cst_5 = arith.constant 0.000000e+00 : f32
    %6 = vector.broadcast %cst_5 : f32 to vector<32x32xf32>
    %7 = arith.maximumf %5, %6 : vector<32x32xf32>
    %c0_6 = arith.constant 0 : index
    %c0_7 = arith.constant 0 : index
    %8 = vector.load %arg5[%c0_6, %c0_7] : memref<32x32xf32, #tpu.memory_space<vmem>>, vector<32x32xf32>
    tpu.vector_store %arg5[%c0_6, %c0_7], %7 {strides = array<i32>} : memref<32x32xf32, #tpu.memory_space<vmem>>, vector<32x32xf32>,
    return
  }
  func.func @transform_0(%arg0: i32, %arg1: i32) -> (i32, i32) {
    %c0_i32 = arith.constant 0 : i32
    %c0_i32_0 = arith.constant 0 : i32
    return %arg0, %c0_i32 : i32, i32
  }
  func.func @transform_1(%arg0: i32, %arg1: i32) -> (i32, i32) {
    %c0_i32 = arith.constant 0 : i32
    %c0_i32_0 = arith.constant 0 : i32
    return %c0_i32, %arg1 : i32, i32
  }
  func.func @transform_2(%arg0: i32, %arg1: i32) -> (i32, i32) {
    %c0_i32 = arith.constant 0 : i32
    %c0_i32_0 = arith.constant 0 : i32
    return %c0_i32, %arg1 : i32, i32
  }
  func.func @transform_3(%arg0: i32, %arg1: i32) -> (i32, i32) {
    %c0_i32 = arith.constant 0 : i32
    return %arg0, %arg1 : i32, i32
  }
}

module attributes {stable_mosaic.version = 11 : i64} {
  func.func @_mm_kernel(%arg0: i32, %arg1: i32, %arg2: memref<16x288xbf16, #tpu.memory_space<vmem>>, %arg3: memref<288x32xbf16, #tpu.memory_space<vmem>>, %arg4: memref<1x32xf32, #tpu.memory_space<vmem>>, %arg5: memref<16x32xf32, #tpu.memory_space<vmem>>) attributes {dimension_semantics = [#tpu.dimension_semantics<parallel>, #tpu.dimension_semantics<parallel>], iteration_bounds = array<i64: 1, 1>, scalar_prefetch = 0 : i64, scratch_operands = 0 : i64, tpu.core_type = #tpu.core_type<tc>, window_params = [{transform_indices = @transform_0, window_bounds = array<i64: 16, 288>}, {transform_indices = @transform_1, window_bounds = array<i64: 288, 32>}, {transform_indices = @transform_2, window_bounds = array<i64: 1, 32>}, {transform_indices = @transform_3, window_bounds = array<i64: 16, 32>}]} {
    %c0 = arith.constant 0 : index
    %c0_0 = arith.constant 0 : index
    %0 = vector.load %arg2[%c0, %c0_0] : memref<16x288xbf16, #tpu.memory_space<vmem>>, vector<16x288xbf16>
    %c0_1 = arith.constant 0 : index
    %c0_2 = arith.constant 0 : index
    %1 = vector.load %arg3[%c0_1, %c0_2] : memref<288x32xbf16, #tpu.memory_space<vmem>>, vector<288x32xbf16>
    %cst = arith.constant dense<0.000000e+00> : vector<16x32xf32>
    %2 = tpu.matmul %0, %1, %cst {dimension_numbers = #tpu.dot_dimension_numbers<[1], [0], [0], [1], [0, 0, 1, 1], [], []>} : vector<16x288xbf16>, vector<288x32xbf16>, vector<16x32xf32> -> vector<16x32xf32>
    %c0_3 = arith.constant 0 : index
    %c0_4 = arith.constant 0 : index
    %3 = vector.load %arg4[%c0_3, %c0_4] : memref<1x32xf32, #tpu.memory_space<vmem>>, vector<1x32xf32>
    %4 = vector.broadcast %3 : vector<1x32xf32> to vector<16x32xf32>
    %5 = arith.addf %2, %4 : vector<16x32xf32>
    %cst_5 = arith.constant 0.000000e+00 : f32
    %6 = vector.broadcast %cst_5 : f32 to vector<16x32xf32>
    %7 = arith.maximumf %5, %6 : vector<16x32xf32>
    %c0_6 = arith.constant 0 : index
    %c0_7 = arith.constant 0 : index
    %8 = vector.load %arg5[%c0_6, %c0_7] : memref<16x32xf32, #tpu.memory_space<vmem>>, vector<16x32xf32>
    tpu.vector_store %arg5[%c0_6, %c0_7], %7 {strides = array<i32>} : memref<16x32xf32, #tpu.memory_space<vmem>>, vector<16x32xf32>,
    return
  }
  func.func @transform_0(%arg0: i32, %arg1: i32) -> (i32, i32) {
    %c0_i32 = arith.constant 0 : i32
    %c0_i32_0 = arith.constant 0 : i32
    return %arg0, %c0_i32 : i32, i32
  }
  func.func @transform_1(%arg0: i32, %arg1: i32) -> (i32, i32) {
    %c0_i32 = arith.constant 0 : i32
    %c0_i32_0 = arith.constant 0 : i32
    return %c0_i32, %arg1 : i32, i32
  }
  func.func @transform_2(%arg0: i32, %arg1: i32) -> (i32, i32) {
    %c0_i32 = arith.constant 0 : i32
    %c0_i32_0 = arith.constant 0 : i32
    return %c0_i32, %arg1 : i32, i32
  }
  func.func @transform_3(%arg0: i32, %arg1: i32) -> (i32, i32) {
    %c0_i32 = arith.constant 0 : i32
    return %arg0, %arg1 : i32, i32
  }
}

module attributes {stable_mosaic.version = 11 : i64} {
  func.func @_mm_kernel(%arg0: i32, %arg1: i32, %arg2: memref<16x32xbf16, #tpu.memory_space<vmem>>, %arg3: memref<32x128xbf16, #tpu.memory_space<vmem>>, %arg4: memref<1x128xf32, #tpu.memory_space<vmem>>, %arg5: memref<16x128xf32, #tpu.memory_space<vmem>>) attributes {dimension_semantics = [#tpu.dimension_semantics<parallel>, #tpu.dimension_semantics<parallel>], iteration_bounds = array<i64: 1, 1>, scalar_prefetch = 0 : i64, scratch_operands = 0 : i64, tpu.core_type = #tpu.core_type<tc>, window_params = [{transform_indices = @transform_0, window_bounds = array<i64: 16, 32>}, {transform_indices = @transform_1, window_bounds = array<i64: 32, 128>}, {transform_indices = @transform_2, window_bounds = array<i64: 1, 128>}, {transform_indices = @transform_3, window_bounds = array<i64: 16, 128>}]} {
    %c0 = arith.constant 0 : index
    %c0_0 = arith.constant 0 : index
    %0 = vector.load %arg2[%c0, %c0_0] : memref<16x32xbf16, #tpu.memory_space<vmem>>, vector<16x32xbf16>
    %c0_1 = arith.constant 0 : index
    %c0_2 = arith.constant 0 : index
    %1 = vector.load %arg3[%c0_1, %c0_2] : memref<32x128xbf16, #tpu.memory_space<vmem>>, vector<32x128xbf16>
    %cst = arith.constant dense<0.000000e+00> : vector<16x128xf32>
    %2 = tpu.matmul %0, %1, %cst {dimension_numbers = #tpu.dot_dimension_numbers<[1], [0], [0], [1], [0, 0, 1, 1], [], []>} : vector<16x32xbf16>, vector<32x128xbf16>, vector<16x128xf32> -> vector<16x128xf32>
    %c0_3 = arith.constant 0 : index
    %c0_4 = arith.constant 0 : index
    %3 = vector.load %arg4[%c0_3, %c0_4] : memref<1x128xf32, #tpu.memory_space<vmem>>, vector<1x128xf32>
    %4 = vector.broadcast %3 : vector<1x128xf32> to vector<16x128xf32>
    %5 = arith.addf %2, %4 : vector<16x128xf32>
    %cst_5 = arith.constant 0.000000e+00 : f32
    %6 = vector.broadcast %cst_5 : f32 to vector<16x128xf32>
    %7 = arith.maximumf %5, %6 : vector<16x128xf32>
    %c0_6 = arith.constant 0 : index
    %c0_7 = arith.constant 0 : index
    %8 = vector.load %arg5[%c0_6, %c0_7] : memref<16x128xf32, #tpu.memory_space<vmem>>, vector<16x128xf32>
    tpu.vector_store %arg5[%c0_6, %c0_7], %7 {strides = array<i32>} : memref<16x128xf32, #tpu.memory_space<vmem>>, vector<16x128xf32>,
    return
  }
  func.func @transform_0(%arg0: i32, %arg1: i32) -> (i32, i32) {
    %c0_i32 = arith.constant 0 : i32
    %c0_i32_0 = arith.constant 0 : i32
    return %arg0, %c0_i32 : i32, i32
  }
  func.func @transform_1(%arg0: i32, %arg1: i32) -> (i32, i32) {
    %c0_i32 = arith.constant 0 : i32
    %c0_i32_0 = arith.constant 0 : i32
    return %c0_i32, %arg1 : i32, i32
  }
  func.func @transform_2(%arg0: i32, %arg1: i32) -> (i32, i32) {
    %c0_i32 = arith.constant 0 : i32
    %c0_i32_0 = arith.constant 0 : i32
    return %c0_i32, %arg1 : i32, i32
  }
  func.func @transform_3(%arg0: i32, %arg1: i32) -> (i32, i32) {
    %c0_i32 = arith.constant 0 : i32
    return %arg0, %arg1 : i32, i32
  }
}

module attributes {stable_mosaic.version = 11 : i64} {
  func.func @_mm_kernel(%arg0: i32, %arg1: i32, %arg2: memref<16x160xbf16, #tpu.memory_space<vmem>>, %arg3: memref<160x32xbf16, #tpu.memory_space<vmem>>, %arg4: memref<1x32xf32, #tpu.memory_space<vmem>>, %arg5: memref<16x32xf32, #tpu.memory_space<vmem>>) attributes {dimension_semantics = [#tpu.dimension_semantics<parallel>, #tpu.dimension_semantics<parallel>], iteration_bounds = array<i64: 1, 1>, scalar_prefetch = 0 : i64, scratch_operands = 0 : i64, tpu.core_type = #tpu.core_type<tc>, window_params = [{transform_indices = @transform_0, window_bounds = array<i64: 16, 160>}, {transform_indices = @transform_1, window_bounds = array<i64: 160, 32>}, {transform_indices = @transform_2, window_bounds = array<i64: 1, 32>}, {transform_indices = @transform_3, window_bounds = array<i64: 16, 32>}]} {
    %c0 = arith.constant 0 : index
    %c0_0 = arith.constant 0 : index
    %0 = vector.load %arg2[%c0, %c0_0] : memref<16x160xbf16, #tpu.memory_space<vmem>>, vector<16x160xbf16>
    %c0_1 = arith.constant 0 : index
    %c0_2 = arith.constant 0 : index
    %1 = vector.load %arg3[%c0_1, %c0_2] : memref<160x32xbf16, #tpu.memory_space<vmem>>, vector<160x32xbf16>
    %cst = arith.constant dense<0.000000e+00> : vector<16x32xf32>
    %2 = tpu.matmul %0, %1, %cst {dimension_numbers = #tpu.dot_dimension_numbers<[1], [0], [0], [1], [0, 0, 1, 1], [], []>} : vector<16x160xbf16>, vector<160x32xbf16>, vector<16x32xf32> -> vector<16x32xf32>
    %c0_3 = arith.constant 0 : index
    %c0_4 = arith.constant 0 : index
    %3 = vector.load %arg4[%c0_3, %c0_4] : memref<1x32xf32, #tpu.memory_space<vmem>>, vector<1x32xf32>
    %4 = vector.broadcast %3 : vector<1x32xf32> to vector<16x32xf32>
    %5 = arith.addf %2, %4 : vector<16x32xf32>
    %cst_5 = arith.constant 0.000000e+00 : f32
    %6 = vector.broadcast %cst_5 : f32 to vector<16x32xf32>
    %7 = arith.maximumf %5, %6 : vector<16x32xf32>
    %c0_6 = arith.constant 0 : index
    %c0_7 = arith.constant 0 : index
    %8 = vector.load %arg5[%c0_6, %c0_7] : memref<16x32xf32, #tpu.memory_space<vmem>>, vector<16x32xf32>
    tpu.vector_store %arg5[%c0_6, %c0_7], %7 {strides = array<i32>} : memref<16x32xf32, #tpu.memory_space<vmem>>, vector<16x32xf32>,
    return
  }
  func.func @transform_0(%arg0: i32, %arg1: i32) -> (i32, i32) {
    %c0_i32 = arith.constant 0 : i32
    %c0_i32_0 = arith.constant 0 : i32
    return %arg0, %c0_i32 : i32, i32
  }
  func.func @transform_1(%arg0: i32, %arg1: i32) -> (i32, i32) {
    %c0_i32 = arith.constant 0 : i32
    %c0_i32_0 = arith.constant 0 : i32
    return %c0_i32, %arg1 : i32, i32
  }
  func.func @transform_2(%arg0: i32, %arg1: i32) -> (i32, i32) {
    %c0_i32 = arith.constant 0 : i32
    %c0_i32_0 = arith.constant 0 : i32
    return %c0_i32, %arg1 : i32, i32
  }
  func.func @transform_3(%arg0: i32, %arg1: i32) -> (i32, i32) {
    %c0_i32 = arith.constant 0 : i32
    return %arg0, %arg1 : i32, i32
  }
}

module attributes {stable_mosaic.version = 11 : i64} {
  func.func @_mm_kernel(%arg0: i32, %arg1: i32, %arg2: memref<64x16xbf16, #tpu.memory_space<vmem>>, %arg3: memref<16x64xbf16, #tpu.memory_space<vmem>>, %arg4: memref<1x64xf32, #tpu.memory_space<vmem>>, %arg5: memref<64x64xf32, #tpu.memory_space<vmem>>) attributes {dimension_semantics = [#tpu.dimension_semantics<parallel>, #tpu.dimension_semantics<parallel>], iteration_bounds = array<i64: 1, 1>, scalar_prefetch = 0 : i64, scratch_operands = 0 : i64, tpu.core_type = #tpu.core_type<tc>, window_params = [{transform_indices = @transform_0, window_bounds = array<i64: 64, 16>}, {transform_indices = @transform_1, window_bounds = array<i64: 16, 64>}, {transform_indices = @transform_2, window_bounds = array<i64: 1, 64>}, {transform_indices = @transform_3, window_bounds = array<i64: 64, 64>}]} {
    %c0 = arith.constant 0 : index
    %c0_0 = arith.constant 0 : index
    %0 = vector.load %arg2[%c0, %c0_0] : memref<64x16xbf16, #tpu.memory_space<vmem>>, vector<64x16xbf16>
    %c0_1 = arith.constant 0 : index
    %c0_2 = arith.constant 0 : index
    %1 = vector.load %arg3[%c0_1, %c0_2] : memref<16x64xbf16, #tpu.memory_space<vmem>>, vector<16x64xbf16>
    %cst = arith.constant dense<0.000000e+00> : vector<64x64xf32>
    %2 = tpu.matmul %0, %1, %cst {dimension_numbers = #tpu.dot_dimension_numbers<[1], [0], [0], [1], [0, 0, 1, 1], [], []>} : vector<64x16xbf16>, vector<16x64xbf16>, vector<64x64xf32> -> vector<64x64xf32>
    %c0_3 = arith.constant 0 : index
    %c0_4 = arith.constant 0 : index
    %3 = vector.load %arg4[%c0_3, %c0_4] : memref<1x64xf32, #tpu.memory_space<vmem>>, vector<1x64xf32>
    %4 = vector.broadcast %3 : vector<1x64xf32> to vector<64x64xf32>
    %5 = arith.addf %2, %4 : vector<64x64xf32>
    %c0_5 = arith.constant 0 : index
    %c0_6 = arith.constant 0 : index
    %6 = vector.load %arg5[%c0_5, %c0_6] : memref<64x64xf32, #tpu.memory_space<vmem>>, vector<64x64xf32>
    tpu.vector_store %arg5[%c0_5, %c0_6], %5 {strides = array<i32>} : memref<64x64xf32, #tpu.memory_space<vmem>>, vector<64x64xf32>,
    return
  }
  func.func @transform_0(%arg0: i32, %arg1: i32) -> (i32, i32) {
    %c0_i32 = arith.constant 0 : i32
    %c0_i32_0 = arith.constant 0 : i32
    return %arg0, %c0_i32 : i32, i32
  }
  func.func @transform_1(%arg0: i32, %arg1: i32) -> (i32, i32) {
    %c0_i32 = arith.constant 0 : i32
    %c0_i32_0 = arith.constant 0 : i32
    return %c0_i32, %arg1 : i32, i32
  }
  func.func @transform_2(%arg0: i32, %arg1: i32) -> (i32, i32) {
    %c0_i32 = arith.constant 0 : i32
    %c0_i32_0 = arith.constant 0 : i32
    return %c0_i32, %arg1 : i32, i32
  }
  func.func @transform_3(%arg0: i32, %arg1: i32) -> (i32, i32) {
    %c0_i32 = arith.constant 0 : i32
    return %arg0, %arg1 : i32, i32
  }
}

module attributes {stable_mosaic.version = 11 : i64} {
  func.func @_mm_kernel(%arg0: i32, %arg1: i32, %arg2: memref<64x16xbf16, #tpu.memory_space<vmem>>, %arg3: memref<16x8xbf16, #tpu.memory_space<vmem>>, %arg4: memref<1x8xf32, #tpu.memory_space<vmem>>, %arg5: memref<64x8xf32, #tpu.memory_space<vmem>>) attributes {dimension_semantics = [#tpu.dimension_semantics<parallel>, #tpu.dimension_semantics<parallel>], iteration_bounds = array<i64: 2, 1>, scalar_prefetch = 0 : i64, scratch_operands = 0 : i64, tpu.core_type = #tpu.core_type<tc>, window_params = [{transform_indices = @transform_0, window_bounds = array<i64: 64, 16>}, {transform_indices = @transform_1, window_bounds = array<i64: 16, 8>}, {transform_indices = @transform_2, window_bounds = array<i64: 1, 8>}, {transform_indices = @transform_3, window_bounds = array<i64: 64, 8>}]} {
    %c0 = arith.constant 0 : index
    %c0_0 = arith.constant 0 : index
    %0 = vector.load %arg2[%c0, %c0_0] : memref<64x16xbf16, #tpu.memory_space<vmem>>, vector<64x16xbf16>
    %c0_1 = arith.constant 0 : index
    %c0_2 = arith.constant 0 : index
    %1 = vector.load %arg3[%c0_1, %c0_2] : memref<16x8xbf16, #tpu.memory_space<vmem>>, vector<16x8xbf16>
    %cst = arith.constant dense<0.000000e+00> : vector<64x8xf32>
    %2 = tpu.matmul %0, %1, %cst {dimension_numbers = #tpu.dot_dimension_numbers<[1], [0], [0], [1], [0, 0, 1, 1], [], []>} : vector<64x16xbf16>, vector<16x8xbf16>, vector<64x8xf32> -> vector<64x8xf32>
    %c0_3 = arith.constant 0 : index
    %c0_4 = arith.constant 0 : index
    %3 = vector.load %arg4[%c0_3, %c0_4] : memref<1x8xf32, #tpu.memory_space<vmem>>, vector<1x8xf32>
    %4 = vector.broadcast %3 : vector<1x8xf32> to vector<64x8xf32>
    %5 = arith.addf %2, %4 : vector<64x8xf32>
    %cst_5 = arith.constant 0.000000e+00 : f32
    %6 = vector.broadcast %cst_5 : f32 to vector<64x8xf32>
    %7 = arith.maximumf %5, %6 : vector<64x8xf32>
    %c0_6 = arith.constant 0 : index
    %c0_7 = arith.constant 0 : index
    %8 = vector.load %arg5[%c0_6, %c0_7] : memref<64x8xf32, #tpu.memory_space<vmem>>, vector<64x8xf32>
    tpu.vector_store %arg5[%c0_6, %c0_7], %7 {strides = array<i32>} : memref<64x8xf32, #tpu.memory_space<vmem>>, vector<64x8xf32>,
    return
  }
  func.func @transform_0(%arg0: i32, %arg1: i32) -> (i32, i32) {
    %c0_i32 = arith.constant 0 : i32
    %c0_i32_0 = arith.constant 0 : i32
    return %arg0, %c0_i32 : i32, i32
  }
  func.func @transform_1(%arg0: i32, %arg1: i32) -> (i32, i32) {
    %c0_i32 = arith.constant 0 : i32
    %c0_i32_0 = arith.constant 0 : i32
    return %c0_i32, %arg1 : i32, i32
  }
  func.func @transform_2(%arg0: i32, %arg1: i32) -> (i32, i32) {
    %c0_i32 = arith.constant 0 : i32
    %c0_i32_0 = arith.constant 0 : i32
    return %c0_i32, %arg1 : i32, i32
  }
  func.func @transform_3(%arg0: i32, %arg1: i32) -> (i32, i32) {
    %c0_i32 = arith.constant 0 : i32
    return %arg0, %arg1 : i32, i32
  }
}

module attributes {stable_mosaic.version = 11 : i64} {
  func.func @_mm_kernel(%arg0: i32, %arg1: i32, %arg2: memref<64x368xbf16, #tpu.memory_space<vmem>>, %arg3: memref<368x32xbf16, #tpu.memory_space<vmem>>, %arg4: memref<1x32xf32, #tpu.memory_space<vmem>>, %arg5: memref<64x32xf32, #tpu.memory_space<vmem>>) attributes {dimension_semantics = [#tpu.dimension_semantics<parallel>, #tpu.dimension_semantics<parallel>], iteration_bounds = array<i64: 2, 1>, scalar_prefetch = 0 : i64, scratch_operands = 0 : i64, tpu.core_type = #tpu.core_type<tc>, window_params = [{transform_indices = @transform_0, window_bounds = array<i64: 64, 368>}, {transform_indices = @transform_1, window_bounds = array<i64: 368, 32>}, {transform_indices = @transform_2, window_bounds = array<i64: 1, 32>}, {transform_indices = @transform_3, window_bounds = array<i64: 64, 32>}]} {
    %c0 = arith.constant 0 : index
    %c0_0 = arith.constant 0 : index
    %0 = vector.load %arg2[%c0, %c0_0] : memref<64x368xbf16, #tpu.memory_space<vmem>>, vector<64x368xbf16>
    %c0_1 = arith.constant 0 : index
    %c0_2 = arith.constant 0 : index
    %1 = vector.load %arg3[%c0_1, %c0_2] : memref<368x32xbf16, #tpu.memory_space<vmem>>, vector<368x32xbf16>
    %cst = arith.constant dense<0.000000e+00> : vector<64x32xf32>
    %2 = tpu.matmul %0, %1, %cst {dimension_numbers = #tpu.dot_dimension_numbers<[1], [0], [0], [1], [0, 0, 1, 1], [], []>} : vector<64x368xbf16>, vector<368x32xbf16>, vector<64x32xf32> -> vector<64x32xf32>
    %c0_3 = arith.constant 0 : index
    %c0_4 = arith.constant 0 : index
    %3 = vector.load %arg4[%c0_3, %c0_4] : memref<1x32xf32, #tpu.memory_space<vmem>>, vector<1x32xf32>
    %4 = vector.broadcast %3 : vector<1x32xf32> to vector<64x32xf32>
    %5 = arith.addf %2, %4 : vector<64x32xf32>
    %cst_5 = arith.constant 0.000000e+00 : f32
    %6 = vector.broadcast %cst_5 : f32 to vector<64x32xf32>
    %7 = arith.maximumf %5, %6 : vector<64x32xf32>
    %c0_6 = arith.constant 0 : index
    %c0_7 = arith.constant 0 : index
    %8 = vector.load %arg5[%c0_6, %c0_7] : memref<64x32xf32, #tpu.memory_space<vmem>>, vector<64x32xf32>
    tpu.vector_store %arg5[%c0_6, %c0_7], %7 {strides = array<i32>} : memref<64x32xf32, #tpu.memory_space<vmem>>, vector<64x32xf32>,
    return
  }
  func.func @transform_0(%arg0: i32, %arg1: i32) -> (i32, i32) {
    %c0_i32 = arith.constant 0 : i32
    %c0_i32_0 = arith.constant 0 : i32
    return %arg0, %c0_i32 : i32, i32
  }
  func.func @transform_1(%arg0: i32, %arg1: i32) -> (i32, i32) {
    %c0_i32 = arith.constant 0 : i32
    %c0_i32_0 = arith.constant 0 : i32
    return %c0_i32, %arg1 : i32, i32
  }
  func.func @transform_2(%arg0: i32, %arg1: i32) -> (i32, i32) {
    %c0_i32 = arith.constant 0 : i32
    %c0_i32_0 = arith.constant 0 : i32
    return %c0_i32, %arg1 : i32, i32
  }
  func.func @transform_3(%arg0: i32, %arg1: i32) -> (i32, i32) {
    %c0_i32 = arith.constant 0 : i32
    return %arg0, %arg1 : i32, i32
  }
}

module attributes {stable_mosaic.version = 11 : i64} {
  func.func @_mm_kernel(%arg0: i32, %arg1: i32, %arg2: memref<64x288xbf16, #tpu.memory_space<vmem>>, %arg3: memref<288x32xbf16, #tpu.memory_space<vmem>>, %arg4: memref<1x32xf32, #tpu.memory_space<vmem>>, %arg5: memref<64x32xf32, #tpu.memory_space<vmem>>) attributes {dimension_semantics = [#tpu.dimension_semantics<parallel>, #tpu.dimension_semantics<parallel>], iteration_bounds = array<i64: 2, 1>, scalar_prefetch = 0 : i64, scratch_operands = 0 : i64, tpu.core_type = #tpu.core_type<tc>, window_params = [{transform_indices = @transform_0, window_bounds = array<i64: 64, 288>}, {transform_indices = @transform_1, window_bounds = array<i64: 288, 32>}, {transform_indices = @transform_2, window_bounds = array<i64: 1, 32>}, {transform_indices = @transform_3, window_bounds = array<i64: 64, 32>}]} {
    %c0 = arith.constant 0 : index
    %c0_0 = arith.constant 0 : index
    %0 = vector.load %arg2[%c0, %c0_0] : memref<64x288xbf16, #tpu.memory_space<vmem>>, vector<64x288xbf16>
    %c0_1 = arith.constant 0 : index
    %c0_2 = arith.constant 0 : index
    %1 = vector.load %arg3[%c0_1, %c0_2] : memref<288x32xbf16, #tpu.memory_space<vmem>>, vector<288x32xbf16>
    %cst = arith.constant dense<0.000000e+00> : vector<64x32xf32>
    %2 = tpu.matmul %0, %1, %cst {dimension_numbers = #tpu.dot_dimension_numbers<[1], [0], [0], [1], [0, 0, 1, 1], [], []>} : vector<64x288xbf16>, vector<288x32xbf16>, vector<64x32xf32> -> vector<64x32xf32>
    %c0_3 = arith.constant 0 : index
    %c0_4 = arith.constant 0 : index
    %3 = vector.load %arg4[%c0_3, %c0_4] : memref<1x32xf32, #tpu.memory_space<vmem>>, vector<1x32xf32>
    %4 = vector.broadcast %3 : vector<1x32xf32> to vector<64x32xf32>
    %5 = arith.addf %2, %4 : vector<64x32xf32>
    %cst_5 = arith.constant 0.000000e+00 : f32
    %6 = vector.broadcast %cst_5 : f32 to vector<64x32xf32>
    %7 = arith.maximumf %5, %6 : vector<64x32xf32>
    %c0_6 = arith.constant 0 : index
    %c0_7 = arith.constant 0 : index
    %8 = vector.load %arg5[%c0_6, %c0_7] : memref<64x32xf32, #tpu.memory_space<vmem>>, vector<64x32xf32>
    tpu.vector_store %arg5[%c0_6, %c0_7], %7 {strides = array<i32>} : memref<64x32xf32, #tpu.memory_space<vmem>>, vector<64x32xf32>,
    return
  }
  func.func @transform_0(%arg0: i32, %arg1: i32) -> (i32, i32) {
    %c0_i32 = arith.constant 0 : i32
    %c0_i32_0 = arith.constant 0 : i32
    return %arg0, %c0_i32 : i32, i32
  }
  func.func @transform_1(%arg0: i32, %arg1: i32) -> (i32, i32) {
    %c0_i32 = arith.constant 0 : i32
    %c0_i32_0 = arith.constant 0 : i32
    return %c0_i32, %arg1 : i32, i32
  }
  func.func @transform_2(%arg0: i32, %arg1: i32) -> (i32, i32) {
    %c0_i32 = arith.constant 0 : i32
    %c0_i32_0 = arith.constant 0 : i32
    return %c0_i32, %arg1 : i32, i32
  }
  func.func @transform_3(%arg0: i32, %arg1: i32) -> (i32, i32) {
    %c0_i32 = arith.constant 0 : i32
    return %arg0, %arg1 : i32, i32
  }
}

module attributes {stable_mosaic.version = 11 : i64} {
  func.func @_mm_kernel(%arg0: i32, %arg1: i32, %arg2: memref<64x32xbf16, #tpu.memory_space<vmem>>, %arg3: memref<32x21xbf16, #tpu.memory_space<vmem>>, %arg4: memref<1x21xf32, #tpu.memory_space<vmem>>, %arg5: memref<64x21xf32, #tpu.memory_space<vmem>>) attributes {dimension_semantics = [#tpu.dimension_semantics<parallel>, #tpu.dimension_semantics<parallel>], iteration_bounds = array<i64: 2, 1>, scalar_prefetch = 0 : i64, scratch_operands = 0 : i64, tpu.core_type = #tpu.core_type<tc>, window_params = [{transform_indices = @transform_0, window_bounds = array<i64: 64, 32>}, {transform_indices = @transform_1, window_bounds = array<i64: 32, 21>}, {transform_indices = @transform_2, window_bounds = array<i64: 1, 21>}, {transform_indices = @transform_3, window_bounds = array<i64: 64, 21>}]} {
    %c0 = arith.constant 0 : index
    %c0_0 = arith.constant 0 : index
    %0 = vector.load %arg2[%c0, %c0_0] : memref<64x32xbf16, #tpu.memory_space<vmem>>, vector<64x32xbf16>
    %c0_1 = arith.constant 0 : index
    %c0_2 = arith.constant 0 : index
    %1 = vector.load %arg3[%c0_1, %c0_2] : memref<32x21xbf16, #tpu.memory_space<vmem>>, vector<32x21xbf16>
    %cst = arith.constant dense<0.000000e+00> : vector<64x21xf32>
    %2 = tpu.matmul %0, %1, %cst {dimension_numbers = #tpu.dot_dimension_numbers<[1], [0], [0], [1], [0, 0, 1, 1], [], []>} : vector<64x32xbf16>, vector<32x21xbf16>, vector<64x21xf32> -> vector<64x21xf32>
    %c0_3 = arith.constant 0 : index
    %c0_4 = arith.constant 0 : index
    %3 = vector.load %arg4[%c0_3, %c0_4] : memref<1x21xf32, #tpu.memory_space<vmem>>, vector<1x21xf32>
    %4 = vector.broadcast %3 : vector<1x21xf32> to vector<64x21xf32>
    %5 = arith.addf %2, %4 : vector<64x21xf32>
    %c0_5 = arith.constant 0 : index
    %c0_6 = arith.constant 0 : index
    %6 = vector.load %arg5[%c0_5, %c0_6] : memref<64x21xf32, #tpu.memory_space<vmem>>, vector<64x21xf32>
    tpu.vector_store %arg5[%c0_5, %c0_6], %5 {strides = array<i32>} : memref<64x21xf32, #tpu.memory_space<vmem>>, vector<64x21xf32>,
    return
  }
  func.func @transform_0(%arg0: i32, %arg1: i32) -> (i32, i32) {
    %c0_i32 = arith.constant 0 : i32
    %c0_i32_0 = arith.constant 0 : i32
    return %arg0, %c0_i32 : i32, i32
  }
  func.func @transform_1(%arg0: i32, %arg1: i32) -> (i32, i32) {
    %c0_i32 = arith.constant 0 : i32
    %c0_i32_0 = arith.constant 0 : i32
    return %c0_i32, %arg1 : i32, i32
  }
  func.func @transform_2(%arg0: i32, %arg1: i32) -> (i32, i32) {
    %c0_i32 = arith.constant 0 : i32
    %c0_i32_0 = arith.constant 0 : i32
    return %c0_i32, %arg1 : i32, i32
  }
  func.func @transform_3(%arg0: i32, %arg1: i32) -> (i32, i32) {
    %c0_i32 = arith.constant 0 : i32
    return %arg0, %arg1 : i32, i32
  }
}

</mosaic_0001>

<llo_original>
// kernel: deeplab_forward.11
$region0: #{deeplab_forward.11}
  #allocation0 [shape = 'u32[]', space=smem, size = 0x4, offset = 0x4, fixed_abs, tag = 'smem constant byte address 0x4 - core index']
  #allocation1 [shape = 'u32[72,128]{1,0:T(1,128)}', space=vmem, size = 0x9000, scoped, tag = 'internal scratch']
  %s0 = inlined_call_operand.vmem [shape: bf16[512,32], index: 0, kind: input, shape index: {}]
  %s1 = inlined_call_operand.vmem [shape: bf16[32,16], index: 1, kind: input, shape index: {}]
  %s2 = inlined_call_operand.vmem [shape: f32[1,16], index: 2, kind: input, shape index: {}]
  %s3 = inlined_call_operand.vmem [shape: f32[512,16], index: 3, kind: output, shape index: {}]
  %s4 = sld [smem:[#allocation0]]
  $region45: #{deeplab_forward.11} parent=0
    _
  %s6 = ssub.s32 1, %s4
  %s7 = scalar_select 0, %s6, %s4
  loop: start=0, step=1, limit=6
  $region2: #{deeplab_forward.11} parent=0 // loop_pre_header
    _
  $region3: #{deeplab_forward.11} parent=0 // loop_header
    %s9 = sphi 0, %s13
    %p10 = scmp.ge.s32.totalorder %s9, 6
    %s16 = sphi 0, %s28
    %s17 = sphi 0, %s24
    %s18 = sphi 0, %s16
    %s19 = sphi 0, %s17
    %s20 = sphi 0, %s18
    %s21 = sphi 0, %s19
    %s31 = sphi 0, %s33
    %s34 = sphi 0, %s31
    %s35 = sphi 0, %s34
    %s51 = sphi 0, %s35
    %s57 = sphi 0, %s59
    %s60 = sphi 0, %s57
    %s61 = sphi 0, %s60
    %s77 = sphi 0, %s61
    %s83 = sphi 0, %s85
    %s86 = sphi 0, %s83
    %s87 = sphi 0, %s86
    %s103 = sphi 0, %s87
    %s111 = sphi 0, %s113
    %s114 = sphi 0, %s111
    %s115 = sphi 0, %s114
    %s131 = sphi 0, %s115
  $region4: #{deeplab_forward.11} parent=0 // loop_header_branch
    %12 = sbr.rel (%p10) target = $region8
  $region5: #{deeplab_forward.11} parent=0 // loop_body
    %s14 = ssub.s32 %s9, 1
    %s15 = ssub.s32 %s9, 2
    %s22 = sadd.s32 1, %s17
    %p23 = scmp.ge.s32.totalorder %s22, 1
    %s24 = scalar_select %p23, 0, %s22
    %s25 = sadd.s32 1, %s16
    %s26 = scalar_select %p23, %s25, %s16
    %p27 = scmp.ge.s32.totalorder %s26, 4
    %s28 = scalar_select %p27, 0, %s26
    %s29 = ssub.s32 %s16, %s28
    %p30 = scmp.eq.s32.totalorder %s29, 0
    %s32 = sadd.s32 %s31, 1
    %s33 = scalar_select %p30, %s31, %s32
    %p36 = pneg %p30
    %p37 = scmp.eq.s32.totalorder %s9, 3
    %p38 = por %p36, %p37
    %p39 = scmp.ne.s32.totalorder %s31, %s34
    %p40 = scmp.eq.s32.totalorder %s9, 0
    %p41 = por %p39, %p40
    %p42 = scmp.ne.s32.totalorder %s31, %s34
    %p43 = scmp.eq.s32.totalorder %s14, 3
    %p44 = por %p42, %p43
    %p45 = scmp.ne.s32.totalorder %s34, %s35
    %p46 = scmp.eq.s32.totalorder %s14, 0
    %p47 = por %p45, %p46
    %p48 = scmp.ne.s32.totalorder %s34, %s35
    %p49 = scmp.eq.s32.totalorder %s15, 3
    %p50 = por %p48, %p49
    %p52 = scmp.ne.s32.totalorder %s35, %s51
    %p53 = scmp.eq.s32.totalorder %s15, 0
    %p54 = por %p52, %p53
    %s55 = ssub.s32 %s17, %s24
    %p56 = scmp.eq.s32.totalorder %s55, 0
    %s58 = sadd.s32 %s57, 1
    %s59 = scalar_select %p56, %s57, %s58
    %p62 = pneg %p56
    %p63 = scmp.eq.s32.totalorder %s9, 3
    %p64 = por %p62, %p63
    %p65 = scmp.ne.s32.totalorder %s57, %s60
    %p66 = scmp.eq.s32.totalorder %s9, 0
    %p67 = por %p65, %p66
    %p68 = scmp.ne.s32.totalorder %s57, %s60
    %p69 = scmp.eq.s32.totalorder %s14, 3
    %p70 = por %p68, %p69
    %p71 = scmp.ne.s32.totalorder %s60, %s61
    %p72 = scmp.eq.s32.totalorder %s14, 0
    %p73 = por %p71, %p72
    %p74 = scmp.ne.s32.totalorder %s60, %s61
    %p75 = scmp.eq.s32.totalorder %s15, 3
    %p76 = por %p74, %p75
    %p78 = scmp.ne.s32.totalorder %s61, %s77
    %p79 = scmp.eq.s32.totalorder %s15, 0
    %p80 = por %p78, %p79
    %s81 = ssub.s32 %s17, %s24
    %p82 = scmp.eq.s32.totalorder %s81, 0
    %s84 = sadd.s32 %s83, 1
    %s85 = scalar_select %p82, %s83, %s84
    %p88 = pneg %p82
    %p89 = scmp.eq.s32.totalorder %s9, 3
    %p90 = por %p88, %p89
    %p91 = scmp.ne.s32.totalorder %s83, %s86
    %p92 = scmp.eq.s32.totalorder %s9, 0
    %p93 = por %p91, %p92
    %p94 = scmp.ne.s32.totalorder %s83, %s86
    %p95 = scmp.eq.s32.totalorder %s14, 3
    %p96 = por %p94, %p95
    %p97 = scmp.ne.s32.totalorder %s86, %s87
    %p98 = scmp.eq.s32.totalorder %s14, 0
    %p99 = por %p97, %p98
    %p100 = scmp.ne.s32.totalorder %s86, %s87
    %p101 = scmp.eq.s32.totalorder %s15, 3
    %p102 = por %p100, %p101
    %p104 = scmp.ne.s32.totalorder %s87, %s103
    %p105 = scmp.eq.s32.totalorder %s15, 0
    %p106 = por %p104, %p105
    %s107 = ssub.s32 %s16, %s28
    %s108 = ssub.s32 %s17, %s24
    %s109 = sor.u32 %s107, %s108
    %p110 = scmp.eq.s32.totalorder %s109, 0
    %s112 = sadd.s32 %s111, 1
    %s113 = scalar_select %p110, %s111, %s112
    %p116 = pneg %p110
    %p117 = scmp.eq.s32.totalorder %s9, 3
    %p118 = por %p116, %p117
    %p119 = scmp.ne.s32.totalorder %s111, %s114
    %p120 = scmp.eq.s32.totalorder %s9, 0
    %p121 = por %p119, %p120
    %p122 = scmp.ne.s32.totalorder %s111, %s114
    %p123 = scmp.eq.s32.totalorder %s14, 3
    %p124 = por %p122, %p123
    %p125 = scmp.ne.s32.totalorder %s114, %s115
    %p126 = scmp.eq.s32.totalorder %s14, 0
    %p127 = por %p125, %p126
    %p128 = scmp.ne.s32.totalorder %s114, %s115
    %p129 = scmp.eq.s32.totalorder %s15, 3
    %p130 = por %p128, %p129
    %p132 = scmp.ne.s32.totalorder %s115, %s131
    %p133 = scmp.eq.s32.totalorder %s15, 0
    %p134 = por %p132, %p133
    %p135 = scmp.le.s32.totalorder 1, %s9
    %p136 = scmp.lt.s32.totalorder %s9, 5
    %p137 = pnand %p135, %p136
    %p138 = pneg %p137
    // Predicated region
    $region9: #{deeplab_forward.11} parent=5 // pred_check
      _
    $region10: #{deeplab_forward.11} parent=5 // pred_check_branch
      %140 = sbr.rel (%p137) target = $region12
    $region11: #{deeplab_forward.11} parent=5 // pred_region
      %s141 = ssub.s32 %s9, 1
      // Predicated region
      $region13: #{deeplab_forward.11} parent=11 // pred_check
        %p142 = pneg %p73
      $region14: #{deeplab_forward.11} parent=11 // pred_check_branch
        %144 = sbr.rel (%p142) target = $region16
      $region15: #{deeplab_forward.11} parent=11 // pred_region
        %p145 = scmp.lt.s32.totalorder %s19, 0
        %s146 = scalar_select %p145, %s19, 0
        %s147 = smul.addr %s146, 4
        %s148 = scalar_lea.vmem %s1, %s147
      $region16: #{deeplab_forward.11} parent=11 // pred_fallthru
        _
      // Predicated region
      $region17: #{deeplab_forward.11} parent=11 // pred_check
        %p149 = pneg %p99
      $region18: #{deeplab_forward.11} parent=11 // pred_check_branch
        %151 = sbr.rel (%p149) target = $region20
      $region19: #{deeplab_forward.11} parent=11 // pred_region
        %p152 = scmp.lt.s32.totalorder %s19, 0
        %s153 = scalar_select %p152, %s19, 0
        %s154 = scalar_lea.vmem %s2, %s153
      $region20: #{deeplab_forward.11} parent=11 // pred_fallthru
        _
    $region12: #{deeplab_forward.11} parent=5 // pred_fallthru
      _
    %p155 = scmp.lt.s32.totalorder %s9, 4
    // Predicated region
    $region21: #{deeplab_forward.11} parent=5 // pred_check
      %p156 = pneg %p155
    $region22: #{deeplab_forward.11} parent=5 // pred_check_branch
      %158 = sbr.rel (%p156) target = $region24
    $region23: #{deeplab_forward.11} parent=5 // pred_region
      // Predicated region
      $region25: #{deeplab_forward.11} parent=23 // pred_check
        %p159 = pneg %p41
      $region26: #{deeplab_forward.11} parent=23 // pred_check_branch
        %161 = sbr.rel (%p159) target = $region28
      $region27: #{deeplab_forward.11} parent=23 // pred_region
        %s162 = smul.u32 16, %s16
        %p163 = scmp.lt.s32.totalorder %s162, 63
        %s164 = scalar_select %p163, %s162, 63
        %s165 = smul.addr %s164, 4
        %s166 = scalar_lea.vmem %s0, %s165
        %s167 = smul.u32 16, %s16
      $region28: #{deeplab_forward.11} parent=23 // pred_fallthru
        _
    $region24: #{deeplab_forward.11} parent=5 // pred_fallthru
      _
    %p168 = scmp.le.s32.totalorder 1, %s9
    %p169 = scmp.lt.s32.totalorder %s9, 5
    %p170 = pnand %p168, %p169
    %p171 = pneg %p170
    // Predicated region
    $region29: #{deeplab_forward.11} parent=5 // pred_check
      _
    $region30: #{deeplab_forward.11} parent=5 // pred_check_branch
      %173 = sbr.rel (%p170) target = $region32
    $region31: #{deeplab_forward.11} parent=5 // pred_region
      %s174 = ssub.s32 %s9, 1
      %s175 = smul.u32 16, %s18
      %p176 = scmp.lt.s32.totalorder %s175, 63
      %s177 = scalar_select %p176, %s175, 63
      %s178 = smul.addr %s177, 4
      %s179 = scalar_lea.vmem %s0, %s178
      %p180 = pneg %p47
      %p181 = pneg %p44
      %p182 = scmp.lt.s32.totalorder %s19, 0
      %s183 = scalar_select %p182, %s19, 0
      %s184 = smul.addr %s183, 4
      %s185 = scalar_lea.vmem %s1, %s184
      %p186 = pneg %p73
      %p187 = pneg %p70
      %p188 = scmp.lt.s32.totalorder %s19, 0
      %s189 = scalar_select %p188, %s19, 0
      %s190 = scalar_lea.vmem %s2, %s189
      %p191 = pneg %p99
      %p192 = pneg %p96
      %p193 = pneg %p127
      %p194 = pneg %p124
      %s195 = smul.u32 16, %s18
      %p196 = scmp.lt.s32.totalorder %s195, 63
      %s197 = scalar_select %p196, %s195, 63
      %p198 = scmp.lt.s32.totalorder %s19, 0
      %s199 = scalar_select %p198, %s19, 0
      %s200 = sadd.s32 %s199, %s197
      %s201 = smul.addr %s200, 8
      %s202 = scalar_lea.vmem %s3, %s201
      %s203 = smul.u32 16, %s18
      %p204 = scmp.lt.s32.totalorder %s203, 63
      %s205 = scalar_select %p204, %s203, 63
      %s206 = smul.addr %s205, 4
      %s207 = scalar_lea.vmem %s0, %s206
      %s208 = smul.u32 16, %s18
      %p209 = scmp.lt.s32.totalorder %s19, 0
      %s210 = scalar_select %p209, %s19, 0
      %s211 = smul.addr %s210, 4
      %s212 = scalar_lea.vmem %s1, %s211
      %p213 = scmp.lt.s32.totalorder %s19, 0
      %s214 = scalar_select %p213, %s19, 0
      %s215 = scalar_lea.vmem %s2, %s214
      %s216 = smul.u32 16, %s18
      %p217 = scmp.lt.s32.totalorder %s216, 63
      %s218 = scalar_select %p217, %s216, 63
      %p219 = scmp.lt.s32.totalorder %s19, 0
      %s220 = scalar_select %p219, %s19, 0
      %s221 = sadd.s32 %s220, %s218
      %s222 = smul.addr %s221, 8
      %s223 = scalar_lea.vmem %s3, %s222
      %s224 = smul.u32 16, %s18
      %v226 = vld [vmem:[%s207] sm:$0xf]
      %v227 = vld [vmem:[%s207 + $0x4] sm:$0xf]
      %v228 = vld [vmem:[%s207 + $0x8] sm:$0xf]
      %v229 = vld [vmem:[%s207 + $0xc] sm:$0xf]
      %v230 = vld [vmem:[%s207 + $0x10] sm:$0xf]
      %v231 = vld [vmem:[%s207 + $0x14] sm:$0xf]
      %v232 = vld [vmem:[%s207 + $0x18] sm:$0xf]
      %v233 = vld [vmem:[%s207 + $0x1c] sm:$0xf]
      %v234 = vld [vmem:[%s207 + $0x20] sm:$0xf]
      %v235 = vld [vmem:[%s207 + $0x24] sm:$0xf]
      %v236 = vld [vmem:[%s207 + $0x28] sm:$0xf]
      %v237 = vld [vmem:[%s207 + $0x2c] sm:$0xf]
      %v238 = vld [vmem:[%s207 + $0x30] sm:$0xf]
      %v239 = vld [vmem:[%s207 + $0x34] sm:$0xf]
      %v240 = vld [vmem:[%s207 + $0x38] sm:$0xf]
      %v241 = vld [vmem:[%s207 + $0x3c] sm:$0xf]
      %v242 = vld [vmem:[%s212] sm:$0xf]
      %v243 = vld [vmem:[%s212 + $0x4] sm:$0xf]
      %v244 = vld [vmem:[%s212 + $0x8] sm:$0xf]
      %v245 = vld [vmem:[%s212 + $0xc] sm:$0xf]
      %v246 = vld [vmem:[%s215] sm:$0x1]
      %v248 = vperm.slane %v246, 0
      %v266 = vunpack.c.l.b16 %v226
      %v267 = vunpack.c.l.b16 %v227
      %v268 = vunpack.c.l.b16 %v228
      %v269 = vunpack.c.l.b16 %v229
      %v270 = vunpack.c.l.b16 %v230
      %v271 = vunpack.c.l.b16 %v231
      %v272 = vunpack.c.l.b16 %v232
      %v273 = vunpack.c.l.b16 %v233
      %v274 = vunpack.c.l.b16 %v234
      %v275 = vunpack.c.l.b16 %v235
      %v276 = vunpack.c.l.b16 %v236
      %v277 = vunpack.c.l.b16 %v237
      %v278 = vunpack.c.l.b16 %v238
      %v279 = vunpack.c.l.b16 %v239
      %v280 = vunpack.c.l.b16 %v240
      %v281 = vunpack.c.l.b16 %v241
      %v282 = vpack.c.b16 %v267, %v266
      %v283 = vpack.c.b16 %v269, %v268
      %v284 = vpack.c.b16 %v271, %v270
      %v285 = vpack.c.b16 %v273, %v272
      %v286 = vpack.c.b16 %v275, %v274
      %v287 = vpack.c.b16 %v277, %v276
      %v288 = vpack.c.b16 %v279, %v278
      %v289 = vpack.c.b16 %v281, %v280
      %v294 = vunpack.c.l.b16 %v242
      %v295 = vunpack.c.l.b16 %v243
      %v296 = vunpack.c.l.b16 %v244
      %v297 = vunpack.c.l.b16 %v245
      %v298 = vpack.c.b16 %v295, %v294
      %v299 = vpack.c.b16 %v297, %v296
      %vm302 = vcmask 261120
      %v304 = vsel %vm302, %v282, 0
      %v307 = vsel %vm302, %v283, 0
      %v310 = vsel %vm302, %v284, 0
      %v313 = vsel %vm302, %v285, 0
      %v316 = vsel %vm302, %v286, 0
      %v319 = vsel %vm302, %v287, 0
      %v322 = vsel %vm302, %v288, 0
      %v325 = vsel %vm302, %v289, 0
      %327 = vmatpush.bf16.msra.mxu0 0
      %328 = vmatpush.bf16.msra.mxu0 0
      %329 = vmatpush.bf16.msra.mxu0 0
      %330 = vmatpush.bf16.msra.mxu0 0
      %331 = vmatpush.bf16.msra.mxu0 0
      %332 = vmatpush.bf16.msra.mxu0 0
      %333 = vmatpush.bf16.msra.mxu0 %v299
      %334 = vmatpush.bf16.msra.mxu0 %v298
      %335 = vmatmul.bf16.gmra.mxu0 %v304
      %v336 = vpop.f32.mrf.mxu0
      %v337 = vadd.f32 %v248, %v336
      %v338 = vpop.f32.mrf.mxu0
      %v339 = vadd.f32 %v248, %v338
      %340 = vmatmul.bf16.gmra.mxu0 %v307
      %v341 = vpop.f32.mrf.mxu0
      %v342 = vadd.f32 %v248, %v341
      %v343 = vpop.f32.mrf.mxu0
      %v344 = vadd.f32 %v248, %v343
      %345 = vmatmul.bf16.gmra.mxu0 %v310
      %v346 = vpop.f32.mrf.mxu0
      %v347 = vadd.f32 %v248, %v346
      %v348 = vpop.f32.mrf.mxu0
      %v349 = vadd.f32 %v248, %v348
      %350 = vmatmul.bf16.gmra.mxu0 %v313
      %v351 = vpop.f32.mrf.mxu0
      %v352 = vadd.f32 %v248, %v351
      %v353 = vpop.f32.mrf.mxu0
      %v354 = vadd.f32 %v248, %v353
      %355 = vmatmul.bf16.gmra.mxu0 %v316
      %v356 = vpop.f32.mrf.mxu0
      %v357 = vadd.f32 %v248, %v356
      %v358 = vpop.f32.mrf.mxu0
      %v359 = vadd.f32 %v248, %v358
      %360 = vmatmul.bf16.gmra.mxu0 %v319
      %v361 = vpop.f32.mrf.mxu0
      %v362 = vadd.f32 %v248, %v361
      %v363 = vpop.f32.mrf.mxu0
      %v364 = vadd.f32 %v248, %v363
      %365 = vmatmul.bf16.gmra.mxu0 %v322
      %v366 = vpop.f32.mrf.mxu0
      %v367 = vadd.f32 %v248, %v366
      %v368 = vpop.f32.mrf.mxu0
      %v369 = vadd.f32 %v248, %v368
      %370 = vmatmul.bf16.gmra.mxu0 %v325
      %v371 = vpop.f32.mrf.mxu0
      %v372 = vadd.f32 %v248, %v371
      %v373 = vpop.f32.mrf.mxu0
      %v374 = vadd.f32 %v248, %v373
      %375 = vdwg.mxu0
      %v376 = vmax.f32 %v337, 0.0
      %v377 = vmax.f32 %v339, 0.0
      %v378 = vmax.f32 %v342, 0.0
      %v379 = vmax.f32 %v344, 0.0
      %v380 = vmax.f32 %v347, 0.0
      %v381 = vmax.f32 %v349, 0.0
      %v382 = vmax.f32 %v352, 0.0
      %v383 = vmax.f32 %v354, 0.0
      %v384 = vmax.f32 %v357, 0.0
      %v385 = vmax.f32 %v359, 0.0
      %v386 = vmax.f32 %v362, 0.0
      %v387 = vmax.f32 %v364, 0.0
      %v388 = vmax.f32 %v367, 0.0
      %v389 = vmax.f32 %v369, 0.0
      %v390 = vmax.f32 %v372, 0.0
      %v391 = vmax.f32 %v374, 0.0
      %vm392 = vcmask 130048
      %393 = vst.msk [vmem:[%s223] sm:$0xff] %vm392, %v376
      %394 = vst.msk [vmem:[%s223 + $0x8] sm:$0xff] %vm392, %v377
      %395 = vst.msk [vmem:[%s223 + $0x10] sm:$0xff] %vm392, %v378
      %396 = vst.msk [vmem:[%s223 + $0x18] sm:$0xff] %vm392, %v379
      %397 = vst.msk [vmem:[%s223 + $0x20] sm:$0xff] %vm392, %v380
      %398 = vst.msk [vmem:[%s223 + $0x28] sm:$0xff] %vm392, %v381
      %399 = vst.msk [vmem:[%s223 + $0x30] sm:$0xff] %vm392, %v382
      %400 = vst.msk [vmem:[%s223 + $0x38] sm:$0xff] %vm392, %v383
      %401 = vst.msk [vmem:[%s223 + $0x40] sm:$0xff] %vm392, %v384
      %402 = vst.msk [vmem:[%s223 + $0x48] sm:$0xff] %vm392, %v385
      %403 = vst.msk [vmem:[%s223 + $0x50] sm:$0xff] %vm392, %v386
      %404 = vst.msk [vmem:[%s223 + $0x58] sm:$0xff] %vm392, %v387
      %405 = vst.msk [vmem:[%s223 + $0x60] sm:$0xff] %vm392, %v388
      %406 = vst.msk [vmem:[%s223 + $0x68] sm:$0xff] %vm392, %v389
      %407 = vst.msk [vmem:[%s223 + $0x70] sm:$0xff] %vm392, %v390
      %408 = vst.msk [vmem:[%s223 + $0x78] sm:$0xff] %vm392, %v391
      %s409 = smul.u32 16, %s18
      %p410 = scmp.lt.s32.totalorder %s409, 63
      %s411 = scalar_select %p410, %s409, 63
      %p412 = scmp.lt.s32.totalorder %s19, 0
      %s413 = scalar_select %p412, %s19, 0
      %s414 = sadd.s32 %s413, %s411
      %s415 = smul.addr %s414, 8
      %s416 = scalar_lea.vmem %s3, %s415
      // Predicated region
      $region33: #{deeplab_forward.11} parent=31 // pred_check
        %p417 = pneg %p124
      $region34: #{deeplab_forward.11} parent=31 // pred_check_branch
        %419 = sbr.rel (%p417) target = $region36
      $region35: #{deeplab_forward.11} parent=31 // pred_region
        %s420 = smul.u32 16, %s18
      $region36: #{deeplab_forward.11} parent=31 // pred_fallthru
        _
    $region32: #{deeplab_forward.11} parent=5 // pred_fallthru
      _
    %p421 = scmp.le.s32.totalorder 2, %s9
    // Predicated region
    $region37: #{deeplab_forward.11} parent=5 // pred_check
      %p422 = pneg %p421
    $region38: #{deeplab_forward.11} parent=5 // pred_check_branch
      %424 = sbr.rel (%p422) target = $region40
    $region39: #{deeplab_forward.11} parent=5 // pred_region
      %s425 = ssub.s32 %s9, 2
      // Predicated region
      $region41: #{deeplab_forward.11} parent=39 // pred_check
        %p426 = pneg %p130
      $region42: #{deeplab_forward.11} parent=39 // pred_check_branch
        %428 = sbr.rel (%p426) target = $region44
      $region43: #{deeplab_forward.11} parent=39 // pred_region
        %s429 = smul.u32 16, %s20
        %p430 = scmp.lt.s32.totalorder %s429, 63
        %s431 = scalar_select %p430, %s429, 63
        %p432 = scmp.lt.s32.totalorder %s21, 0
        %s433 = scalar_select %p432, %s21, 0
        %s434 = sadd.s32 %s433, %s431
        %s435 = smul.addr %s434, 8
        %s436 = scalar_lea.vmem %s3, %s435
      $region44: #{deeplab_forward.11} parent=39 // pred_fallthru
        _
    $region40: #{deeplab_forward.11} parent=5 // pred_fallthru
      _
  $region6: #{deeplab_forward.11} parent=0 // loop_footer
    %s13 = sadd.s32 1, %s9
  $region7: #{deeplab_forward.11} parent=0 // loop_footer_branch
    %8 = sbr.rel target = $region3
  $region8: #{deeplab_forward.11} parent=0 // loop_exit
    _

// kernel: deeplab_forward.12
$region0: #{deeplab_forward.12}
  #allocation0 [shape = 'u32[]', space=smem, size = 0x4, offset = 0x4, fixed_abs, tag = 'smem constant byte address 0x4 - core index']
  #allocation1 [shape = 'u32[72,128]{1,0:T(1,128)}', space=vmem, size = 0x9000, scoped, tag = 'internal scratch']
  %s0 = inlined_call_operand.vmem [shape: bf16[128,144], index: 0, kind: input, shape index: {}]
  %s1 = inlined_call_operand.vmem [shape: bf16[144,16], index: 1, kind: input, shape index: {}]
  %s2 = inlined_call_operand.vmem [shape: f32[1,16], index: 2, kind: input, shape index: {}]
  %s3 = inlined_call_operand.vmem [shape: f32[128,16], index: 3, kind: output, shape index: {}]
  %s4 = sld [smem:[#allocation0]]
  $region45: #{deeplab_forward.12} parent=0
    _
  %s6 = ssub.s32 1, %s4
  %s7 = scalar_select 0, %s6, %s4
  loop: start=0, step=1, limit=4
  $region2: #{deeplab_forward.12} parent=0 // loop_pre_header
    _
  $region3: #{deeplab_forward.12} parent=0 // loop_header
    %s9 = sphi 0, %s13
    %p10 = scmp.ge.s32.totalorder %s9, 4
    %s16 = sphi 0, %s28
    %s17 = sphi 0, %s24
    %s18 = sphi 0, %s16
    %s19 = sphi 0, %s17
    %s20 = sphi 0, %s18
    %s21 = sphi 0, %s19
    %s31 = sphi 0, %s33
    %s34 = sphi 0, %s31
    %s35 = sphi 0, %s34
    %s51 = sphi 0, %s35
    %s57 = sphi 0, %s59
    %s60 = sphi 0, %s57
    %s61 = sphi 0, %s60
    %s77 = sphi 0, %s61
    %s83 = sphi 0, %s85
    %s86 = sphi 0, %s83
    %s87 = sphi 0, %s86
    %s103 = sphi 0, %s87
    %s111 = sphi 0, %s113
    %s114 = sphi 0, %s111
    %s115 = sphi 0, %s114
    %s131 = sphi 0, %s115
  $region4: #{deeplab_forward.12} parent=0 // loop_header_branch
    %12 = sbr.rel (%p10) target = $region8
  $region5: #{deeplab_forward.12} parent=0 // loop_body
    %s14 = ssub.s32 %s9, 1
    %s15 = ssub.s32 %s9, 2
    %s22 = sadd.s32 1, %s17
    %p23 = scmp.ge.s32.totalorder %s22, 1
    %s24 = scalar_select %p23, 0, %s22
    %s25 = sadd.s32 1, %s16
    %s26 = scalar_select %p23, %s25, %s16
    %p27 = scmp.ge.s32.totalorder %s26, 2
    %s28 = scalar_select %p27, 0, %s26
    %s29 = ssub.s32 %s16, %s28
    %p30 = scmp.eq.s32.totalorder %s29, 0
    %s32 = sadd.s32 %s31, 1
    %s33 = scalar_select %p30, %s31, %s32
    %p36 = pneg %p30
    %p37 = scmp.eq.s32.totalorder %s9, 1
    %p38 = por %p36, %p37
    %p39 = scmp.ne.s32.totalorder %s31, %s34
    %p40 = scmp.eq.s32.totalorder %s9, 0
    %p41 = por %p39, %p40
    %p42 = scmp.ne.s32.totalorder %s31, %s34
    %p43 = scmp.eq.s32.totalorder %s14, 1
    %p44 = por %p42, %p43
    %p45 = scmp.ne.s32.totalorder %s34, %s35
    %p46 = scmp.eq.s32.totalorder %s14, 0
    %p47 = por %p45, %p46
    %p48 = scmp.ne.s32.totalorder %s34, %s35
    %p49 = scmp.eq.s32.totalorder %s15, 1
    %p50 = por %p48, %p49
    %p52 = scmp.ne.s32.totalorder %s35, %s51
    %p53 = scmp.eq.s32.totalorder %s15, 0
    %p54 = por %p52, %p53
    %s55 = ssub.s32 %s17, %s24
    %p56 = scmp.eq.s32.totalorder %s55, 0
    %s58 = sadd.s32 %s57, 1
    %s59 = scalar_select %p56, %s57, %s58
    %p62 = pneg %p56
    %p63 = scmp.eq.s32.totalorder %s9, 1
    %p64 = por %p62, %p63
    %p65 = scmp.ne.s32.totalorder %s57, %s60
    %p66 = scmp.eq.s32.totalorder %s9, 0
    %p67 = por %p65, %p66
    %p68 = scmp.ne.s32.totalorder %s57, %s60
    %p69 = scmp.eq.s32.totalorder %s14, 1
    %p70 = por %p68, %p69
    %p71 = scmp.ne.s32.totalorder %s60, %s61
    %p72 = scmp.eq.s32.totalorder %s14, 0
    %p73 = por %p71, %p72
    %p74 = scmp.ne.s32.totalorder %s60, %s61
    %p75 = scmp.eq.s32.totalorder %s15, 1
    %p76 = por %p74, %p75
    %p78 = scmp.ne.s32.totalorder %s61, %s77
    %p79 = scmp.eq.s32.totalorder %s15, 0
    %p80 = por %p78, %p79
    %s81 = ssub.s32 %s17, %s24
    %p82 = scmp.eq.s32.totalorder %s81, 0
    %s84 = sadd.s32 %s83, 1
    %s85 = scalar_select %p82, %s83, %s84
    %p88 = pneg %p82
    %p89 = scmp.eq.s32.totalorder %s9, 1
    %p90 = por %p88, %p89
    %p91 = scmp.ne.s32.totalorder %s83, %s86
    %p92 = scmp.eq.s32.totalorder %s9, 0
    %p93 = por %p91, %p92
    %p94 = scmp.ne.s32.totalorder %s83, %s86
    %p95 = scmp.eq.s32.totalorder %s14, 1
    %p96 = por %p94, %p95
    %p97 = scmp.ne.s32.totalorder %s86, %s87
    %p98 = scmp.eq.s32.totalorder %s14, 0
    %p99 = por %p97, %p98
    %p100 = scmp.ne.s32.totalorder %s86, %s87
    %p101 = scmp.eq.s32.totalorder %s15, 1
    %p102 = por %p100, %p101
    %p104 = scmp.ne.s32.totalorder %s87, %s103
    %p105 = scmp.eq.s32.totalorder %s15, 0
    %p106 = por %p104, %p105
    %s107 = ssub.s32 %s16, %s28
    %s108 = ssub.s32 %s17, %s24
    %s109 = sor.u32 %s107, %s108
    %p110 = scmp.eq.s32.totalorder %s109, 0
    %s112 = sadd.s32 %s111, 1
    %s113 = scalar_select %p110, %s111, %s112
    %p116 = pneg %p110
    %p117 = scmp.eq.s32.totalorder %s9, 1
    %p118 = por %p116, %p117
    %p119 = scmp.ne.s32.totalorder %s111, %s114
    %p120 = scmp.eq.s32.totalorder %s9, 0
    %p121 = por %p119, %p120
    %p122 = scmp.ne.s32.totalorder %s111, %s114
    %p123 = scmp.eq.s32.totalorder %s14, 1
    %p124 = por %p122, %p123
    %p125 = scmp.ne.s32.totalorder %s114, %s115
    %p126 = scmp.eq.s32.totalorder %s14, 0
    %p127 = por %p125, %p126
    %p128 = scmp.ne.s32.totalorder %s114, %s115
    %p129 = scmp.eq.s32.totalorder %s15, 1
    %p130 = por %p128, %p129
    %p132 = scmp.ne.s32.totalorder %s115, %s131
    %p133 = scmp.eq.s32.totalorder %s15, 0
    %p134 = por %p132, %p133
    %p135 = scmp.le.s32.totalorder 1, %s9
    %p136 = scmp.lt.s32.totalorder %s9, 3
    %p137 = pnand %p135, %p136
    %p138 = pneg %p137
    // Predicated region
    $region9: #{deeplab_forward.12} parent=5 // pred_check
      _
    $region10: #{deeplab_forward.12} parent=5 // pred_check_branch
      %140 = sbr.rel (%p137) target = $region12
    $region11: #{deeplab_forward.12} parent=5 // pred_region
      %s141 = ssub.s32 %s9, 1
      // Predicated region
      $region13: #{deeplab_forward.12} parent=11 // pred_check
        %p142 = pneg %p73
      $region14: #{deeplab_forward.12} parent=11 // pred_check_branch
        %144 = sbr.rel (%p142) target = $region16
      $region15: #{deeplab_forward.12} parent=11 // pred_region
        %p145 = scmp.lt.s32.totalorder %s19, 0
        %s146 = scalar_select %p145, %s19, 0
        %s147 = smul.addr %s146, 4
        %s148 = scalar_lea.vmem %s1, %s147
      $region16: #{deeplab_forward.12} parent=11 // pred_fallthru
        _
      // Predicated region
      $region17: #{deeplab_forward.12} parent=11 // pred_check
        %p149 = pneg %p99
      $region18: #{deeplab_forward.12} parent=11 // pred_check_branch
        %151 = sbr.rel (%p149) target = $region20
      $region19: #{deeplab_forward.12} parent=11 // pred_region
        %p152 = scmp.lt.s32.totalorder %s19, 0
        %s153 = scalar_select %p152, %s19, 0
        %s154 = scalar_lea.vmem %s2, %s153
      $region20: #{deeplab_forward.12} parent=11 // pred_fallthru
        _
    $region12: #{deeplab_forward.12} parent=5 // pred_fallthru
      _
    %p155 = scmp.lt.s32.totalorder %s9, 2
    // Predicated region
    $region21: #{deeplab_forward.12} parent=5 // pred_check
      %p156 = pneg %p155
    $region22: #{deeplab_forward.12} parent=5 // pred_check_branch
      %158 = sbr.rel (%p156) target = $region24
    $region23: #{deeplab_forward.12} parent=5 // pred_region
      // Predicated region
      $region25: #{deeplab_forward.12} parent=23 // pred_check
        %p159 = pneg %p41
      $region26: #{deeplab_forward.12} parent=23 // pred_check_branch
        %161 = sbr.rel (%p159) target = $region28
      $region27: #{deeplab_forward.12} parent=23 // pred_region
        %s162 = smul.u32 8, %s16
        %p163 = scmp.lt.s32.totalorder %s162, 15
        %s164 = scalar_select %p163, %s162, 15
        %s165 = smul.addr %s164, 2
        %s166 = smul.addr %s165, 4
        %s167 = scalar_lea.vmem %s0, %s166
        %s168 = smul.u32 8, %s16
      $region28: #{deeplab_forward.12} parent=23 // pred_fallthru
        _
    $region24: #{deeplab_forward.12} parent=5 // pred_fallthru
      _
    %p169 = scmp.le.s32.totalorder 1, %s9
    %p170 = scmp.lt.s32.totalorder %s9, 3
    %p171 = pnand %p169, %p170
    %p172 = pneg %p171
    // Predicated region
    $region29: #{deeplab_forward.12} parent=5 // pred_check
      _
    $region30: #{deeplab_forward.12} parent=5 // pred_check_branch
      %174 = sbr.rel (%p171) target = $region32
    $region31: #{deeplab_forward.12} parent=5 // pred_region
      %s175 = ssub.s32 %s9, 1
      %s176 = smul.u32 8, %s18
      %p177 = scmp.lt.s32.totalorder %s176, 15
      %s178 = scalar_select %p177, %s176, 15
      %s179 = smul.addr %s178, 2
      %s180 = smul.addr %s179, 4
      %s181 = scalar_lea.vmem %s0, %s180
      %p182 = pneg %p47
      %p183 = pneg %p44
      %p184 = scmp.lt.s32.totalorder %s19, 0
      %s185 = scalar_select %p184, %s19, 0
      %s186 = smul.addr %s185, 4
      %s187 = scalar_lea.vmem %s1, %s186
      %p188 = pneg %p73
      %p189 = pneg %p70
      %p190 = scmp.lt.s32.totalorder %s19, 0
      %s191 = scalar_select %p190, %s19, 0
      %s192 = scalar_lea.vmem %s2, %s191
      %p193 = pneg %p99
      %p194 = pneg %p96
      %p195 = pneg %p127
      %p196 = pneg %p124
      %s197 = smul.u32 8, %s18
      %p198 = scmp.lt.s32.totalorder %s197, 15
      %s199 = scalar_select %p198, %s197, 15
      %p200 = scmp.lt.s32.totalorder %s19, 0
      %s201 = scalar_select %p200, %s19, 0
      %s202 = sadd.s32 %s201, %s199
      %s203 = smul.addr %s202, 8
      %s204 = scalar_lea.vmem %s3, %s203
      %s205 = smul.u32 8, %s18
      %p206 = scmp.lt.s32.totalorder %s205, 15
      %s207 = scalar_select %p206, %s205, 15
      %s208 = smul.addr %s207, 2
      %s209 = smul.addr %s208, 4
      %s210 = scalar_lea.vmem %s0, %s209
      %s211 = smul.u32 8, %s18
      %p212 = scmp.lt.s32.totalorder %s19, 0
      %s213 = scalar_select %p212, %s19, 0
      %s214 = smul.addr %s213, 4
      %s215 = scalar_lea.vmem %s1, %s214
      %p216 = scmp.lt.s32.totalorder %s19, 0
      %s217 = scalar_select %p216, %s19, 0
      %s218 = scalar_lea.vmem %s2, %s217
      %s219 = smul.u32 8, %s18
      %p220 = scmp.lt.s32.totalorder %s219, 15
      %s221 = scalar_select %p220, %s219, 15
      %p222 = scmp.lt.s32.totalorder %s19, 0
      %s223 = scalar_select %p222, %s19, 0
      %s224 = sadd.s32 %s223, %s221
      %s225 = smul.addr %s224, 8
      %s226 = scalar_lea.vmem %s3, %s225
      %s227 = smul.u32 8, %s18
      %v229 = vld [vmem:[%s210] sm:$0xff]
      %v230 = vld [vmem:[%s210 + $0x8] sm:$0xff]
      %v231 = vld [vmem:[%s210 + $0x10] sm:$0xff]
      %v232 = vld [vmem:[%s210 + $0x18] sm:$0xff]
      %v233 = vld [vmem:[%s210 + $0x20] sm:$0xff]
      %v234 = vld [vmem:[%s210 + $0x28] sm:$0xff]
      %v235 = vld [vmem:[%s210 + $0x30] sm:$0xff]
      %v236 = vld [vmem:[%s210 + $0x38] sm:$0xff]
      %v237 = vld [vmem:[%s215] sm:$0xf]
      %v238 = vld [vmem:[%s215 + $0x4] sm:$0xf]
      %v239 = vld [vmem:[%s215 + $0x8] sm:$0xf]
      %v240 = vld [vmem:[%s215 + $0xc] sm:$0xf]
      %v241 = vld [vmem:[%s215 + $0x10] sm:$0xf]
      %v242 = vld [vmem:[%s215 + $0x14] sm:$0xf]
      %v243 = vld [vmem:[%s215 + $0x18] sm:$0xf]
      %v244 = vld [vmem:[%s215 + $0x1c] sm:$0xf]
      %v245 = vld [vmem:[%s215 + $0x20] sm:$0xf]
      %v246 = vld [vmem:[%s215 + $0x24] sm:$0xf]
      %v247 = vld [vmem:[%s215 + $0x28] sm:$0xf]
      %v248 = vld [vmem:[%s215 + $0x2c] sm:$0xf]
      %v249 = vld [vmem:[%s215 + $0x30] sm:$0xf]
      %v250 = vld [vmem:[%s215 + $0x34] sm:$0xf]
      %v251 = vld [vmem:[%s215 + $0x38] sm:$0xf]
      %v252 = vld [vmem:[%s215 + $0x3c] sm:$0xf]
      %v253 = vld [vmem:[%s215 + $0x40] sm:$0xf]
      %v254 = vld [vmem:[%s215 + $0x44] sm:$0xf]
      %v255 = vld [vmem:[%s218] sm:$0x1]
      %v257 = vperm.slane %v255, 0
      %v267 = vunpack.c.l.b16 %v229
      %v268 = vunpack.c.h.b16 %v229
      %v269 = vunpack.c.l.b16 %v230
      %v270 = vunpack.c.h.b16 %v230
      %v271 = vunpack.c.l.b16 %v231
      %v272 = vunpack.c.h.b16 %v231
      %v273 = vunpack.c.l.b16 %v232
      %v274 = vunpack.c.h.b16 %v232
      %v275 = vunpack.c.l.b16 %v233
      %v276 = vunpack.c.h.b16 %v233
      %v277 = vunpack.c.l.b16 %v234
      %v278 = vunpack.c.h.b16 %v234
      %v279 = vunpack.c.l.b16 %v235
      %v280 = vunpack.c.h.b16 %v235
      %v281 = vunpack.c.l.b16 %v236
      %v282 = vunpack.c.h.b16 %v236
      %v283 = vpack.c.b16 %v269, %v267
      %v284 = vpack.c.b16 %v270, %v268
      %v285 = vpack.c.b16 %v273, %v271
      %v286 = vpack.c.b16 %v274, %v272
      %v287 = vpack.c.b16 %v277, %v275
      %v288 = vpack.c.b16 %v278, %v276
      %v289 = vpack.c.b16 %v281, %v279
      %v290 = vpack.c.b16 %v282, %v280
      %v313 = vunpack.c.l.b16 %v237
      %v314 = vunpack.c.l.b16 %v238
      %v315 = vunpack.c.l.b16 %v239
      %v316 = vunpack.c.l.b16 %v240
      %v317 = vunpack.c.l.b16 %v241
      %v318 = vunpack.c.l.b16 %v242
      %v319 = vunpack.c.l.b16 %v243
      %v320 = vunpack.c.l.b16 %v244
      %v321 = vunpack.c.l.b16 %v245
      %v322 = vunpack.c.l.b16 %v246
      %v323 = vunpack.c.l.b16 %v247
      %v324 = vunpack.c.l.b16 %v248
      %v325 = vunpack.c.l.b16 %v249
      %v326 = vunpack.c.l.b16 %v250
      %v327 = vunpack.c.l.b16 %v251
      %v328 = vunpack.c.l.b16 %v252
      %v329 = vunpack.c.l.b16 %v253
      %v330 = vunpack.c.l.b16 %v254
      %v331 = vpack.c.b16 %v314, %v313
      %v332 = vpack.c.b16 %v316, %v315
      %v333 = vpack.c.b16 %v318, %v317
      %v334 = vpack.c.b16 %v320, %v319
      %v335 = vpack.c.b16 %v322, %v321
      %v336 = vpack.c.b16 %v324, %v323
      %v337 = vpack.c.b16 %v326, %v325
      %v338 = vpack.c.b16 %v328, %v327
      %v339 = vpack.c.b16 %v330, %v329
      %vm349 = vcmask 130048
      %v351 = vsel %vm349, %v284, 0
      %v354 = vsel %vm349, %v286, 0
      %v357 = vsel %vm349, %v288, 0
      %v360 = vsel %vm349, %v290, 0
      %362 = vmatpush.bf16.msra.mxu0 %v338
      %363 = vmatpush.bf16.msra.mxu0 %v337
      %364 = vmatpush.bf16.msra.mxu0 %v336
      %365 = vmatpush.bf16.msra.mxu0 %v335
      %366 = vmatpush.bf16.msra.mxu0 %v334
      %367 = vmatpush.bf16.msra.mxu0 %v333
      %368 = vmatpush.bf16.msra.mxu0 %v332
      %369 = vmatpush.bf16.msra.mxu0 %v331
      %370 = vmatmul.bf16.gmra.mxu0 %v283
      %v371 = vpop.f32.mrf.mxu0
      %v372 = vadd.f32 %v257, %v371
      %v373 = vpop.f32.mrf.mxu0
      %v374 = vadd.f32 %v257, %v373
      %375 = vmatmul.bf16.gmra.mxu0 %v285
      %v376 = vpop.f32.mrf.mxu0
      %v377 = vadd.f32 %v257, %v376
      %v378 = vpop.f32.mrf.mxu0
      %v379 = vadd.f32 %v257, %v378
      %380 = vmatmul.bf16.gmra.mxu0 %v287
      %v381 = vpop.f32.mrf.mxu0
      %v382 = vadd.f32 %v257, %v381
      %v383 = vpop.f32.mrf.mxu0
      %v384 = vadd.f32 %v257, %v383
      %385 = vmatmul.bf16.gmra.mxu0 %v289
      %v386 = vpop.f32.mrf.mxu0
      %v387 = vadd.f32 %v257, %v386
      %v388 = vpop.f32.mrf.mxu0
      %v389 = vadd.f32 %v257, %v388
      %390 = vdwg.mxu0
      %391 = vmatpush.bf16.msra.mxu0 0
      %392 = vmatpush.bf16.msra.mxu0 0
      %393 = vmatpush.bf16.msra.mxu0 0
      %394 = vmatpush.bf16.msra.mxu0 0
      %395 = vmatpush.bf16.msra.mxu0 0
      %396 = vmatpush.bf16.msra.mxu0 0
      %397 = vmatpush.bf16.msra.mxu0 0
      %398 = vmatpush.bf16.msra.mxu0 %v339
      %399 = vmatmul.bf16.gmra.mxu0 %v351
      %v400 = vpop.f32.mrf.mxu0
      %v401 = vadd.f32 %v372, %v400
      %v402 = vpop.f32.mrf.mxu0
      %v403 = vadd.f32 %v374, %v402
      %404 = vmatmul.bf16.gmra.mxu0 %v354
      %v405 = vpop.f32.mrf.mxu0
      %v406 = vadd.f32 %v377, %v405
      %v407 = vpop.f32.mrf.mxu0
      %v408 = vadd.f32 %v379, %v407
      %409 = vmatmul.bf16.gmra.mxu0 %v357
      %v410 = vpop.f32.mrf.mxu0
      %v411 = vadd.f32 %v382, %v410
      %v412 = vpop.f32.mrf.mxu0
      %v413 = vadd.f32 %v384, %v412
      %414 = vmatmul.bf16.gmra.mxu0 %v360
      %v415 = vpop.f32.mrf.mxu0
      %v416 = vadd.f32 %v387, %v415
      %v417 = vpop.f32.mrf.mxu0
      %v418 = vadd.f32 %v389, %v417
      %419 = vdwg.mxu0
      %v420 = vmax.f32 %v401, 0.0
      %v421 = vmax.f32 %v403, 0.0
      %v422 = vmax.f32 %v406, 0.0
      %v423 = vmax.f32 %v408, 0.0
      %v424 = vmax.f32 %v411, 0.0
      %v425 = vmax.f32 %v413, 0.0
      %v426 = vmax.f32 %v416, 0.0
      %v427 = vmax.f32 %v418, 0.0
      %428 = vst.msk [vmem:[%s226] sm:$0xff] %vm349, %v420
      %429 = vst.msk [vmem:[%s226 + $0x8] sm:$0xff] %vm349, %v421
      %430 = vst.msk [vmem:[%s226 + $0x10] sm:$0xff] %vm349, %v422
      %431 = vst.msk [vmem:[%s226 + $0x18] sm:$0xff] %vm349, %v423
      %432 = vst.msk [vmem:[%s226 + $0x20] sm:$0xff] %vm349, %v424
      %433 = vst.msk [vmem:[%s226 + $0x28] sm:$0xff] %vm349, %v425
      %434 = vst.msk [vmem:[%s226 + $0x30] sm:$0xff] %vm349, %v426
      %435 = vst.msk [vmem:[%s226 + $0x38] sm:$0xff] %vm349, %v427
      %s436 = smul.u32 8, %s18
      %p437 = scmp.lt.s32.totalorder %s436, 15
      %s438 = scalar_select %p437, %s436, 15
      %p439 = scmp.lt.s32.totalorder %s19, 0
      %s440 = scalar_select %p439, %s19, 0
      %s441 = sadd.s32 %s440, %s438
      %s442 = smul.addr %s441, 8
      %s443 = scalar_lea.vmem %s3, %s442
      // Predicated region
      $region33: #{deeplab_forward.12} parent=31 // pred_check
        %p444 = pneg %p124
      $region34: #{deeplab_forward.12} parent=31 // pred_check_branch
        %446 = sbr.rel (%p444) target = $region36
      $region35: #{deeplab_forward.12} parent=31 // pred_region
        %s447 = smul.u32 8, %s18
      $region36: #{deeplab_forward.12} parent=31 // pred_fallthru
        _
    $region32: #{deeplab_forward.12} parent=5 // pred_fallthru
      _
    %p448 = scmp.le.s32.totalorder 2, %s9
    // Predicated region
    $region37: #{deeplab_forward.12} parent=5 // pred_check
      %p449 = pneg %p448
    $region38: #{deeplab_forward.12} parent=5 // pred_check_branch
      %451 = sbr.rel (%p449) target = $region40
    $region39: #{deeplab_forward.12} parent=5 // pred_region
      %s452 = ssub.s32 %s9, 2
      // Predicated region
      $region41: #{deeplab_forward.12} parent=39 // pred_check
        %p453 = pneg %p130
      $region42: #{deeplab_forward.12} parent=39 // pred_check_branch
        %455 = sbr.rel (%p453) target = $region44
      $region43: #{deeplab_forward.12} parent=39 // pred_region
        %s456 = smul.u32 8, %s20
        %p457 = scmp.lt.s32.totalorder %s456, 15
        %s458 = scalar_select %p457, %s456, 15
        %p459 = scmp.lt.s32.totalorder %s21, 0
        %s460 = scalar_select %p459, %s21, 0
        %s461 = sadd.s32 %s460, %s458
        %s462 = smul.addr %s461, 8
        %s463 = scalar_lea.vmem %s3, %s462
      $region44: #{deeplab_forward.12} parent=39 // pred_fallthru
        _
    $region40: #{deeplab_forward.12} parent=5 // pred_fallthru
      _
  $region6: #{deeplab_forward.12} parent=0 // loop_footer
    %s13 = sadd.s32 1, %s9
  $region7: #{deeplab_forward.12} parent=0 // loop_footer_branch
    %8 = sbr.rel target = $region3
  $region8: #{deeplab_forward.12} parent=0 // loop_exit
    _

// kernel: deeplab_forward.13
$region0: #{deeplab_forward.13}
  #allocation0 [shape = 'u32[]', space=smem, size = 0x4, offset = 0x4, fixed_abs, tag = 'smem constant byte address 0x4 - core index']
  #allocation1 [shape = 'u32[72,128]{1,0:T(1,128)}', space=vmem, size = 0x9000, scoped, tag = 'internal scratch']
  %s0 = inlined_call_operand.vmem [shape: bf16[32,144], index: 0, kind: input, shape index: {}]
  %s1 = inlined_call_operand.vmem [shape: bf16[144,32], index: 1, kind: input, shape index: {}]
  %s2 = inlined_call_operand.vmem [shape: f32[1,32], index: 2, kind: input, shape index: {}]
  %s3 = inlined_call_operand.vmem [shape: f32[32,32], index: 3, kind: output, shape index: {}]
  %s4 = sld [smem:[#allocation0]]
  $region22: #{deeplab_forward.13} parent=0
    _
  %s6 = ssub.s32 1, %s4
  %s7 = scalar_select 0, %s6, %s4
  // Predicated region
  $region2: #{deeplab_forward.13} parent=0 // pred_check
    _
  $region3: #{deeplab_forward.13} parent=0 // pred_check_branch
    %9 = sbr.rel (0) target = $region5
  $region4: #{deeplab_forward.13} parent=0 // pred_region
    _
  $region5: #{deeplab_forward.13} parent=0 // pred_fallthru
    _
  // Predicated region
  $region6: #{deeplab_forward.13} parent=0 // pred_check
    _
  $region7: #{deeplab_forward.13} parent=0 // pred_check_branch
    %11 = sbr.rel (0) target = $region9
  $region8: #{deeplab_forward.13} parent=0 // pred_region
    _
  $region9: #{deeplab_forward.13} parent=0 // pred_fallthru
    _
  // Predicated region
  $region10: #{deeplab_forward.13} parent=0 // pred_check
    _
  $region11: #{deeplab_forward.13} parent=0 // pred_check_branch
    %13 = sbr.rel (0) target = $region13
  $region12: #{deeplab_forward.13} parent=0 // pred_region
    _
  $region13: #{deeplab_forward.13} parent=0 // pred_fallthru
    _
  %v15 = vld [vmem:[%s0] sm:$0xff]
  %v16 = vld [vmem:[%s0 + $0x8] sm:$0xff]
  %v17 = vld [vmem:[%s0 + $0x10] sm:$0xff]
  %v18 = vld [vmem:[%s0 + $0x18] sm:$0xff]
  %v19 = vld [vmem:[%s1] sm:$0xf]
  %v20 = vld [vmem:[%s1 + $0x4] sm:$0xf]
  %v21 = vld [vmem:[%s1 + $0x8] sm:$0xf]
  %v22 = vld [vmem:[%s1 + $0xc] sm:$0xf]
  %v23 = vld [vmem:[%s1 + $0x10] sm:$0xf]
  %v24 = vld [vmem:[%s1 + $0x14] sm:$0xf]
  %v25 = vld [vmem:[%s1 + $0x18] sm:$0xf]
  %v26 = vld [vmem:[%s1 + $0x1c] sm:$0xf]
  %v27 = vld [vmem:[%s1 + $0x20] sm:$0xf]
  %v28 = vld [vmem:[%s1 + $0x24] sm:$0xf]
  %v29 = vld [vmem:[%s1 + $0x28] sm:$0xf]
  %v30 = vld [vmem:[%s1 + $0x2c] sm:$0xf]
  %v31 = vld [vmem:[%s1 + $0x30] sm:$0xf]
  %v32 = vld [vmem:[%s1 + $0x34] sm:$0xf]
  %v33 = vld [vmem:[%s1 + $0x38] sm:$0xf]
  %v34 = vld [vmem:[%s1 + $0x3c] sm:$0xf]
  %v35 = vld [vmem:[%s1 + $0x40] sm:$0xf]
  %v36 = vld [vmem:[%s1 + $0x44] sm:$0xf]
  %v37 = vld [vmem:[%s2] sm:$0x1]
  %v39 = vperm.slane %v37, 0
  %v45 = vunpack.c.l.b16 %v15
  %v46 = vunpack.c.h.b16 %v15
  %v47 = vunpack.c.l.b16 %v16
  %v48 = vunpack.c.h.b16 %v16
  %v49 = vunpack.c.l.b16 %v17
  %v50 = vunpack.c.h.b16 %v17
  %v51 = vunpack.c.l.b16 %v18
  %v52 = vunpack.c.h.b16 %v18
  %v53 = vpack.c.b16 %v47, %v45
  %v54 = vpack.c.b16 %v48, %v46
  %v55 = vpack.c.b16 %v51, %v49
  %v56 = vpack.c.b16 %v52, %v50
  %v77 = vunpack.c.l.b16 %v19
  %v78 = vunpack.c.l.b16 %v20
  %v79 = vunpack.c.l.b16 %v21
  %v80 = vunpack.c.l.b16 %v22
  %v81 = vunpack.c.l.b16 %v23
  %v82 = vunpack.c.l.b16 %v24
  %v83 = vunpack.c.l.b16 %v25
  %v84 = vunpack.c.l.b16 %v26
  %v85 = vunpack.c.l.b16 %v27
  %v86 = vunpack.c.l.b16 %v28
  %v87 = vunpack.c.l.b16 %v29
  %v88 = vunpack.c.l.b16 %v30
  %v89 = vunpack.c.l.b16 %v31
  %v90 = vunpack.c.l.b16 %v32
  %v91 = vunpack.c.l.b16 %v33
  %v92 = vunpack.c.l.b16 %v34
  %v93 = vunpack.c.l.b16 %v35
  %v94 = vunpack.c.l.b16 %v36
  %v95 = vpack.c.b16 %v78, %v77
  %v96 = vpack.c.b16 %v80, %v79
  %v97 = vpack.c.b16 %v82, %v81
  %v98 = vpack.c.b16 %v84, %v83
  %v99 = vpack.c.b16 %v86, %v85
  %v100 = vpack.c.b16 %v88, %v87
  %v101 = vpack.c.b16 %v90, %v89
  %v102 = vpack.c.b16 %v92, %v91
  %v103 = vpack.c.b16 %v94, %v93
  %vm113 = vcmask 130048
  %v115 = vsel %vm113, %v54, 0
  %v118 = vsel %vm113, %v56, 0
  %120 = vmatpush.bf16.msra.mxu0 %v102
  %121 = vmatpush.bf16.msra.mxu0 %v101
  %122 = vmatpush.bf16.msra.mxu0 %v100
  %123 = vmatpush.bf16.msra.mxu0 %v99
  %124 = vmatpush.bf16.msra.mxu0 %v98
  %125 = vmatpush.bf16.msra.mxu0 %v97
  %126 = vmatpush.bf16.msra.mxu0 %v96
  %127 = vmatpush.bf16.msra.mxu0 %v95
  %128 = vmatmul.bf16.gmra.mxu0 %v53
  %v129 = vpop.f32.mrf.mxu0
  %v130 = vadd.f32 %v39, %v129
  %v131 = vpop.f32.mrf.mxu0
  %v132 = vadd.f32 %v39, %v131
  %133 = vmatmul.bf16.gmra.mxu0 %v55
  %v134 = vpop.f32.mrf.mxu0
  %v135 = vadd.f32 %v39, %v134
  %v136 = vpop.f32.mrf.mxu0
  %v137 = vadd.f32 %v39, %v136
  %138 = vdwg.mxu0
  %139 = vmatpush.bf16.msra.mxu0 0
  %140 = vmatpush.bf16.msra.mxu0 0
  %141 = vmatpush.bf16.msra.mxu0 0
  %142 = vmatpush.bf16.msra.mxu0 0
  %143 = vmatpush.bf16.msra.mxu0 0
  %144 = vmatpush.bf16.msra.mxu0 0
  %145 = vmatpush.bf16.msra.mxu0 0
  %146 = vmatpush.bf16.msra.mxu0 %v103
  %147 = vmatmul.bf16.gmra.mxu0 %v115
  %v148 = vpop.f32.mrf.mxu0
  %v149 = vadd.f32 %v130, %v148
  %v150 = vpop.f32.mrf.mxu0
  %v151 = vadd.f32 %v132, %v150
  %152 = vmatmul.bf16.gmra.mxu0 %v118
  %v153 = vpop.f32.mrf.mxu0
  %v154 = vadd.f32 %v135, %v153
  %v155 = vpop.f32.mrf.mxu0
  %v156 = vadd.f32 %v137, %v155
  %157 = vdwg.mxu0
  %v158 = vmax.f32 %v149, 0.0
  %v159 = vmax.f32 %v151, 0.0
  %v160 = vmax.f32 %v154, 0.0
  %v161 = vmax.f32 %v156, 0.0
  %vm162 = vcmask 261120
  %163 = vst.msk [vmem:[%s3] sm:$0xff] %vm162, %v158
  %164 = vst.msk [vmem:[%s3 + $0x8] sm:$0xff] %vm162, %v159
  %165 = vst.msk [vmem:[%s3 + $0x10] sm:$0xff] %vm162, %v160
  %166 = vst.msk [vmem:[%s3 + $0x18] sm:$0xff] %vm162, %v161
  // Predicated region
  $region14: #{deeplab_forward.13} parent=0 // pred_check
    _
  $region15: #{deeplab_forward.13} parent=0 // pred_check_branch
    %168 = sbr.rel (0) target = $region17
  $region16: #{deeplab_forward.13} parent=0 // pred_region
    _
  $region17: #{deeplab_forward.13} parent=0 // pred_fallthru
    _
  // Predicated region
  $region18: #{deeplab_forward.13} parent=0 // pred_check
    _
  $region19: #{deeplab_forward.13} parent=0 // pred_check_branch
    %170 = sbr.rel (0) target = $region21
  $region20: #{deeplab_forward.13} parent=0 // pred_region
    _
  $region21: #{deeplab_forward.13} parent=0 // pred_fallthru
    _

// kernel: deeplab_forward.14
$region0: #{deeplab_forward.14}
  #allocation0 [shape = 'u32[]', space=smem, size = 0x4, offset = 0x4, fixed_abs, tag = 'smem constant byte address 0x4 - core index']
  #allocation1 [shape = 'u32[72,128]{1,0:T(1,128)}', space=vmem, size = 0x9000, scoped, tag = 'internal scratch']
  %s0 = inlined_call_operand.vmem [shape: bf16[16,288], index: 0, kind: input, shape index: {}]
  %s1 = inlined_call_operand.vmem [shape: bf16[288,32], index: 1, kind: input, shape index: {}]
  %s2 = inlined_call_operand.vmem [shape: f32[1,32], index: 2, kind: input, shape index: {}]
  %s3 = inlined_call_operand.vmem [shape: f32[16,32], index: 3, kind: output, shape index: {}]
  %s4 = sld [smem:[#allocation0]]
  $region22: #{deeplab_forward.14} parent=0
    _
  %s6 = ssub.s32 1, %s4
  %s7 = scalar_select 0, %s6, %s4
  // Predicated region
  $region2: #{deeplab_forward.14} parent=0 // pred_check
    _
  $region3: #{deeplab_forward.14} parent=0 // pred_check_branch
    %9 = sbr.rel (0) target = $region5
  $region4: #{deeplab_forward.14} parent=0 // pred_region
    _
  $region5: #{deeplab_forward.14} parent=0 // pred_fallthru
    _
  // Predicated region
  $region6: #{deeplab_forward.14} parent=0 // pred_check
    _
  $region7: #{deeplab_forward.14} parent=0 // pred_check_branch
    %11 = sbr.rel (0) target = $region9
  $region8: #{deeplab_forward.14} parent=0 // pred_region
    _
  $region9: #{deeplab_forward.14} parent=0 // pred_fallthru
    _
  // Predicated region
  $region10: #{deeplab_forward.14} parent=0 // pred_check
    _
  $region11: #{deeplab_forward.14} parent=0 // pred_check_branch
    %13 = sbr.rel (0) target = $region13
  $region12: #{deeplab_forward.14} parent=0 // pred_region
    _
  $region13: #{deeplab_forward.14} parent=0 // pred_fallthru
    _
  %v15 = vld [vmem:[%s0] sm:$0xff]
  %v16 = vld [vmem:[%s0 + $0x8] sm:$0xf]
  %v17 = vld [vmem:[%s0 + $0xc] sm:$0xff]
  %v18 = vld [vmem:[%s0 + $0x14] sm:$0xf]
  %v19 = vld [vmem:[%s1] sm:$0xf]
  %v20 = vld [vmem:[%s1 + $0x4] sm:$0xf]
  %v21 = vld [vmem:[%s1 + $0x8] sm:$0xf]
  %v22 = vld [vmem:[%s1 + $0xc] sm:$0xf]
  %v23 = vld [vmem:[%s1 + $0x10] sm:$0xf]
  %v24 = vld [vmem:[%s1 + $0x14] sm:$0xf]
  %v25 = vld [vmem:[%s1 + $0x18] sm:$0xf]
  %v26 = vld [vmem:[%s1 + $0x1c] sm:$0xf]
  %v27 = vld [vmem:[%s1 + $0x20] sm:$0xf]
  %v28 = vld [vmem:[%s1 + $0x24] sm:$0xf]
  %v29 = vld [vmem:[%s1 + $0x28] sm:$0xf]
  %v30 = vld [vmem:[%s1 + $0x2c] sm:$0xf]
  %v31 = vld [vmem:[%s1 + $0x30] sm:$0xf]
  %v32 = vld [vmem:[%s1 + $0x34] sm:$0xf]
  %v33 = vld [vmem:[%s1 + $0x38] sm:$0xf]
  %v34 = vld [vmem:[%s1 + $0x3c] sm:$0xf]
  %v35 = vld [vmem:[%s1 + $0x40] sm:$0xf]
  %v36 = vld [vmem:[%s1 + $0x44] sm:$0xf]
  %v37 = vld [vmem:[%s1 + $0x48] sm:$0xf]
  %v38 = vld [vmem:[%s1 + $0x4c] sm:$0xf]
  %v39 = vld [vmem:[%s1 + $0x50] sm:$0xf]
  %v40 = vld [vmem:[%s1 + $0x54] sm:$0xf]
  %v41 = vld [vmem:[%s1 + $0x58] sm:$0xf]
  %v42 = vld [vmem:[%s1 + $0x5c] sm:$0xf]
  %v43 = vld [vmem:[%s1 + $0x60] sm:$0xf]
  %v44 = vld [vmem:[%s1 + $0x64] sm:$0xf]
  %v45 = vld [vmem:[%s1 + $0x68] sm:$0xf]
  %v46 = vld [vmem:[%s1 + $0x6c] sm:$0xf]
  %v47 = vld [vmem:[%s1 + $0x70] sm:$0xf]
  %v48 = vld [vmem:[%s1 + $0x74] sm:$0xf]
  %v49 = vld [vmem:[%s1 + $0x78] sm:$0xf]
  %v50 = vld [vmem:[%s1 + $0x7c] sm:$0xf]
  %v51 = vld [vmem:[%s1 + $0x80] sm:$0xf]
  %v52 = vld [vmem:[%s1 + $0x84] sm:$0xf]
  %v53 = vld [vmem:[%s1 + $0x88] sm:$0xf]
  %v54 = vld [vmem:[%s1 + $0x8c] sm:$0xf]
  %v55 = vld [vmem:[%s2] sm:$0x1]
  %v57 = vperm.slane %v55, 0
  %v63 = vunpack.c.l.b16 %v15
  %v64 = vunpack.c.h.b16 %v15
  %v65 = vunpack.c.l.b16 %v16
  %v66 = vunpack.c.l.b16 %v17
  %v67 = vunpack.c.h.b16 %v17
  %v68 = vunpack.c.l.b16 %v18
  %v69 = vpack.c.b16 %v66, %v63
  %v70 = vpack.c.b16 %v67, %v64
  %v71 = vpack.c.b16 %v68, %v65
  %v110 = vunpack.c.l.b16 %v19
  %v111 = vunpack.c.l.b16 %v20
  %v112 = vunpack.c.l.b16 %v21
  %v113 = vunpack.c.l.b16 %v22
  %v114 = vunpack.c.l.b16 %v23
  %v115 = vunpack.c.l.b16 %v24
  %v116 = vunpack.c.l.b16 %v25
  %v117 = vunpack.c.l.b16 %v26
  %v118 = vunpack.c.l.b16 %v27
  %v119 = vunpack.c.l.b16 %v28
  %v120 = vunpack.c.l.b16 %v29
  %v121 = vunpack.c.l.b16 %v30
  %v122 = vunpack.c.l.b16 %v31
  %v123 = vunpack.c.l.b16 %v32
  %v124 = vunpack.c.l.b16 %v33
  %v125 = vunpack.c.l.b16 %v34
  %v126 = vunpack.c.l.b16 %v35
  %v127 = vunpack.c.l.b16 %v36
  %v128 = vunpack.c.l.b16 %v37
  %v129 = vunpack.c.l.b16 %v38
  %v130 = vunpack.c.l.b16 %v39
  %v131 = vunpack.c.l.b16 %v40
  %v132 = vunpack.c.l.b16 %v41
  %v133 = vunpack.c.l.b16 %v42
  %v134 = vunpack.c.l.b16 %v43
  %v135 = vunpack.c.l.b16 %v44
  %v136 = vunpack.c.l.b16 %v45
  %v137 = vunpack.c.l.b16 %v46
  %v138 = vunpack.c.l.b16 %v47
  %v139 = vunpack.c.l.b16 %v48
  %v140 = vunpack.c.l.b16 %v49
  %v141 = vunpack.c.l.b16 %v50
  %v142 = vunpack.c.l.b16 %v51
  %v143 = vunpack.c.l.b16 %v52
  %v144 = vunpack.c.l.b16 %v53
  %v145 = vunpack.c.l.b16 %v54
  %v146 = vpack.c.b16 %v111, %v110
  %v147 = vpack.c.b16 %v113, %v112
  %v148 = vpack.c.b16 %v115, %v114
  %v149 = vpack.c.b16 %v117, %v116
  %v150 = vpack.c.b16 %v119, %v118
  %v151 = vpack.c.b16 %v121, %v120
  %v152 = vpack.c.b16 %v123, %v122
  %v153 = vpack.c.b16 %v125, %v124
  %v154 = vpack.c.b16 %v127, %v126
  %v155 = vpack.c.b16 %v129, %v128
  %v156 = vpack.c.b16 %v131, %v130
  %v157 = vpack.c.b16 %v133, %v132
  %v158 = vpack.c.b16 %v135, %v134
  %v159 = vpack.c.b16 %v137, %v136
  %v160 = vpack.c.b16 %v139, %v138
  %v161 = vpack.c.b16 %v141, %v140
  %v162 = vpack.c.b16 %v143, %v142
  %v163 = vpack.c.b16 %v145, %v144
  %vm182 = vcmask 261120
  %v184 = vsel %vm182, %v71, 0
  %186 = vmatpush.bf16.msra.mxu0 %v153
  %187 = vmatpush.bf16.msra.mxu0 %v152
  %188 = vmatpush.bf16.msra.mxu0 %v151
  %189 = vmatpush.bf16.msra.mxu0 %v150
  %190 = vmatpush.bf16.msra.mxu0 %v149
  %191 = vmatpush.bf16.msra.mxu0 %v148
  %192 = vmatpush.bf16.msra.mxu0 %v147
  %193 = vmatpush.bf16.msra.mxu0 %v146
  %194 = vmatmul.bf16.gmra.mxu0 %v69
  %v195 = vpop.f32.mrf.mxu0
  %v196 = vadd.f32 %v57, %v195
  %v197 = vpop.f32.mrf.mxu0
  %v198 = vadd.f32 %v57, %v197
  %199 = vdwg.mxu0
  %200 = vmatpush.bf16.msra.mxu0 %v161
  %201 = vmatpush.bf16.msra.mxu0 %v160
  %202 = vmatpush.bf16.msra.mxu0 %v159
  %203 = vmatpush.bf16.msra.mxu0 %v158
  %204 = vmatpush.bf16.msra.mxu0 %v157
  %205 = vmatpush.bf16.msra.mxu0 %v156
  %206 = vmatpush.bf16.msra.mxu0 %v155
  %207 = vmatpush.bf16.msra.mxu0 %v154
  %208 = vmatmul.bf16.gmra.mxu0 %v70
  %v209 = vpop.f32.mrf.mxu0
  %v210 = vadd.f32 %v196, %v209
  %v211 = vpop.f32.mrf.mxu0
  %v212 = vadd.f32 %v198, %v211
  %213 = vdwg.mxu0
  %214 = vmatpush.bf16.msra.mxu0 0
  %215 = vmatpush.bf16.msra.mxu0 0
  %216 = vmatpush.bf16.msra.mxu0 0
  %217 = vmatpush.bf16.msra.mxu0 0
  %218 = vmatpush.bf16.msra.mxu0 0
  %219 = vmatpush.bf16.msra.mxu0 0
  %220 = vmatpush.bf16.msra.mxu0 %v163
  %221 = vmatpush.bf16.msra.mxu0 %v162
  %222 = vmatmul.bf16.gmra.mxu0 %v184
  %v223 = vpop.f32.mrf.mxu0
  %v224 = vadd.f32 %v210, %v223
  %v225 = vpop.f32.mrf.mxu0
  %v226 = vadd.f32 %v212, %v225
  %227 = vdwg.mxu0
  %v228 = vmax.f32 %v224, 0.0
  %v229 = vmax.f32 %v226, 0.0
  %230 = vst.msk [vmem:[%s3] sm:$0xff] %vm182, %v228
  %231 = vst.msk [vmem:[%s3 + $0x8] sm:$0xff] %vm182, %v229
  // Predicated region
  $region14: #{deeplab_forward.14} parent=0 // pred_check
    _
  $region15: #{deeplab_forward.14} parent=0 // pred_check_branch
    %233 = sbr.rel (0) target = $region17
  $region16: #{deeplab_forward.14} parent=0 // pred_region
    _
  $region17: #{deeplab_forward.14} parent=0 // pred_fallthru
    _
  // Predicated region
  $region18: #{deeplab_forward.14} parent=0 // pred_check
    _
  $region19: #{deeplab_forward.14} parent=0 // pred_check_branch
    %235 = sbr.rel (0) target = $region21
  $region20: #{deeplab_forward.14} parent=0 // pred_region
    _
  $region21: #{deeplab_forward.14} parent=0 // pred_fallthru
    _

// kernel: deeplab_forward.15
$region0: #{deeplab_forward.15}
  #allocation0 [shape = 'u32[]', space=smem, size = 0x4, offset = 0x4, fixed_abs, tag = 'smem constant byte address 0x4 - core index']
  #allocation1 [shape = 'u32[72,128]{1,0:T(1,128)}', space=vmem, size = 0x9000, scoped, tag = 'internal scratch']
  %s0 = inlined_call_operand.vmem [shape: bf16[16,32], index: 0, kind: input, shape index: {}]
  %s1 = inlined_call_operand.vmem [shape: bf16[32,128], index: 1, kind: input, shape index: {}]
  %s2 = inlined_call_operand.vmem [shape: f32[1,128], index: 2, kind: input, shape index: {}]
  %s3 = inlined_call_operand.vmem [shape: f32[16,128], index: 3, kind: output, shape index: {}]
  %s4 = sld [smem:[#allocation0]]
  $region22: #{deeplab_forward.15} parent=0
    _
  %s6 = ssub.s32 1, %s4
  %s7 = scalar_select 0, %s6, %s4
  // Predicated region
  $region2: #{deeplab_forward.15} parent=0 // pred_check
    _
  $region3: #{deeplab_forward.15} parent=0 // pred_check_branch
    %9 = sbr.rel (0) target = $region5
  $region4: #{deeplab_forward.15} parent=0 // pred_region
    _
  $region5: #{deeplab_forward.15} parent=0 // pred_fallthru
    _
  // Predicated region
  $region6: #{deeplab_forward.15} parent=0 // pred_check
    _
  $region7: #{deeplab_forward.15} parent=0 // pred_check_branch
    %11 = sbr.rel (0) target = $region9
  $region8: #{deeplab_forward.15} parent=0 // pred_region
    _
  $region9: #{deeplab_forward.15} parent=0 // pred_fallthru
    _
  // Predicated region
  $region10: #{deeplab_forward.15} parent=0 // pred_check
    _
  $region11: #{deeplab_forward.15} parent=0 // pred_check_branch
    %13 = sbr.rel (0) target = $region13
  $region12: #{deeplab_forward.15} parent=0 // pred_region
    _
  $region13: #{deeplab_forward.15} parent=0 // pred_fallthru
    _
  %v15 = vld [vmem:[%s0] sm:$0xf]
  %v16 = vld [vmem:[%s0 + $0x4] sm:$0xf]
  %v17 = vld [vmem:[%s1] sm:$0xf]
  %v18 = vld [vmem:[%s1 + $0x4] sm:$0xf]
  %v19 = vld [vmem:[%s1 + $0x8] sm:$0xf]
  %v20 = vld [vmem:[%s1 + $0xc] sm:$0xf]
  %v21 = vld [vmem:[%s2] sm:$0x1]
  %v23 = vperm.slane %v21, 0
  %v27 = vunpack.c.l.b16 %v15
  %v28 = vunpack.c.l.b16 %v16
  %v29 = vpack.c.b16 %v28, %v27
  %v34 = vunpack.c.l.b16 %v17
  %v35 = vunpack.c.l.b16 %v18
  %v36 = vunpack.c.l.b16 %v19
  %v37 = vunpack.c.l.b16 %v20
  %v38 = vpack.c.b16 %v35, %v34
  %v39 = vpack.c.b16 %v37, %v36
  %vm42 = vcmask 261120
  %v44 = vsel %vm42, %v29, 0
  %46 = vmatpush.bf16.msra.mxu0 0
  %47 = vmatpush.bf16.msra.mxu0 0
  %48 = vmatpush.bf16.msra.mxu0 0
  %49 = vmatpush.bf16.msra.mxu0 0
  %50 = vmatpush.bf16.msra.mxu0 0
  %51 = vmatpush.bf16.msra.mxu0 0
  %52 = vmatpush.bf16.msra.mxu0 %v39
  %53 = vmatpush.bf16.msra.mxu0 %v38
  %54 = vmatmul.bf16.gmra.mxu0 %v44
  %v55 = vpop.f32.mrf.mxu0
  %v56 = vadd.f32 %v23, %v55
  %v57 = vpop.f32.mrf.mxu0
  %v58 = vadd.f32 %v23, %v57
  %59 = vdwg.mxu0
  %v60 = vmax.f32 %v56, 0.0
  %v61 = vmax.f32 %v58, 0.0
  %62 = vst [vmem:[%s3] sm:$0xff] %v60
  %63 = vst [vmem:[%s3 + $0x8] sm:$0xff] %v61
  // Predicated region
  $region14: #{deeplab_forward.15} parent=0 // pred_check
    _
  $region15: #{deeplab_forward.15} parent=0 // pred_check_branch
    %65 = sbr.rel (0) target = $region17
  $region16: #{deeplab_forward.15} parent=0 // pred_region
    _
  $region17: #{deeplab_forward.15} parent=0 // pred_fallthru
    _
  // Predicated region
  $region18: #{deeplab_forward.15} parent=0 // pred_check
    _
  $region19: #{deeplab_forward.15} parent=0 // pred_check_branch
    %67 = sbr.rel (0) target = $region21
  $region20: #{deeplab_forward.15} parent=0 // pred_region
    _
  $region21: #{deeplab_forward.15} parent=0 // pred_fallthru
    _

// kernel: deeplab_forward.16
$region0: #{deeplab_forward.16}
  #allocation0 [shape = 'u32[]', space=smem, size = 0x4, offset = 0x4, fixed_abs, tag = 'smem constant byte address 0x4 - core index']
  #allocation1 [shape = 'u32[72,128]{1,0:T(1,128)}', space=vmem, size = 0x9000, scoped, tag = 'internal scratch']
  %s0 = inlined_call_operand.vmem [shape: bf16[16,160], index: 0, kind: input, shape index: {}]
  %s1 = inlined_call_operand.vmem [shape: bf16[160,32], index: 1, kind: input, shape index: {}]
  %s2 = inlined_call_operand.vmem [shape: f32[1,32], index: 2, kind: input, shape index: {}]
  %s3 = inlined_call_operand.vmem [shape: f32[16,32], index: 3, kind: output, shape index: {}]
  %s4 = sld [smem:[#allocation0]]
  $region22: #{deeplab_forward.16} parent=0
    _
  %s6 = ssub.s32 1, %s4
  %s7 = scalar_select 0, %s6, %s4
  // Predicated region
  $region2: #{deeplab_forward.16} parent=0 // pred_check
    _
  $region3: #{deeplab_forward.16} parent=0 // pred_check_branch
    %9 = sbr.rel (0) target = $region5
  $region4: #{deeplab_forward.16} parent=0 // pred_region
    _
  $region5: #{deeplab_forward.16} parent=0 // pred_fallthru
    _
  // Predicated region
  $region6: #{deeplab_forward.16} parent=0 // pred_check
    _
  $region7: #{deeplab_forward.16} parent=0 // pred_check_branch
    %11 = sbr.rel (0) target = $region9
  $region8: #{deeplab_forward.16} parent=0 // pred_region
    _
  $region9: #{deeplab_forward.16} parent=0 // pred_fallthru
    _
  // Predicated region
  $region10: #{deeplab_forward.16} parent=0 // pred_check
    _
  $region11: #{deeplab_forward.16} parent=0 // pred_check_branch
    %13 = sbr.rel (0) target = $region13
  $region12: #{deeplab_forward.16} parent=0 // pred_region
    _
  $region13: #{deeplab_forward.16} parent=0 // pred_fallthru
    _
  %v15 = vld [vmem:[%s0] sm:$0xff]
  %v16 = vld [vmem:[%s0 + $0x8] sm:$0xff]
  %v17 = vld [vmem:[%s1] sm:$0xf]
  %v18 = vld [vmem:[%s1 + $0x4] sm:$0xf]
  %v19 = vld [vmem:[%s1 + $0x8] sm:$0xf]
  %v20 = vld [vmem:[%s1 + $0xc] sm:$0xf]
  %v21 = vld [vmem:[%s1 + $0x10] sm:$0xf]
  %v22 = vld [vmem:[%s1 + $0x14] sm:$0xf]
  %v23 = vld [vmem:[%s1 + $0x18] sm:$0xf]
  %v24 = vld [vmem:[%s1 + $0x1c] sm:$0xf]
  %v25 = vld [vmem:[%s1 + $0x20] sm:$0xf]
  %v26 = vld [vmem:[%s1 + $0x24] sm:$0xf]
  %v27 = vld [vmem:[%s1 + $0x28] sm:$0xf]
  %v28 = vld [vmem:[%s1 + $0x2c] sm:$0xf]
  %v29 = vld [vmem:[%s1 + $0x30] sm:$0xf]
  %v30 = vld [vmem:[%s1 + $0x34] sm:$0xf]
  %v31 = vld [vmem:[%s1 + $0x38] sm:$0xf]
  %v32 = vld [vmem:[%s1 + $0x3c] sm:$0xf]
  %v33 = vld [vmem:[%s1 + $0x40] sm:$0xf]
  %v34 = vld [vmem:[%s1 + $0x44] sm:$0xf]
  %v35 = vld [vmem:[%s1 + $0x48] sm:$0xf]
  %v36 = vld [vmem:[%s1 + $0x4c] sm:$0xf]
  %v37 = vld [vmem:[%s2] sm:$0x1]
  %v39 = vperm.slane %v37, 0
  %v43 = vunpack.c.l.b16 %v15
  %v44 = vunpack.c.h.b16 %v15
  %v45 = vunpack.c.l.b16 %v16
  %v46 = vunpack.c.h.b16 %v16
  %v47 = vpack.c.b16 %v45, %v43
  %v48 = vpack.c.b16 %v46, %v44
  %v70 = vunpack.c.l.b16 %v17
  %v71 = vunpack.c.l.b16 %v18
  %v72 = vunpack.c.l.b16 %v19
  %v73 = vunpack.c.l.b16 %v20
  %v74 = vunpack.c.l.b16 %v21
  %v75 = vunpack.c.l.b16 %v22
  %v76 = vunpack.c.l.b16 %v23
  %v77 = vunpack.c.l.b16 %v24
  %v78 = vunpack.c.l.b16 %v25
  %v79 = vunpack.c.l.b16 %v26
  %v80 = vunpack.c.l.b16 %v27
  %v81 = vunpack.c.l.b16 %v28
  %v82 = vunpack.c.l.b16 %v29
  %v83 = vunpack.c.l.b16 %v30
  %v84 = vunpack.c.l.b16 %v31
  %v85 = vunpack.c.l.b16 %v32
  %v86 = vunpack.c.l.b16 %v33
  %v87 = vunpack.c.l.b16 %v34
  %v88 = vunpack.c.l.b16 %v35
  %v89 = vunpack.c.l.b16 %v36
  %v90 = vpack.c.b16 %v71, %v70
  %v91 = vpack.c.b16 %v73, %v72
  %v92 = vpack.c.b16 %v75, %v74
  %v93 = vpack.c.b16 %v77, %v76
  %v94 = vpack.c.b16 %v79, %v78
  %v95 = vpack.c.b16 %v81, %v80
  %v96 = vpack.c.b16 %v83, %v82
  %v97 = vpack.c.b16 %v85, %v84
  %v98 = vpack.c.b16 %v87, %v86
  %v99 = vpack.c.b16 %v89, %v88
  %vm110 = vcmask 261120
  %v112 = vsel %vm110, %v48, 0
  %114 = vmatpush.bf16.msra.mxu0 %v97
  %115 = vmatpush.bf16.msra.mxu0 %v96
  %116 = vmatpush.bf16.msra.mxu0 %v95
  %117 = vmatpush.bf16.msra.mxu0 %v94
  %118 = vmatpush.bf16.msra.mxu0 %v93
  %119 = vmatpush.bf16.msra.mxu0 %v92
  %120 = vmatpush.bf16.msra.mxu0 %v91
  %121 = vmatpush.bf16.msra.mxu0 %v90
  %122 = vmatmul.bf16.gmra.mxu0 %v47
  %v123 = vpop.f32.mrf.mxu0
  %v124 = vadd.f32 %v39, %v123
  %v125 = vpop.f32.mrf.mxu0
  %v126 = vadd.f32 %v39, %v125
  %127 = vdwg.mxu0
  %128 = vmatpush.bf16.msra.mxu0 0
  %129 = vmatpush.bf16.msra.mxu0 0
  %130 = vmatpush.bf16.msra.mxu0 0
  %131 = vmatpush.bf16.msra.mxu0 0
  %132 = vmatpush.bf16.msra.mxu0 0
  %133 = vmatpush.bf16.msra.mxu0 0
  %134 = vmatpush.bf16.msra.mxu0 %v99
  %135 = vmatpush.bf16.msra.mxu0 %v98
  %136 = vmatmul.bf16.gmra.mxu0 %v112
  %v137 = vpop.f32.mrf.mxu0
  %v138 = vadd.f32 %v124, %v137
  %v139 = vpop.f32.mrf.mxu0
  %v140 = vadd.f32 %v126, %v139
  %141 = vdwg.mxu0
  %v142 = vmax.f32 %v138, 0.0
  %v143 = vmax.f32 %v140, 0.0
  %144 = vst.msk [vmem:[%s3] sm:$0xff] %vm110, %v142
  %145 = vst.msk [vmem:[%s3 + $0x8] sm:$0xff] %vm110, %v143
  // Predicated region
  $region14: #{deeplab_forward.16} parent=0 // pred_check
    _
  $region15: #{deeplab_forward.16} parent=0 // pred_check_branch
    %147 = sbr.rel (0) target = $region17
  $region16: #{deeplab_forward.16} parent=0 // pred_region
    _
  $region17: #{deeplab_forward.16} parent=0 // pred_fallthru
    _
  // Predicated region
  $region18: #{deeplab_forward.16} parent=0 // pred_check
    _
  $region19: #{deeplab_forward.16} parent=0 // pred_check_branch
    %149 = sbr.rel (0) target = $region21
  $region20: #{deeplab_forward.16} parent=0 // pred_region
    _
  $region21: #{deeplab_forward.16} parent=0 // pred_fallthru
    _

// kernel: deeplab_forward.18
$region0: #{deeplab_forward.18}
  #allocation0 [shape = 'u32[]', space=smem, size = 0x4, offset = 0x4, fixed_abs, tag = 'smem constant byte address 0x4 - core index']
  #allocation1 [shape = 'u32[72,128]{1,0:T(1,128)}', space=vmem, size = 0x9000, scoped, tag = 'internal scratch']
  %s0 = inlined_call_operand.vmem [shape: bf16[64,16], index: 0, kind: input, shape index: {}]
  %s1 = inlined_call_operand.vmem [shape: bf16[16,64], index: 1, kind: input, shape index: {}]
  %s2 = inlined_call_operand.vmem [shape: f32[1,64], index: 2, kind: input, shape index: {}]
  %s3 = inlined_call_operand.vmem [shape: f32[64,64], index: 3, kind: output, shape index: {}]
  %s4 = sld [smem:[#allocation0]]
  $region22: #{deeplab_forward.18} parent=0
    _
  %s6 = ssub.s32 1, %s4
  %s7 = scalar_select 0, %s6, %s4
  // Predicated region
  $region2: #{deeplab_forward.18} parent=0 // pred_check
    _
  $region3: #{deeplab_forward.18} parent=0 // pred_check_branch
    %9 = sbr.rel (0) target = $region5
  $region4: #{deeplab_forward.18} parent=0 // pred_region
    _
  $region5: #{deeplab_forward.18} parent=0 // pred_fallthru
    _
  // Predicated region
  $region6: #{deeplab_forward.18} parent=0 // pred_check
    _
  $region7: #{deeplab_forward.18} parent=0 // pred_check_branch
    %11 = sbr.rel (0) target = $region9
  $region8: #{deeplab_forward.18} parent=0 // pred_region
    _
  $region9: #{deeplab_forward.18} parent=0 // pred_fallthru
    _
  // Predicated region
  $region10: #{deeplab_forward.18} parent=0 // pred_check
    _
  $region11: #{deeplab_forward.18} parent=0 // pred_check_branch
    %13 = sbr.rel (0) target = $region13
  $region12: #{deeplab_forward.18} parent=0 // pred_region
    _
  $region13: #{deeplab_forward.18} parent=0 // pred_fallthru
    _
  %v15 = vld [vmem:[%s0] sm:$0xf]
  %v16 = vld [vmem:[%s0 + $0x4] sm:$0xf]
  %v17 = vld [vmem:[%s0 + $0x8] sm:$0xf]
  %v18 = vld [vmem:[%s0 + $0xc] sm:$0xf]
  %v19 = vld [vmem:[%s0 + $0x10] sm:$0xf]
  %v20 = vld [vmem:[%s0 + $0x14] sm:$0xf]
  %v21 = vld [vmem:[%s0 + $0x18] sm:$0xf]
  %v22 = vld [vmem:[%s0 + $0x1c] sm:$0xf]
  %v23 = vld [vmem:[%s1] sm:$0xf]
  %v24 = vld [vmem:[%s1 + $0x4] sm:$0xf]
  %v25 = vld [vmem:[%s2] sm:$0x1]
  %v27 = vperm.slane %v25, 0
  %v37 = vunpack.c.l.b16 %v15
  %v38 = vunpack.c.l.b16 %v16
  %v39 = vunpack.c.l.b16 %v17
  %v40 = vunpack.c.l.b16 %v18
  %v41 = vunpack.c.l.b16 %v19
  %v42 = vunpack.c.l.b16 %v20
  %v43 = vunpack.c.l.b16 %v21
  %v44 = vunpack.c.l.b16 %v22
  %v45 = vpack.c.b16 %v38, %v37
  %v46 = vpack.c.b16 %v40, %v39
  %v47 = vpack.c.b16 %v42, %v41
  %v48 = vpack.c.b16 %v44, %v43
  %v51 = vunpack.c.l.b16 %v23
  %v52 = vunpack.c.l.b16 %v24
  %v53 = vpack.c.b16 %v52, %v51
  %vm55 = vcmask 130048
  %v57 = vsel %vm55, %v45, 0
  %v60 = vsel %vm55, %v46, 0
  %v63 = vsel %vm55, %v47, 0
  %v66 = vsel %vm55, %v48, 0
  %68 = vmatpush.bf16.msra.mxu0 0
  %69 = vmatpush.bf16.msra.mxu0 0
  %70 = vmatpush.bf16.msra.mxu0 0
  %71 = vmatpush.bf16.msra.mxu0 0
  %72 = vmatpush.bf16.msra.mxu0 0
  %73 = vmatpush.bf16.msra.mxu0 0
  %74 = vmatpush.bf16.msra.mxu0 0
  %75 = vmatpush.bf16.msra.mxu0 %v53
  %76 = vmatmul.bf16.gmra.mxu0 %v57
  %v77 = vpop.f32.mrf.mxu0
  %v78 = vadd.f32 %v27, %v77
  %v79 = vpop.f32.mrf.mxu0
  %v80 = vadd.f32 %v27, %v79
  %81 = vmatmul.bf16.gmra.mxu0 %v60
  %v82 = vpop.f32.mrf.mxu0
  %v83 = vadd.f32 %v27, %v82
  %v84 = vpop.f32.mrf.mxu0
  %v85 = vadd.f32 %v27, %v84
  %86 = vmatmul.bf16.gmra.mxu0 %v63
  %v87 = vpop.f32.mrf.mxu0
  %v88 = vadd.f32 %v27, %v87
  %v89 = vpop.f32.mrf.mxu0
  %v90 = vadd.f32 %v27, %v89
  %91 = vmatmul.bf16.gmra.mxu0 %v66
  %v92 = vpop.f32.mrf.mxu0
  %v93 = vadd.f32 %v27, %v92
  %v94 = vpop.f32.mrf.mxu0
  %v95 = vadd.f32 %v27, %v94
  %96 = vdwg.mxu0
  %vm97 = vcmask 523264
  %98 = vst.msk [vmem:[%s3] sm:$0xff] %vm97, %v78
  %99 = vst.msk [vmem:[%s3 + $0x8] sm:$0xff] %vm97, %v80
  %100 = vst.msk [vmem:[%s3 + $0x10] sm:$0xff] %vm97, %v83
  %101 = vst.msk [vmem:[%s3 + $0x18] sm:$0xff] %vm97, %v85
  %102 = vst.msk [vmem:[%s3 + $0x20] sm:$0xff] %vm97, %v88
  %103 = vst.msk [vmem:[%s3 + $0x28] sm:$0xff] %vm97, %v90
  %104 = vst.msk [vmem:[%s3 + $0x30] sm:$0xff] %vm97, %v93
  %105 = vst.msk [vmem:[%s3 + $0x38] sm:$0xff] %vm97, %v95
  // Predicated region
  $region14: #{deeplab_forward.18} parent=0 // pred_check
    _
  $region15: #{deeplab_forward.18} parent=0 // pred_check_branch
    %107 = sbr.rel (0) target = $region17
  $region16: #{deeplab_forward.18} parent=0 // pred_region
    _
  $region17: #{deeplab_forward.18} parent=0 // pred_fallthru
    _
  // Predicated region
  $region18: #{deeplab_forward.18} parent=0 // pred_check
    _
  $region19: #{deeplab_forward.18} parent=0 // pred_check_branch
    %109 = sbr.rel (0) target = $region21
  $region20: #{deeplab_forward.18} parent=0 // pred_region
    _
  $region21: #{deeplab_forward.18} parent=0 // pred_fallthru
    _

// kernel: deeplab_forward.17
$region0: #{deeplab_forward.17}
  #allocation0 [shape = 'u32[]', space=smem, size = 0x4, offset = 0x4, fixed_abs, tag = 'smem constant byte address 0x4 - core index']
  #allocation1 [shape = 'u32[72,128]{1,0:T(1,128)}', space=vmem, size = 0x9000, scoped, tag = 'internal scratch']
  %s0 = inlined_call_operand.vmem [shape: bf16[128,16], index: 0, kind: input, shape index: {}]
  %s1 = inlined_call_operand.vmem [shape: bf16[16,8], index: 1, kind: input, shape index: {}]
  %s2 = inlined_call_operand.vmem [shape: f32[1,8], index: 2, kind: input, shape index: {}]
  %s3 = inlined_call_operand.vmem [shape: f32[128,8], index: 3, kind: output, shape index: {}]
  %s4 = sld [smem:[#allocation0]]
  $region45: #{deeplab_forward.17} parent=0
    _
  %s6 = ssub.s32 1, %s4
  %s7 = scalar_select 0, %s6, %s4
  loop: start=0, step=1, limit=4
  $region2: #{deeplab_forward.17} parent=0 // loop_pre_header
    _
  $region3: #{deeplab_forward.17} parent=0 // loop_header
    %s9 = sphi 0, %s13
    %p10 = scmp.ge.s32.totalorder %s9, 4
    %s16 = sphi 0, %s28
    %s17 = sphi 0, %s24
    %s18 = sphi 0, %s16
    %s19 = sphi 0, %s17
    %s20 = sphi 0, %s18
    %s21 = sphi 0, %s19
    %s31 = sphi 0, %s33
    %s34 = sphi 0, %s31
    %s35 = sphi 0, %s34
    %s51 = sphi 0, %s35
    %s57 = sphi 0, %s59
    %s60 = sphi 0, %s57
    %s61 = sphi 0, %s60
    %s77 = sphi 0, %s61
    %s83 = sphi 0, %s85
    %s86 = sphi 0, %s83
    %s87 = sphi 0, %s86
    %s103 = sphi 0, %s87
    %s111 = sphi 0, %s113
    %s114 = sphi 0, %s111
    %s115 = sphi 0, %s114
    %s131 = sphi 0, %s115
  $region4: #{deeplab_forward.17} parent=0 // loop_header_branch
    %12 = sbr.rel (%p10) target = $region8
  $region5: #{deeplab_forward.17} parent=0 // loop_body
    %s14 = ssub.s32 %s9, 1
    %s15 = ssub.s32 %s9, 2
    %s22 = sadd.s32 1, %s17
    %p23 = scmp.ge.s32.totalorder %s22, 1
    %s24 = scalar_select %p23, 0, %s22
    %s25 = sadd.s32 1, %s16
    %s26 = scalar_select %p23, %s25, %s16
    %p27 = scmp.ge.s32.totalorder %s26, 2
    %s28 = scalar_select %p27, 0, %s26
    %s29 = ssub.s32 %s16, %s28
    %p30 = scmp.eq.s32.totalorder %s29, 0
    %s32 = sadd.s32 %s31, 1
    %s33 = scalar_select %p30, %s31, %s32
    %p36 = pneg %p30
    %p37 = scmp.eq.s32.totalorder %s9, 1
    %p38 = por %p36, %p37
    %p39 = scmp.ne.s32.totalorder %s31, %s34
    %p40 = scmp.eq.s32.totalorder %s9, 0
    %p41 = por %p39, %p40
    %p42 = scmp.ne.s32.totalorder %s31, %s34
    %p43 = scmp.eq.s32.totalorder %s14, 1
    %p44 = por %p42, %p43
    %p45 = scmp.ne.s32.totalorder %s34, %s35
    %p46 = scmp.eq.s32.totalorder %s14, 0
    %p47 = por %p45, %p46
    %p48 = scmp.ne.s32.totalorder %s34, %s35
    %p49 = scmp.eq.s32.totalorder %s15, 1
    %p50 = por %p48, %p49
    %p52 = scmp.ne.s32.totalorder %s35, %s51
    %p53 = scmp.eq.s32.totalorder %s15, 0
    %p54 = por %p52, %p53
    %s55 = ssub.s32 %s17, %s24
    %p56 = scmp.eq.s32.totalorder %s55, 0
    %s58 = sadd.s32 %s57, 1
    %s59 = scalar_select %p56, %s57, %s58
    %p62 = pneg %p56
    %p63 = scmp.eq.s32.totalorder %s9, 1
    %p64 = por %p62, %p63
    %p65 = scmp.ne.s32.totalorder %s57, %s60
    %p66 = scmp.eq.s32.totalorder %s9, 0
    %p67 = por %p65, %p66
    %p68 = scmp.ne.s32.totalorder %s57, %s60
    %p69 = scmp.eq.s32.totalorder %s14, 1
    %p70 = por %p68, %p69
    %p71 = scmp.ne.s32.totalorder %s60, %s61
    %p72 = scmp.eq.s32.totalorder %s14, 0
    %p73 = por %p71, %p72
    %p74 = scmp.ne.s32.totalorder %s60, %s61
    %p75 = scmp.eq.s32.totalorder %s15, 1
    %p76 = por %p74, %p75
    %p78 = scmp.ne.s32.totalorder %s61, %s77
    %p79 = scmp.eq.s32.totalorder %s15, 0
    %p80 = por %p78, %p79
    %s81 = ssub.s32 %s17, %s24
    %p82 = scmp.eq.s32.totalorder %s81, 0
    %s84 = sadd.s32 %s83, 1
    %s85 = scalar_select %p82, %s83, %s84
    %p88 = pneg %p82
    %p89 = scmp.eq.s32.totalorder %s9, 1
    %p90 = por %p88, %p89
    %p91 = scmp.ne.s32.totalorder %s83, %s86
    %p92 = scmp.eq.s32.totalorder %s9, 0
    %p93 = por %p91, %p92
    %p94 = scmp.ne.s32.totalorder %s83, %s86
    %p95 = scmp.eq.s32.totalorder %s14, 1
    %p96 = por %p94, %p95
    %p97 = scmp.ne.s32.totalorder %s86, %s87
    %p98 = scmp.eq.s32.totalorder %s14, 0
    %p99 = por %p97, %p98
    %p100 = scmp.ne.s32.totalorder %s86, %s87
    %p101 = scmp.eq.s32.totalorder %s15, 1
    %p102 = por %p100, %p101
    %p104 = scmp.ne.s32.totalorder %s87, %s103
    %p105 = scmp.eq.s32.totalorder %s15, 0
    %p106 = por %p104, %p105
    %s107 = ssub.s32 %s16, %s28
    %s108 = ssub.s32 %s17, %s24
    %s109 = sor.u32 %s107, %s108
    %p110 = scmp.eq.s32.totalorder %s109, 0
    %s112 = sadd.s32 %s111, 1
    %s113 = scalar_select %p110, %s111, %s112
    %p116 = pneg %p110
    %p117 = scmp.eq.s32.totalorder %s9, 1
    %p118 = por %p116, %p117
    %p119 = scmp.ne.s32.totalorder %s111, %s114
    %p120 = scmp.eq.s32.totalorder %s9, 0
    %p121 = por %p119, %p120
    %p122 = scmp.ne.s32.totalorder %s111, %s114
    %p123 = scmp.eq.s32.totalorder %s14, 1
    %p124 = por %p122, %p123
    %p125 = scmp.ne.s32.totalorder %s114, %s115
    %p126 = scmp.eq.s32.totalorder %s14, 0
    %p127 = por %p125, %p126
    %p128 = scmp.ne.s32.totalorder %s114, %s115
    %p129 = scmp.eq.s32.totalorder %s15, 1
    %p130 = por %p128, %p129
    %p132 = scmp.ne.s32.totalorder %s115, %s131
    %p133 = scmp.eq.s32.totalorder %s15, 0
    %p134 = por %p132, %p133
    %p135 = scmp.le.s32.totalorder 1, %s9
    %p136 = scmp.lt.s32.totalorder %s9, 3
    %p137 = pnand %p135, %p136
    %p138 = pneg %p137
    // Predicated region
    $region9: #{deeplab_forward.17} parent=5 // pred_check
      _
    $region10: #{deeplab_forward.17} parent=5 // pred_check_branch
      %140 = sbr.rel (%p137) target = $region12
    $region11: #{deeplab_forward.17} parent=5 // pred_region
      %s141 = ssub.s32 %s9, 1
      // Predicated region
      $region13: #{deeplab_forward.17} parent=11 // pred_check
        %p142 = pneg %p73
      $region14: #{deeplab_forward.17} parent=11 // pred_check_branch
        %144 = sbr.rel (%p142) target = $region16
      $region15: #{deeplab_forward.17} parent=11 // pred_region
        %p145 = scmp.lt.s32.totalorder %s19, 0
        %s146 = scalar_select %p145, %s19, 0
        %s147 = smul.addr %s146, 4
        %s148 = scalar_lea.vmem %s1, %s147
      $region16: #{deeplab_forward.17} parent=11 // pred_fallthru
        _
      // Predicated region
      $region17: #{deeplab_forward.17} parent=11 // pred_check
        %p149 = pneg %p99
      $region18: #{deeplab_forward.17} parent=11 // pred_check_branch
        %151 = sbr.rel (%p149) target = $region20
      $region19: #{deeplab_forward.17} parent=11 // pred_region
        %p152 = scmp.lt.s32.totalorder %s19, 0
        %s153 = scalar_select %p152, %s19, 0
        %s154 = scalar_lea.vmem %s2, %s153
      $region20: #{deeplab_forward.17} parent=11 // pred_fallthru
        _
    $region12: #{deeplab_forward.17} parent=5 // pred_fallthru
      _
    %p155 = scmp.lt.s32.totalorder %s9, 2
    // Predicated region
    $region21: #{deeplab_forward.17} parent=5 // pred_check
      %p156 = pneg %p155
    $region22: #{deeplab_forward.17} parent=5 // pred_check_branch
      %158 = sbr.rel (%p156) target = $region24
    $region23: #{deeplab_forward.17} parent=5 // pred_region
      // Predicated region
      $region25: #{deeplab_forward.17} parent=23 // pred_check
        %p159 = pneg %p41
      $region26: #{deeplab_forward.17} parent=23 // pred_check_branch
        %161 = sbr.rel (%p159) target = $region28
      $region27: #{deeplab_forward.17} parent=23 // pred_region
        %s162 = smul.u32 8, %s16
        %p163 = scmp.lt.s32.totalorder %s162, 15
        %s164 = scalar_select %p163, %s162, 15
        %s165 = smul.addr %s164, 4
        %s166 = scalar_lea.vmem %s0, %s165
        %s167 = smul.u32 8, %s16
      $region28: #{deeplab_forward.17} parent=23 // pred_fallthru
        _
    $region24: #{deeplab_forward.17} parent=5 // pred_fallthru
      _
    %p168 = scmp.le.s32.totalorder 1, %s9
    %p169 = scmp.lt.s32.totalorder %s9, 3
    %p170 = pnand %p168, %p169
    %p171 = pneg %p170
    // Predicated region
    $region29: #{deeplab_forward.17} parent=5 // pred_check
      _
    $region30: #{deeplab_forward.17} parent=5 // pred_check_branch
      %173 = sbr.rel (%p170) target = $region32
    $region31: #{deeplab_forward.17} parent=5 // pred_region
      %s174 = ssub.s32 %s9, 1
      %s175 = smul.u32 8, %s18
      %p176 = scmp.lt.s32.totalorder %s175, 15
      %s177 = scalar_select %p176, %s175, 15
      %s178 = smul.addr %s177, 4
      %s179 = scalar_lea.vmem %s0, %s178
      %p180 = pneg %p47
      %p181 = pneg %p44
      %p182 = scmp.lt.s32.totalorder %s19, 0
      %s183 = scalar_select %p182, %s19, 0
      %s184 = smul.addr %s183, 4
      %s185 = scalar_lea.vmem %s1, %s184
      %p186 = pneg %p73
      %p187 = pneg %p70
      %p188 = scmp.lt.s32.totalorder %s19, 0
      %s189 = scalar_select %p188, %s19, 0
      %s190 = scalar_lea.vmem %s2, %s189
      %p191 = pneg %p99
      %p192 = pneg %p96
      %p193 = pneg %p127
      %p194 = pneg %p124
      %s195 = smul.u32 8, %s18
      %p196 = scmp.lt.s32.totalorder %s195, 15
      %s197 = scalar_select %p196, %s195, 15
      %p198 = scmp.lt.s32.totalorder %s19, 0
      %s199 = scalar_select %p198, %s19, 0
      %s200 = sadd.s32 %s199, %s197
      %s201 = smul.addr %s200, 8
      %s202 = scalar_lea.vmem %s3, %s201
      %s203 = smul.u32 8, %s18
      %p204 = scmp.lt.s32.totalorder %s203, 15
      %s205 = scalar_select %p204, %s203, 15
      %s206 = smul.addr %s205, 4
      %s207 = scalar_lea.vmem %s0, %s206
      %s208 = smul.u32 8, %s18
      %p209 = scmp.lt.s32.totalorder %s19, 0
      %s210 = scalar_select %p209, %s19, 0
      %s211 = smul.addr %s210, 4
      %s212 = scalar_lea.vmem %s1, %s211
      %p213 = scmp.lt.s32.totalorder %s19, 0
      %s214 = scalar_select %p213, %s19, 0
      %s215 = scalar_lea.vmem %s2, %s214
      %s216 = smul.u32 8, %s18
      %p217 = scmp.lt.s32.totalorder %s216, 15
      %s218 = scalar_select %p217, %s216, 15
      %p219 = scmp.lt.s32.totalorder %s19, 0
      %s220 = scalar_select %p219, %s19, 0
      %s221 = sadd.s32 %s220, %s218
      %s222 = smul.addr %s221, 8
      %s223 = scalar_lea.vmem %s3, %s222
      %s224 = smul.u32 8, %s18
      %v226 = vld [vmem:[%s207] sm:$0xf]
      %v227 = vld [vmem:[%s207 + $0x4] sm:$0xf]
      %v228 = vld [vmem:[%s207 + $0x8] sm:$0xf]
      %v229 = vld [vmem:[%s207 + $0xc] sm:$0xf]
      %v230 = vld [vmem:[%s207 + $0x10] sm:$0xf]
      %v231 = vld [vmem:[%s207 + $0x14] sm:$0xf]
      %v232 = vld [vmem:[%s207 + $0x18] sm:$0xf]
      %v233 = vld [vmem:[%s207 + $0x1c] sm:$0xf]
      %v234 = vld [vmem:[%s212] sm:$0xf]
      %v235 = vld [vmem:[%s212 + $0x4] sm:$0xf]
      %v236 = vld [vmem:[%s215] sm:$0x1]
      %v238 = vperm.slane %v236, 0
      %v248 = vunpack.c.l.b16 %v226
      %v249 = vunpack.c.l.b16 %v227
      %v250 = vunpack.c.l.b16 %v228
      %v251 = vunpack.c.l.b16 %v229
      %v252 = vunpack.c.l.b16 %v230
      %v253 = vunpack.c.l.b16 %v231
      %v254 = vunpack.c.l.b16 %v232
      %v255 = vunpack.c.l.b16 %v233
      %v256 = vpack.c.b16 %v249, %v248
      %v257 = vpack.c.b16 %v251, %v250
      %v258 = vpack.c.b16 %v253, %v252
      %v259 = vpack.c.b16 %v255, %v254
      %v262 = vunpack.c.l.b16 %v234
      %v263 = vunpack.c.l.b16 %v235
      %v264 = vpack.c.b16 %v263, %v262
      %vm266 = vcmask 130048
      %v268 = vsel %vm266, %v256, 0
      %v271 = vsel %vm266, %v257, 0
      %v274 = vsel %vm266, %v258, 0
      %v277 = vsel %vm266, %v259, 0
      %279 = vmatpush.bf16.msra.mxu0 0
      %280 = vmatpush.bf16.msra.mxu0 0
      %281 = vmatpush.bf16.msra.mxu0 0
      %282 = vmatpush.bf16.msra.mxu0 0
      %283 = vmatpush.bf16.msra.mxu0 0
      %284 = vmatpush.bf16.msra.mxu0 0
      %285 = vmatpush.bf16.msra.mxu0 0
      %286 = vmatpush.bf16.msra.mxu0 %v264
      %287 = vmatmul.bf16.gmra.mxu0 %v268
      %v288 = vpop.f32.mrf.mxu0
      %v289 = vadd.f32 %v238, %v288
      %v290 = vpop.f32.mrf.mxu0
      %v291 = vadd.f32 %v238, %v290
      %292 = vmatmul.bf16.gmra.mxu0 %v271
      %v293 = vpop.f32.mrf.mxu0
      %v294 = vadd.f32 %v238, %v293
      %v295 = vpop.f32.mrf.mxu0
      %v296 = vadd.f32 %v238, %v295
      %297 = vmatmul.bf16.gmra.mxu0 %v274
      %v298 = vpop.f32.mrf.mxu0
      %v299 = vadd.f32 %v238, %v298
      %v300 = vpop.f32.mrf.mxu0
      %v301 = vadd.f32 %v238, %v300
      %302 = vmatmul.bf16.gmra.mxu0 %v277
      %v303 = vpop.f32.mrf.mxu0
      %v304 = vadd.f32 %v238, %v303
      %v305 = vpop.f32.mrf.mxu0
      %v306 = vadd.f32 %v238, %v305
      %307 = vdwg.mxu0
      %v308 = vmax.f32 %v289, 0.0
      %v309 = vmax.f32 %v291, 0.0
      %v310 = vmax.f32 %v294, 0.0
      %v311 = vmax.f32 %v296, 0.0
      %v312 = vmax.f32 %v299, 0.0
      %v313 = vmax.f32 %v301, 0.0
      %v314 = vmax.f32 %v304, 0.0
      %v315 = vmax.f32 %v306, 0.0
      %vm316 = vcmask 64512
      %317 = vst.msk [vmem:[%s223] sm:$0xff] %vm316, %v308
      %318 = vst.msk [vmem:[%s223 + $0x8] sm:$0xff] %vm316, %v309
      %319 = vst.msk [vmem:[%s223 + $0x10] sm:$0xff] %vm316, %v310
      %320 = vst.msk [vmem:[%s223 + $0x18] sm:$0xff] %vm316, %v311
      %321 = vst.msk [vmem:[%s223 + $0x20] sm:$0xff] %vm316, %v312
      %322 = vst.msk [vmem:[%s223 + $0x28] sm:$0xff] %vm316, %v313
      %323 = vst.msk [vmem:[%s223 + $0x30] sm:$0xff] %vm316, %v314
      %324 = vst.msk [vmem:[%s223 + $0x38] sm:$0xff] %vm316, %v315
      %s325 = smul.u32 8, %s18
      %p326 = scmp.lt.s32.totalorder %s325, 15
      %s327 = scalar_select %p326, %s325, 15
      %p328 = scmp.lt.s32.totalorder %s19, 0
      %s329 = scalar_select %p328, %s19, 0
      %s330 = sadd.s32 %s329, %s327
      %s331 = smul.addr %s330, 8
      %s332 = scalar_lea.vmem %s3, %s331
      // Predicated region
      $region33: #{deeplab_forward.17} parent=31 // pred_check
        %p333 = pneg %p124
      $region34: #{deeplab_forward.17} parent=31 // pred_check_branch
        %335 = sbr.rel (%p333) target = $region36
      $region35: #{deeplab_forward.17} parent=31 // pred_region
        %s336 = smul.u32 8, %s18
      $region36: #{deeplab_forward.17} parent=31 // pred_fallthru
        _
    $region32: #{deeplab_forward.17} parent=5 // pred_fallthru
      _
    %p337 = scmp.le.s32.totalorder 2, %s9
    // Predicated region
    $region37: #{deeplab_forward.17} parent=5 // pred_check
      %p338 = pneg %p337
    $region38: #{deeplab_forward.17} parent=5 // pred_check_branch
      %340 = sbr.rel (%p338) target = $region40
    $region39: #{deeplab_forward.17} parent=5 // pred_region
      %s341 = ssub.s32 %s9, 2
      // Predicated region
      $region41: #{deeplab_forward.17} parent=39 // pred_check
        %p342 = pneg %p130
      $region42: #{deeplab_forward.17} parent=39 // pred_check_branch
        %344 = sbr.rel (%p342) target = $region44
      $region43: #{deeplab_forward.17} parent=39 // pred_region
        %s345 = smul.u32 8, %s20
        %p346 = scmp.lt.s32.totalorder %s345, 15
        %s347 = scalar_select %p346, %s345, 15
        %p348 = scmp.lt.s32.totalorder %s21, 0
        %s349 = scalar_select %p348, %s21, 0
        %s350 = sadd.s32 %s349, %s347
        %s351 = smul.addr %s350, 8
        %s352 = scalar_lea.vmem %s3, %s351
      $region44: #{deeplab_forward.17} parent=39 // pred_fallthru
        _
    $region40: #{deeplab_forward.17} parent=5 // pred_fallthru
      _
  $region6: #{deeplab_forward.17} parent=0 // loop_footer
    %s13 = sadd.s32 1, %s9
  $region7: #{deeplab_forward.17} parent=0 // loop_footer_branch
    %8 = sbr.rel target = $region3
  $region8: #{deeplab_forward.17} parent=0 // loop_exit
    _

// kernel: deeplab_forward.19
$region0: #{deeplab_forward.19}
  #allocation0 [shape = 'u32[]', space=smem, size = 0x4, offset = 0x4, fixed_abs, tag = 'smem constant byte address 0x4 - core index']
  #allocation1 [shape = 'u32[72,128]{1,0:T(1,128)}', space=vmem, size = 0x9000, scoped, tag = 'internal scratch']
  %s0 = inlined_call_operand.vmem [shape: bf16[128,368], index: 0, kind: input, shape index: {}]
  %s1 = inlined_call_operand.vmem [shape: bf16[368,32], index: 1, kind: input, shape index: {}]
  %s2 = inlined_call_operand.vmem [shape: f32[1,32], index: 2, kind: input, shape index: {}]
  %s3 = inlined_call_operand.vmem [shape: f32[128,32], index: 3, kind: output, shape index: {}]
  %s4 = sld [smem:[#allocation0]]
  $region45: #{deeplab_forward.19} parent=0
    _
  %s6 = ssub.s32 1, %s4
  %s7 = scalar_select 0, %s6, %s4
  loop: start=0, step=1, limit=4
  $region2: #{deeplab_forward.19} parent=0 // loop_pre_header
    _
  $region3: #{deeplab_forward.19} parent=0 // loop_header
    %s9 = sphi 0, %s13
    %p10 = scmp.ge.s32.totalorder %s9, 4
    %s16 = sphi 0, %s28
    %s17 = sphi 0, %s24
    %s18 = sphi 0, %s16
    %s19 = sphi 0, %s17
    %s20 = sphi 0, %s18
    %s21 = sphi 0, %s19
    %s31 = sphi 0, %s33
    %s34 = sphi 0, %s31
    %s35 = sphi 0, %s34
    %s51 = sphi 0, %s35
    %s57 = sphi 0, %s59
    %s60 = sphi 0, %s57
    %s61 = sphi 0, %s60
    %s77 = sphi 0, %s61
    %s83 = sphi 0, %s85
    %s86 = sphi 0, %s83
    %s87 = sphi 0, %s86
    %s103 = sphi 0, %s87
    %s111 = sphi 0, %s113
    %s114 = sphi 0, %s111
    %s115 = sphi 0, %s114
    %s131 = sphi 0, %s115
  $region4: #{deeplab_forward.19} parent=0 // loop_header_branch
    %12 = sbr.rel (%p10) target = $region8
  $region5: #{deeplab_forward.19} parent=0 // loop_body
    %s14 = ssub.s32 %s9, 1
    %s15 = ssub.s32 %s9, 2
    %s22 = sadd.s32 1, %s17
    %p23 = scmp.ge.s32.totalorder %s22, 1
    %s24 = scalar_select %p23, 0, %s22
    %s25 = sadd.s32 1, %s16
    %s26 = scalar_select %p23, %s25, %s16
    %p27 = scmp.ge.s32.totalorder %s26, 2
    %s28 = scalar_select %p27, 0, %s26
    %s29 = ssub.s32 %s16, %s28
    %p30 = scmp.eq.s32.totalorder %s29, 0
    %s32 = sadd.s32 %s31, 1
    %s33 = scalar_select %p30, %s31, %s32
    %p36 = pneg %p30
    %p37 = scmp.eq.s32.totalorder %s9, 1
    %p38 = por %p36, %p37
    %p39 = scmp.ne.s32.totalorder %s31, %s34
    %p40 = scmp.eq.s32.totalorder %s9, 0
    %p41 = por %p39, %p40
    %p42 = scmp.ne.s32.totalorder %s31, %s34
    %p43 = scmp.eq.s32.totalorder %s14, 1
    %p44 = por %p42, %p43
    %p45 = scmp.ne.s32.totalorder %s34, %s35
    %p46 = scmp.eq.s32.totalorder %s14, 0
    %p47 = por %p45, %p46
    %p48 = scmp.ne.s32.totalorder %s34, %s35
    %p49 = scmp.eq.s32.totalorder %s15, 1
    %p50 = por %p48, %p49
    %p52 = scmp.ne.s32.totalorder %s35, %s51
    %p53 = scmp.eq.s32.totalorder %s15, 0
    %p54 = por %p52, %p53
    %s55 = ssub.s32 %s17, %s24
    %p56 = scmp.eq.s32.totalorder %s55, 0
    %s58 = sadd.s32 %s57, 1
    %s59 = scalar_select %p56, %s57, %s58
    %p62 = pneg %p56
    %p63 = scmp.eq.s32.totalorder %s9, 1
    %p64 = por %p62, %p63
    %p65 = scmp.ne.s32.totalorder %s57, %s60
    %p66 = scmp.eq.s32.totalorder %s9, 0
    %p67 = por %p65, %p66
    %p68 = scmp.ne.s32.totalorder %s57, %s60
    %p69 = scmp.eq.s32.totalorder %s14, 1
    %p70 = por %p68, %p69
    %p71 = scmp.ne.s32.totalorder %s60, %s61
    %p72 = scmp.eq.s32.totalorder %s14, 0
    %p73 = por %p71, %p72
    %p74 = scmp.ne.s32.totalorder %s60, %s61
    %p75 = scmp.eq.s32.totalorder %s15, 1
    %p76 = por %p74, %p75
    %p78 = scmp.ne.s32.totalorder %s61, %s77
    %p79 = scmp.eq.s32.totalorder %s15, 0
    %p80 = por %p78, %p79
    %s81 = ssub.s32 %s17, %s24
    %p82 = scmp.eq.s32.totalorder %s81, 0
    %s84 = sadd.s32 %s83, 1
    %s85 = scalar_select %p82, %s83, %s84
    %p88 = pneg %p82
    %p89 = scmp.eq.s32.totalorder %s9, 1
    %p90 = por %p88, %p89
    %p91 = scmp.ne.s32.totalorder %s83, %s86
    %p92 = scmp.eq.s32.totalorder %s9, 0
    %p93 = por %p91, %p92
    %p94 = scmp.ne.s32.totalorder %s83, %s86
    %p95 = scmp.eq.s32.totalorder %s14, 1
    %p96 = por %p94, %p95
    %p97 = scmp.ne.s32.totalorder %s86, %s87
    %p98 = scmp.eq.s32.totalorder %s14, 0
    %p99 = por %p97, %p98
    %p100 = scmp.ne.s32.totalorder %s86, %s87
    %p101 = scmp.eq.s32.totalorder %s15, 1
    %p102 = por %p100, %p101
    %p104 = scmp.ne.s32.totalorder %s87, %s103
    %p105 = scmp.eq.s32.totalorder %s15, 0
    %p106 = por %p104, %p105
    %s107 = ssub.s32 %s16, %s28
    %s108 = ssub.s32 %s17, %s24
    %s109 = sor.u32 %s107, %s108
    %p110 = scmp.eq.s32.totalorder %s109, 0
    %s112 = sadd.s32 %s111, 1
    %s113 = scalar_select %p110, %s111, %s112
    %p116 = pneg %p110
    %p117 = scmp.eq.s32.totalorder %s9, 1
    %p118 = por %p116, %p117
    %p119 = scmp.ne.s32.totalorder %s111, %s114
    %p120 = scmp.eq.s32.totalorder %s9, 0
    %p121 = por %p119, %p120
    %p122 = scmp.ne.s32.totalorder %s111, %s114
    %p123 = scmp.eq.s32.totalorder %s14, 1
    %p124 = por %p122, %p123
    %p125 = scmp.ne.s32.totalorder %s114, %s115
    %p126 = scmp.eq.s32.totalorder %s14, 0
    %p127 = por %p125, %p126
    %p128 = scmp.ne.s32.totalorder %s114, %s115
    %p129 = scmp.eq.s32.totalorder %s15, 1
    %p130 = por %p128, %p129
    %p132 = scmp.ne.s32.totalorder %s115, %s131
    %p133 = scmp.eq.s32.totalorder %s15, 0
    %p134 = por %p132, %p133
    %p135 = scmp.le.s32.totalorder 1, %s9
    %p136 = scmp.lt.s32.totalorder %s9, 3
    %p137 = pnand %p135, %p136
    %p138 = pneg %p137
    // Predicated region
    $region9: #{deeplab_forward.19} parent=5 // pred_check
      _
    $region10: #{deeplab_forward.19} parent=5 // pred_check_branch
      %140 = sbr.rel (%p137) target = $region12
    $region11: #{deeplab_forward.19} parent=5 // pred_region
      %s141 = ssub.s32 %s9, 1
      // Predicated region
      $region13: #{deeplab_forward.19} parent=11 // pred_check
        %p142 = pneg %p73
      $region14: #{deeplab_forward.19} parent=11 // pred_check_branch
        %144 = sbr.rel (%p142) target = $region16
      $region15: #{deeplab_forward.19} parent=11 // pred_region
        %p145 = scmp.lt.s32.totalorder %s19, 0
        %s146 = scalar_select %p145, %s19, 0
        %s147 = smul.addr %s146, 4
        %s148 = scalar_lea.vmem %s1, %s147
      $region16: #{deeplab_forward.19} parent=11 // pred_fallthru
        _
      // Predicated region
      $region17: #{deeplab_forward.19} parent=11 // pred_check
        %p149 = pneg %p99
      $region18: #{deeplab_forward.19} parent=11 // pred_check_branch
        %151 = sbr.rel (%p149) target = $region20
      $region19: #{deeplab_forward.19} parent=11 // pred_region
        %p152 = scmp.lt.s32.totalorder %s19, 0
        %s153 = scalar_select %p152, %s19, 0
        %s154 = scalar_lea.vmem %s2, %s153
      $region20: #{deeplab_forward.19} parent=11 // pred_fallthru
        _
    $region12: #{deeplab_forward.19} parent=5 // pred_fallthru
      _
    %p155 = scmp.lt.s32.totalorder %s9, 2
    // Predicated region
    $region21: #{deeplab_forward.19} parent=5 // pred_check
      %p156 = pneg %p155
    $region22: #{deeplab_forward.19} parent=5 // pred_check_branch
      %158 = sbr.rel (%p156) target = $region24
    $region23: #{deeplab_forward.19} parent=5 // pred_region
      // Predicated region
      $region25: #{deeplab_forward.19} parent=23 // pred_check
        %p159 = pneg %p41
      $region26: #{deeplab_forward.19} parent=23 // pred_check_branch
        %161 = sbr.rel (%p159) target = $region28
      $region27: #{deeplab_forward.19} parent=23 // pred_region
        %s162 = smul.u32 8, %s16
        %p163 = scmp.lt.s32.totalorder %s162, 15
        %s164 = scalar_select %p163, %s162, 15
        %s165 = smul.addr %s164, 3
        %s166 = smul.addr %s165, 4
        %s167 = scalar_lea.vmem %s0, %s166
        %s168 = smul.u32 8, %s16
      $region28: #{deeplab_forward.19} parent=23 // pred_fallthru
        _
    $region24: #{deeplab_forward.19} parent=5 // pred_fallthru
      _
    %p169 = scmp.le.s32.totalorder 1, %s9
    %p170 = scmp.lt.s32.totalorder %s9, 3
    %p171 = pnand %p169, %p170
    %p172 = pneg %p171
    // Predicated region
    $region29: #{deeplab_forward.19} parent=5 // pred_check
      _
    $region30: #{deeplab_forward.19} parent=5 // pred_check_branch
      %174 = sbr.rel (%p171) target = $region32
    $region31: #{deeplab_forward.19} parent=5 // pred_region
      %s175 = ssub.s32 %s9, 1
      %s176 = smul.u32 8, %s18
      %p177 = scmp.lt.s32.totalorder %s176, 15
      %s178 = scalar_select %p177, %s176, 15
      %s179 = smul.addr %s178, 3
      %s180 = smul.addr %s179, 4
      %s181 = scalar_lea.vmem %s0, %s180
      %p182 = pneg %p47
      %p183 = pneg %p44
      %p184 = scmp.lt.s32.totalorder %s19, 0
      %s185 = scalar_select %p184, %s19, 0
      %s186 = smul.addr %s185, 4
      %s187 = scalar_lea.vmem %s1, %s186
      %p188 = pneg %p73
      %p189 = pneg %p70
      %p190 = scmp.lt.s32.totalorder %s19, 0
      %s191 = scalar_select %p190, %s19, 0
      %s192 = scalar_lea.vmem %s2, %s191
      %p193 = pneg %p99
      %p194 = pneg %p96
      %p195 = pneg %p127
      %p196 = pneg %p124
      %s197 = smul.u32 8, %s18
      %p198 = scmp.lt.s32.totalorder %s197, 15
      %s199 = scalar_select %p198, %s197, 15
      %p200 = scmp.lt.s32.totalorder %s19, 0
      %s201 = scalar_select %p200, %s19, 0
      %s202 = sadd.s32 %s201, %s199
      %s203 = smul.addr %s202, 8
      %s204 = scalar_lea.vmem %s3, %s203
      %s205 = smul.u32 8, %s18
      %p206 = scmp.lt.s32.totalorder %s205, 15
      %s207 = scalar_select %p206, %s205, 15
      %s208 = smul.addr %s207, 3
      %s209 = smul.addr %s208, 4
      %s210 = scalar_lea.vmem %s0, %s209
      %s211 = smul.u32 8, %s18
      %p212 = scmp.lt.s32.totalorder %s19, 0
      %s213 = scalar_select %p212, %s19, 0
      %s214 = smul.addr %s213, 4
      %s215 = scalar_lea.vmem %s1, %s214
      %p216 = scmp.lt.s32.totalorder %s19, 0
      %s217 = scalar_select %p216, %s19, 0
      %s218 = scalar_lea.vmem %s2, %s217
      %s219 = smul.u32 8, %s18
      %p220 = scmp.lt.s32.totalorder %s219, 15
      %s221 = scalar_select %p220, %s219, 15
      %p222 = scmp.lt.s32.totalorder %s19, 0
      %s223 = scalar_select %p222, %s19, 0
      %s224 = sadd.s32 %s223, %s221
      %s225 = smul.addr %s224, 8
      %s226 = scalar_lea.vmem %s3, %s225
      %s227 = smul.u32 8, %s18
      %v229 = vld [vmem:[%s210] sm:$0xff]
      %v230 = vld [vmem:[%s210 + $0x8] sm:$0xf]
      %v231 = vld [vmem:[%s210 + $0xc] sm:$0xff]
      %v232 = vld [vmem:[%s210 + $0x14] sm:$0xf]
      %v233 = vld [vmem:[%s210 + $0x18] sm:$0xff]
      %v234 = vld [vmem:[%s210 + $0x20] sm:$0xf]
      %v235 = vld [vmem:[%s210 + $0x24] sm:$0xff]
      %v236 = vld [vmem:[%s210 + $0x2c] sm:$0xf]
      %v237 = vld [vmem:[%s210 + $0x30] sm:$0xff]
      %v238 = vld [vmem:[%s210 + $0x38] sm:$0xf]
      %v239 = vld [vmem:[%s210 + $0x3c] sm:$0xff]
      %v240 = vld [vmem:[%s210 + $0x44] sm:$0xf]
      %v241 = vld [vmem:[%s210 + $0x48] sm:$0xff]
      %v242 = vld [vmem:[%s210 + $0x50] sm:$0xf]
      %v243 = vld [vmem:[%s210 + $0x54] sm:$0xff]
      %v244 = vld [vmem:[%s210 + $0x5c] sm:$0xf]
      %v245 = vld [vmem:[%s215] sm:$0xf]
      %v246 = vld [vmem:[%s215 + $0x4] sm:$0xf]
      %v247 = vld [vmem:[%s215 + $0x8] sm:$0xf]
      %v248 = vld [vmem:[%s215 + $0xc] sm:$0xf]
      %v249 = vld [vmem:[%s215 + $0x10] sm:$0xf]
      %v250 = vld [vmem:[%s215 + $0x14] sm:$0xf]
      %v251 = vld [vmem:[%s215 + $0x18] sm:$0xf]
      %v252 = vld [vmem:[%s215 + $0x1c] sm:$0xf]
      %v253 = vld [vmem:[%s215 + $0x20] sm:$0xf]
      %v254 = vld [vmem:[%s215 + $0x24] sm:$0xf]
      %v255 = vld [vmem:[%s215 + $0x28] sm:$0xf]
      %v256 = vld [vmem:[%s215 + $0x2c] sm:$0xf]
      %v257 = vld [vmem:[%s215 + $0x30] sm:$0xf]
      %v258 = vld [vmem:[%s215 + $0x34] sm:$0xf]
      %v259 = vld [vmem:[%s215 + $0x38] sm:$0xf]
      %v260 = vld [vmem:[%s215 + $0x3c] sm:$0xf]
      %v261 = vld [vmem:[%s215 + $0x40] sm:$0xf]
      %v262 = vld [vmem:[%s215 + $0x44] sm:$0xf]
      %v263 = vld [vmem:[%s215 + $0x48] sm:$0xf]
      %v264 = vld [vmem:[%s215 + $0x4c] sm:$0xf]
      %v265 = vld [vmem:[%s215 + $0x50] sm:$0xf]
      %v266 = vld [vmem:[%s215 + $0x54] sm:$0xf]
      %v267 = vld [vmem:[%s215 + $0x58] sm:$0xf]
      %v268 = vld [vmem:[%s215 + $0x5c] sm:$0xf]
      %v269 = vld [vmem:[%s215 + $0x60] sm:$0xf]
      %v270 = vld [vmem:[%s215 + $0x64] sm:$0xf]
      %v271 = vld [vmem:[%s215 + $0x68] sm:$0xf]
      %v272 = vld [vmem:[%s215 + $0x6c] sm:$0xf]
      %v273 = vld [vmem:[%s215 + $0x70] sm:$0xf]
      %v274 = vld [vmem:[%s215 + $0x74] sm:$0xf]
      %v275 = vld [vmem:[%s215 + $0x78] sm:$0xf]
      %v276 = vld [vmem:[%s215 + $0x7c] sm:$0xf]
      %v277 = vld [vmem:[%s215 + $0x80] sm:$0xf]
      %v278 = vld [vmem:[%s215 + $0x84] sm:$0xf]
      %v279 = vld [vmem:[%s215 + $0x88] sm:$0xf]
      %v280 = vld [vmem:[%s215 + $0x8c] sm:$0xf]
      %v281 = vld [vmem:[%s215 + $0x90] sm:$0xf]
      %v282 = vld [vmem:[%s215 + $0x94] sm:$0xf]
      %v283 = vld [vmem:[%s215 + $0x98] sm:$0xf]
      %v284 = vld [vmem:[%s215 + $0x9c] sm:$0xf]
      %v285 = vld [vmem:[%s215 + $0xa0] sm:$0xf]
      %v286 = vld [vmem:[%s215 + $0xa4] sm:$0xf]
      %v287 = vld [vmem:[%s215 + $0xa8] sm:$0xf]
      %v288 = vld [vmem:[%s215 + $0xac] sm:$0xf]
      %v289 = vld [vmem:[%s215 + $0xb0] sm:$0xf]
      %v290 = vld [vmem:[%s215 + $0xb4] sm:$0xf]
      %v291 = vld [vmem:[%s218] sm:$0x1]
      %v293 = vperm.slane %v291, 0
      %v311 = vunpack.c.l.b16 %v229
      %v312 = vunpack.c.h.b16 %v229
      %v313 = vunpack.c.l.b16 %v230
      %v314 = vunpack.c.l.b16 %v231
      %v315 = vunpack.c.h.b16 %v231
      %v316 = vunpack.c.l.b16 %v232
      %v317 = vunpack.c.l.b16 %v233
      %v318 = vunpack.c.h.b16 %v233
      %v319 = vunpack.c.l.b16 %v234
      %v320 = vunpack.c.l.b16 %v235
      %v321 = vunpack.c.h.b16 %v235
      %v322 = vunpack.c.l.b16 %v236
      %v323 = vunpack.c.l.b16 %v237
      %v324 = vunpack.c.h.b16 %v237
      %v325 = vunpack.c.l.b16 %v238
      %v326 = vunpack.c.l.b16 %v239
      %v327 = vunpack.c.h.b16 %v239
      %v328 = vunpack.c.l.b16 %v240
      %v329 = vunpack.c.l.b16 %v241
      %v330 = vunpack.c.h.b16 %v241
      %v331 = vunpack.c.l.b16 %v242
      %v332 = vunpack.c.l.b16 %v243
      %v333 = vunpack.c.h.b16 %v243
      %v334 = vunpack.c.l.b16 %v244
      %v335 = vpack.c.b16 %v314, %v311
      %v336 = vpack.c.b16 %v315, %v312
      %v337 = vpack.c.b16 %v316, %v313
      %v338 = vpack.c.b16 %v320, %v317
      %v339 = vpack.c.b16 %v321, %v318
      %v340 = vpack.c.b16 %v322, %v319
      %v341 = vpack.c.b16 %v326, %v323
      %v342 = vpack.c.b16 %v327, %v324
      %v343 = vpack.c.b16 %v328, %v325
      %v344 = vpack.c.b16 %v332, %v329
      %v345 = vpack.c.b16 %v333, %v330
      %v346 = vpack.c.b16 %v334, %v331
      %v401 = vunpack.c.l.b16 %v245
      %v402 = vunpack.c.l.b16 %v246
      %v403 = vunpack.c.l.b16 %v247
      %v404 = vunpack.c.l.b16 %v248
      %v405 = vunpack.c.l.b16 %v249
      %v406 = vunpack.c.l.b16 %v250
      %v407 = vunpack.c.l.b16 %v251
      %v408 = vunpack.c.l.b16 %v252
      %v409 = vunpack.c.l.b16 %v253
      %v410 = vunpack.c.l.b16 %v254
      %v411 = vunpack.c.l.b16 %v255
      %v412 = vunpack.c.l.b16 %v256
      %v413 = vunpack.c.l.b16 %v257
      %v414 = vunpack.c.l.b16 %v258
      %v415 = vunpack.c.l.b16 %v259
      %v416 = vunpack.c.l.b16 %v260
      %v417 = vunpack.c.l.b16 %v261
      %v418 = vunpack.c.l.b16 %v262
      %v419 = vunpack.c.l.b16 %v263
      %v420 = vunpack.c.l.b16 %v264
      %v421 = vunpack.c.l.b16 %v265
      %v422 = vunpack.c.l.b16 %v266
      %v423 = vunpack.c.l.b16 %v267
      %v424 = vunpack.c.l.b16 %v268
      %v425 = vunpack.c.l.b16 %v269
      %v426 = vunpack.c.l.b16 %v270
      %v427 = vunpack.c.l.b16 %v271
      %v428 = vunpack.c.l.b16 %v272
      %v429 = vunpack.c.l.b16 %v273
      %v430 = vunpack.c.l.b16 %v274
      %v431 = vunpack.c.l.b16 %v275
      %v432 = vunpack.c.l.b16 %v276
      %v433 = vunpack.c.l.b16 %v277
      %v434 = vunpack.c.l.b16 %v278
      %v435 = vunpack.c.l.b16 %v279
      %v436 = vunpack.c.l.b16 %v280
      %v437 = vunpack.c.l.b16 %v281
      %v438 = vunpack.c.l.b16 %v282
      %v439 = vunpack.c.l.b16 %v283
      %v440 = vunpack.c.l.b16 %v284
      %v441 = vunpack.c.l.b16 %v285
      %v442 = vunpack.c.l.b16 %v286
      %v443 = vunpack.c.l.b16 %v287
      %v444 = vunpack.c.l.b16 %v288
      %v445 = vunpack.c.l.b16 %v289
      %v446 = vunpack.c.l.b16 %v290
      %v447 = vpack.c.b16 %v402, %v401
      %v448 = vpack.c.b16 %v404, %v403
      %v449 = vpack.c.b16 %v406, %v405
      %v450 = vpack.c.b16 %v408, %v407
      %v451 = vpack.c.b16 %v410, %v409
      %v452 = vpack.c.b16 %v412, %v411
      %v453 = vpack.c.b16 %v414, %v413
      %v454 = vpack.c.b16 %v416, %v415
      %v455 = vpack.c.b16 %v418, %v417
      %v456 = vpack.c.b16 %v420, %v419
      %v457 = vpack.c.b16 %v422, %v421
      %v458 = vpack.c.b16 %v424, %v423
      %v459 = vpack.c.b16 %v426, %v425
      %v460 = vpack.c.b16 %v428, %v427
      %v461 = vpack.c.b16 %v430, %v429
      %v462 = vpack.c.b16 %v432, %v431
      %v463 = vpack.c.b16 %v434, %v433
      %v464 = vpack.c.b16 %v436, %v435
      %v465 = vpack.c.b16 %v438, %v437
      %v466 = vpack.c.b16 %v440, %v439
      %v467 = vpack.c.b16 %v442, %v441
      %v468 = vpack.c.b16 %v444, %v443
      %v469 = vpack.c.b16 %v446, %v445
      %vm493 = vcmask 916480
      %v495 = vsel %vm493, %v337, 0
      %v498 = vsel %vm493, %v340, 0
      %v501 = vsel %vm493, %v343, 0
      %v504 = vsel %vm493, %v346, 0
      %506 = vmatpush.bf16.msra.mxu0 %v454
      %507 = vmatpush.bf16.msra.mxu0 %v453
      %508 = vmatpush.bf16.msra.mxu0 %v452
      %509 = vmatpush.bf16.msra.mxu0 %v451
      %510 = vmatpush.bf16.msra.mxu0 %v450
      %511 = vmatpush.bf16.msra.mxu0 %v449
      %512 = vmatpush.bf16.msra.mxu0 %v448
      %513 = vmatpush.bf16.msra.mxu0 %v447
      %514 = vmatmul.bf16.gmra.mxu0 %v335
      %v515 = vpop.f32.mrf.mxu0
      %v516 = vadd.f32 %v293, %v515
      %v517 = vpop.f32.mrf.mxu0
      %v518 = vadd.f32 %v293, %v517
      %519 = vmatmul.bf16.gmra.mxu0 %v338
      %v520 = vpop.f32.mrf.mxu0
      %v521 = vadd.f32 %v293, %v520
      %v522 = vpop.f32.mrf.mxu0
      %v523 = vadd.f32 %v293, %v522
      %524 = vmatmul.bf16.gmra.mxu0 %v341
      %v525 = vpop.f32.mrf.mxu0
      %v526 = vadd.f32 %v293, %v525
      %v527 = vpop.f32.mrf.mxu0
      %v528 = vadd.f32 %v293, %v527
      %529 = vmatmul.bf16.gmra.mxu0 %v344
      %v530 = vpop.f32.mrf.mxu0
      %v531 = vadd.f32 %v293, %v530
      %v532 = vpop.f32.mrf.mxu0
      %v533 = vadd.f32 %v293, %v532
      %534 = vdwg.mxu0
      %535 = vmatpush.bf16.msra.mxu0 %v462
      %536 = vmatpush.bf16.msra.mxu0 %v461
      %537 = vmatpush.bf16.msra.mxu0 %v460
      %538 = vmatpush.bf16.msra.mxu0 %v459
      %539 = vmatpush.bf16.msra.mxu0 %v458
      %540 = vmatpush.bf16.msra.mxu0 %v457
      %541 = vmatpush.bf16.msra.mxu0 %v456
      %542 = vmatpush.bf16.msra.mxu0 %v455
      %543 = vmatmul.bf16.gmra.mxu0 %v336
      %v544 = vpop.f32.mrf.mxu0
      %v545 = vadd.f32 %v516, %v544
      %v546 = vpop.f32.mrf.mxu0
      %v547 = vadd.f32 %v518, %v546
      %548 = vmatmul.bf16.gmra.mxu0 %v339
      %v549 = vpop.f32.mrf.mxu0
      %v550 = vadd.f32 %v521, %v549
      %v551 = vpop.f32.mrf.mxu0
      %v552 = vadd.f32 %v523, %v551
      %553 = vmatmul.bf16.gmra.mxu0 %v342
      %v554 = vpop.f32.mrf.mxu0
      %v555 = vadd.f32 %v526, %v554
      %v556 = vpop.f32.mrf.mxu0
      %v557 = vadd.f32 %v528, %v556
      %558 = vmatmul.bf16.gmra.mxu0 %v345
      %v559 = vpop.f32.mrf.mxu0
      %v560 = vadd.f32 %v531, %v559
      %v561 = vpop.f32.mrf.mxu0
      %v562 = vadd.f32 %v533, %v561
      %563 = vdwg.mxu0
      %564 = vmatpush.bf16.msra.mxu0 0
      %565 = vmatpush.bf16.msra.mxu0 %v469
      %566 = vmatpush.bf16.msra.mxu0 %v468
      %567 = vmatpush.bf16.msra.mxu0 %v467
      %568 = vmatpush.bf16.msra.mxu0 %v466
      %569 = vmatpush.bf16.msra.mxu0 %v465
      %570 = vmatpush.bf16.msra.mxu0 %v464
      %571 = vmatpush.bf16.msra.mxu0 %v463
      %572 = vmatmul.bf16.gmra.mxu0 %v495
      %v573 = vpop.f32.mrf.mxu0
      %v574 = vadd.f32 %v545, %v573
      %v575 = vpop.f32.mrf.mxu0
      %v576 = vadd.f32 %v547, %v575
      %577 = vmatmul.bf16.gmra.mxu0 %v498
      %v578 = vpop.f32.mrf.mxu0
      %v579 = vadd.f32 %v550, %v578
      %v580 = vpop.f32.mrf.mxu0
      %v581 = vadd.f32 %v552, %v580
      %582 = vmatmul.bf16.gmra.mxu0 %v501
      %v583 = vpop.f32.mrf.mxu0
      %v584 = vadd.f32 %v555, %v583
      %v585 = vpop.f32.mrf.mxu0
      %v586 = vadd.f32 %v557, %v585
      %587 = vmatmul.bf16.gmra.mxu0 %v504
      %v588 = vpop.f32.mrf.mxu0
      %v589 = vadd.f32 %v560, %v588
      %v590 = vpop.f32.mrf.mxu0
      %v591 = vadd.f32 %v562, %v590
      %592 = vdwg.mxu0
      %v593 = vmax.f32 %v574, 0.0
      %v594 = vmax.f32 %v576, 0.0
      %v595 = vmax.f32 %v579, 0.0
      %v596 = vmax.f32 %v581, 0.0
      %v597 = vmax.f32 %v584, 0.0
      %v598 = vmax.f32 %v586, 0.0
      %v599 = vmax.f32 %v589, 0.0
      %v600 = vmax.f32 %v591, 0.0
      %vm601 = vcmask 261120
      %602 = vst.msk [vmem:[%s226] sm:$0xff] %vm601, %v593
      %603 = vst.msk [vmem:[%s226 + $0x8] sm:$0xff] %vm601, %v594
      %604 = vst.msk [vmem:[%s226 + $0x10] sm:$0xff] %vm601, %v595
      %605 = vst.msk [vmem:[%s226 + $0x18] sm:$0xff] %vm601, %v596
      %606 = vst.msk [vmem:[%s226 + $0x20] sm:$0xff] %vm601, %v597
      %607 = vst.msk [vmem:[%s226 + $0x28] sm:$0xff] %vm601, %v598
      %608 = vst.msk [vmem:[%s226 + $0x30] sm:$0xff] %vm601, %v599
      %609 = vst.msk [vmem:[%s226 + $0x38] sm:$0xff] %vm601, %v600
      %s610 = smul.u32 8, %s18
      %p611 = scmp.lt.s32.totalorder %s610, 15
      %s612 = scalar_select %p611, %s610, 15
      %p613 = scmp.lt.s32.totalorder %s19, 0
      %s614 = scalar_select %p613, %s19, 0
      %s615 = sadd.s32 %s614, %s612
      %s616 = smul.addr %s615, 8
      %s617 = scalar_lea.vmem %s3, %s616
      // Predicated region
      $region33: #{deeplab_forward.19} parent=31 // pred_check
        %p618 = pneg %p124
      $region34: #{deeplab_forward.19} parent=31 // pred_check_branch
        %620 = sbr.rel (%p618) target = $region36
      $region35: #{deeplab_forward.19} parent=31 // pred_region
        %s621 = smul.u32 8, %s18
      $region36: #{deeplab_forward.19} parent=31 // pred_fallthru
        _
    $region32: #{deeplab_forward.19} parent=5 // pred_fallthru
      _
    %p622 = scmp.le.s32.totalorder 2, %s9
    // Predicated region
    $region37: #{deeplab_forward.19} parent=5 // pred_check
      %p623 = pneg %p622
    $region38: #{deeplab_forward.19} parent=5 // pred_check_branch
      %625 = sbr.rel (%p623) target = $region40
    $region39: #{deeplab_forward.19} parent=5 // pred_region
      %s626 = ssub.s32 %s9, 2
      // Predicated region
      $region41: #{deeplab_forward.19} parent=39 // pred_check
        %p627 = pneg %p130
      $region42: #{deeplab_forward.19} parent=39 // pred_check_branch
        %629 = sbr.rel (%p627) target = $region44
      $region43: #{deeplab_forward.19} parent=39 // pred_region
        %s630 = smul.u32 8, %s20
        %p631 = scmp.lt.s32.totalorder %s630, 15
        %s632 = scalar_select %p631, %s630, 15
        %p633 = scmp.lt.s32.totalorder %s21, 0
        %s634 = scalar_select %p633, %s21, 0
        %s635 = sadd.s32 %s634, %s632
        %s636 = smul.addr %s635, 8
        %s637 = scalar_lea.vmem %s3, %s636
      $region44: #{deeplab_forward.19} parent=39 // pred_fallthru
        _
    $region40: #{deeplab_forward.19} parent=5 // pred_fallthru
      _
  $region6: #{deeplab_forward.19} parent=0 // loop_footer
    %s13 = sadd.s32 1, %s9
  $region7: #{deeplab_forward.19} parent=0 // loop_footer_branch
    %8 = sbr.rel target = $region3
  $region8: #{deeplab_forward.19} parent=0 // loop_exit
    _

// kernel: deeplab_forward.21
$region0: #{deeplab_forward.21}
  #allocation0 [shape = 'u32[]', space=smem, size = 0x4, offset = 0x4, fixed_abs, tag = 'smem constant byte address 0x4 - core index']
  #allocation1 [shape = 'u32[72,128]{1,0:T(1,128)}', space=vmem, size = 0x9000, scoped, tag = 'internal scratch']
  %s0 = inlined_call_operand.vmem [shape: bf16[128,32], index: 0, kind: input, shape index: {}]
  %s1 = inlined_call_operand.vmem [shape: bf16[32,21], index: 1, kind: input, shape index: {}]
  %s2 = inlined_call_operand.vmem [shape: f32[1,21], index: 2, kind: input, shape index: {}]
  %s3 = inlined_call_operand.hbm [shape: f32[128,21], index: 3, kind: output, shape index: {}]
  %s4 = sld [smem:[#allocation0]]
  $region45: #{deeplab_forward.21} parent=0
    _
  %s6 = ssub.s32 1, %s4
  %s7 = scalar_select 0, %s6, %s4
  $region1: #{deeplab_forward.21} parent=0
    #allocation2 [shape = 'u8[65536]{0}', space=vmem, size = 0x10000, scoped, tag = 'output window, operand 0']
    #allocation3 [shape = 's32[2]{0}', space=sflag, size = 0x8, scoped, tag = 'scoped memory for deeplab_forward.21']
    %8 = vsyncpa [#allocation3], 0
    %s9 = scalar_lea.sflag [#allocation3], 1
    %10 = vsyncpa %s9, 0
    loop: start=0, step=1, limit=4
    $region2: #{deeplab_forward.21} parent=1 // loop_pre_header
      _
    $region3: #{deeplab_forward.21} parent=1 // loop_header
      %s12 = sphi 0, %s16
      %p13 = scmp.ge.s32.totalorder %s12, 4
      %s19 = sphi 0, %s31
      %s20 = sphi 0, %s27
      %s21 = sphi 0, %s19
      %s22 = sphi 0, %s20
      %s23 = sphi 0, %s21
      %s24 = sphi 0, %s22
      %s34 = sphi 0, %s36
      %s37 = sphi 0, %s34
      %s38 = sphi 0, %s37
      %s54 = sphi 0, %s38
      %s60 = sphi 0, %s62
      %s63 = sphi 0, %s60
      %s64 = sphi 0, %s63
      %s80 = sphi 0, %s64
      %s86 = sphi 0, %s88
      %s89 = sphi 0, %s86
      %s90 = sphi 0, %s89
      %s106 = sphi 0, %s90
      %s114 = sphi 0, %s116
      %s117 = sphi 0, %s114
      %s118 = sphi 0, %s117
      %s134 = sphi 0, %s118
    $region4: #{deeplab_forward.21} parent=1 // loop_header_branch
      %15 = sbr.rel (%p13) target = $region8
    $region5: #{deeplab_forward.21} parent=1 // loop_body
      %s17 = ssub.s32 %s12, 1
      %s18 = ssub.s32 %s12, 2
      %s25 = sadd.s32 1, %s20
      %p26 = scmp.ge.s32.totalorder %s25, 1
      %s27 = scalar_select %p26, 0, %s25
      %s28 = sadd.s32 1, %s19
      %s29 = scalar_select %p26, %s28, %s19
      %p30 = scmp.ge.s32.totalorder %s29, 2
      %s31 = scalar_select %p30, 0, %s29
      %s32 = ssub.s32 %s19, %s31
      %p33 = scmp.eq.s32.totalorder %s32, 0
      %s35 = sadd.s32 %s34, 1
      %s36 = scalar_select %p33, %s34, %s35
      %p39 = pneg %p33
      %p40 = scmp.eq.s32.totalorder %s12, 1
      %p41 = por %p39, %p40
      %p42 = scmp.ne.s32.totalorder %s34, %s37
      %p43 = scmp.eq.s32.totalorder %s12, 0
      %p44 = por %p42, %p43
      %p45 = scmp.ne.s32.totalorder %s34, %s37
      %p46 = scmp.eq.s32.totalorder %s17, 1
      %p47 = por %p45, %p46
      %p48 = scmp.ne.s32.totalorder %s37, %s38
      %p49 = scmp.eq.s32.totalorder %s17, 0
      %p50 = por %p48, %p49
      %p51 = scmp.ne.s32.totalorder %s37, %s38
      %p52 = scmp.eq.s32.totalorder %s18, 1
      %p53 = por %p51, %p52
      %p55 = scmp.ne.s32.totalorder %s38, %s54
      %p56 = scmp.eq.s32.totalorder %s18, 0
      %p57 = por %p55, %p56
      %s58 = ssub.s32 %s20, %s27
      %p59 = scmp.eq.s32.totalorder %s58, 0
      %s61 = sadd.s32 %s60, 1
      %s62 = scalar_select %p59, %s60, %s61
      %p65 = pneg %p59
      %p66 = scmp.eq.s32.totalorder %s12, 1
      %p67 = por %p65, %p66
      %p68 = scmp.ne.s32.totalorder %s60, %s63
      %p69 = scmp.eq.s32.totalorder %s12, 0
      %p70 = por %p68, %p69
      %p71 = scmp.ne.s32.totalorder %s60, %s63
      %p72 = scmp.eq.s32.totalorder %s17, 1
      %p73 = por %p71, %p72
      %p74 = scmp.ne.s32.totalorder %s63, %s64
      %p75 = scmp.eq.s32.totalorder %s17, 0
      %p76 = por %p74, %p75
      %p77 = scmp.ne.s32.totalorder %s63, %s64
      %p78 = scmp.eq.s32.totalorder %s18, 1
      %p79 = por %p77, %p78
      %p81 = scmp.ne.s32.totalorder %s64, %s80
      %p82 = scmp.eq.s32.totalorder %s18, 0
      %p83 = por %p81, %p82
      %s84 = ssub.s32 %s20, %s27
      %p85 = scmp.eq.s32.totalorder %s84, 0
      %s87 = sadd.s32 %s86, 1
      %s88 = scalar_select %p85, %s86, %s87
      %p91 = pneg %p85
      %p92 = scmp.eq.s32.totalorder %s12, 1
      %p93 = por %p91, %p92
      %p94 = scmp.ne.s32.totalorder %s86, %s89
      %p95 = scmp.eq.s32.totalorder %s12, 0
      %p96 = por %p94, %p95
      %p97 = scmp.ne.s32.totalorder %s86, %s89
      %p98 = scmp.eq.s32.totalorder %s17, 1
      %p99 = por %p97, %p98
      %p100 = scmp.ne.s32.totalorder %s89, %s90
      %p101 = scmp.eq.s32.totalorder %s17, 0
      %p102 = por %p100, %p101
      %p103 = scmp.ne.s32.totalorder %s89, %s90
      %p104 = scmp.eq.s32.totalorder %s18, 1
      %p105 = por %p103, %p104
      %p107 = scmp.ne.s32.totalorder %s90, %s106
      %p108 = scmp.eq.s32.totalorder %s18, 0
      %p109 = por %p107, %p108
      %s110 = ssub.s32 %s19, %s31
      %s111 = ssub.s32 %s20, %s27
      %s112 = sor.u32 %s110, %s111
      %p113 = scmp.eq.s32.totalorder %s112, 0
      %s115 = sadd.s32 %s114, 1
      %s116 = scalar_select %p113, %s114, %s115
      %p119 = pneg %p113
      %p120 = scmp.eq.s32.totalorder %s12, 1
      %p121 = por %p119, %p120
      %p122 = scmp.ne.s32.totalorder %s114, %s117
      %p123 = scmp.eq.s32.totalorder %s12, 0
      %p124 = por %p122, %p123
      %p125 = scmp.ne.s32.totalorder %s114, %s117
      %p126 = scmp.eq.s32.totalorder %s17, 1
      %p127 = por %p125, %p126
      %p128 = scmp.ne.s32.totalorder %s117, %s118
      %p129 = scmp.eq.s32.totalorder %s17, 0
      %p130 = por %p128, %p129
      %p131 = scmp.ne.s32.totalorder %s117, %s118
      %p132 = scmp.eq.s32.totalorder %s18, 1
      %p133 = por %p131, %p132
      %p135 = scmp.ne.s32.totalorder %s118, %s134
      %p136 = scmp.eq.s32.totalorder %s18, 0
      %p137 = por %p135, %p136
      %p138 = scmp.le.s32.totalorder 1, %s12
      %p139 = scmp.lt.s32.totalorder %s12, 3
      %p140 = pnand %p138, %p139
      %p141 = pneg %p140
      // Predicated region
      $region9: #{deeplab_forward.21} parent=5 // pred_check
        _
      $region10: #{deeplab_forward.21} parent=5 // pred_check_branch
        %143 = sbr.rel (%p140) target = $region12
      $region11: #{deeplab_forward.21} parent=5 // pred_region
        %s144 = ssub.s32 %s12, 1
        // Predicated region
        $region13: #{deeplab_forward.21} parent=11 // pred_check
          %p145 = pneg %p76
        $region14: #{deeplab_forward.21} parent=11 // pred_check_branch
          %147 = sbr.rel (%p145) target = $region16
        $region15: #{deeplab_forward.21} parent=11 // pred_region
          %p148 = scmp.lt.s32.totalorder %s22, 0
          %s149 = scalar_select %p148, %s22, 0
          %s150 = smul.addr %s149, 4
          %s151 = scalar_lea.vmem %s1, %s150
        $region16: #{deeplab_forward.21} parent=11 // pred_fallthru
          _
        // Predicated region
        $region17: #{deeplab_forward.21} parent=11 // pred_check
          %p152 = pneg %p102
        $region18: #{deeplab_forward.21} parent=11 // pred_check_branch
          %154 = sbr.rel (%p152) target = $region20
        $region19: #{deeplab_forward.21} parent=11 // pred_region
          %p155 = scmp.lt.s32.totalorder %s22, 0
          %s156 = scalar_select %p155, %s22, 0
          %s157 = scalar_lea.vmem %s2, %s156
        $region20: #{deeplab_forward.21} parent=11 // pred_fallthru
          _
      $region12: #{deeplab_forward.21} parent=5 // pred_fallthru
        _
      %p158 = scmp.lt.s32.totalorder %s12, 2
      // Predicated region
      $region21: #{deeplab_forward.21} parent=5 // pred_check
        %p159 = pneg %p158
      $region22: #{deeplab_forward.21} parent=5 // pred_check_branch
        %161 = sbr.rel (%p159) target = $region24
      $region23: #{deeplab_forward.21} parent=5 // pred_region
        // Predicated region
        $region25: #{deeplab_forward.21} parent=23 // pred_check
          %p162 = pneg %p44
        $region26: #{deeplab_forward.21} parent=23 // pred_check_branch
          %164 = sbr.rel (%p162) target = $region28
        $region27: #{deeplab_forward.21} parent=23 // pred_region
          %s165 = smul.u32 8, %s19
          %p166 = scmp.lt.s32.totalorder %s165, 15
          %s167 = scalar_select %p166, %s165, 15
          %s168 = smul.addr %s167, 4
          %s169 = scalar_lea.vmem %s0, %s168
          %s170 = smul.u32 8, %s19
        $region28: #{deeplab_forward.21} parent=23 // pred_fallthru
          _
      $region24: #{deeplab_forward.21} parent=5 // pred_fallthru
        _
      %p171 = scmp.le.s32.totalorder 1, %s12
      %p172 = scmp.lt.s32.totalorder %s12, 3
      %p173 = pnand %p171, %p172
      %p174 = pneg %p173
      // Predicated region
      $region29: #{deeplab_forward.21} parent=5 // pred_check
        _
      $region30: #{deeplab_forward.21} parent=5 // pred_check_branch
        %176 = sbr.rel (%p173) target = $region32
      $region31: #{deeplab_forward.21} parent=5 // pred_region
        %s177 = ssub.s32 %s12, 1
        %s178 = smul.u32 8, %s21
        %p179 = scmp.lt.s32.totalorder %s178, 15
        %s180 = scalar_select %p179, %s178, 15
        %s181 = smul.addr %s180, 4
        %s182 = scalar_lea.vmem %s0, %s181
        %p183 = pneg %p50
        %p184 = pneg %p47
        %p185 = scmp.lt.s32.totalorder %s22, 0
        %s186 = scalar_select %p185, %s22, 0
        %s187 = smul.addr %s186, 4
        %s188 = scalar_lea.vmem %s1, %s187
        %p189 = pneg %p76
        %p190 = pneg %p73
        %p191 = scmp.lt.s32.totalorder %s22, 0
        %s192 = scalar_select %p191, %s22, 0
        %s193 = scalar_lea.vmem %s2, %s192
        %p194 = pneg %p102
        %p195 = pneg %p99
        %p196 = pneg %p130
        %p197 = pneg %p127
        %s198 = sand.u32 %s117, 1
        %s199 = scalar_lea.sflag [#allocation3], %s198
        %s200 = sand.u32 %s117, 1
        %s201 = smul.addr %s200, 64
        %s202 = scalar_lea.vmem [#allocation2], %s201
        %s203 = smul.u32 8, %s21
        %p204 = scmp.lt.s32.totalorder %s203, 15
        %s205 = scalar_select %p204, %s203, 15
        %s206 = smul.addr %s205, 4
        %s207 = scalar_lea.vmem %s0, %s206
        %s208 = smul.u32 8, %s21
        %p209 = scmp.lt.s32.totalorder %s22, 0
        %s210 = scalar_select %p209, %s22, 0
        %s211 = smul.addr %s210, 4
        %s212 = scalar_lea.vmem %s1, %s211
        %p213 = scmp.lt.s32.totalorder %s22, 0
        %s214 = scalar_select %p213, %s22, 0
        %s215 = scalar_lea.vmem %s2, %s214
        %s216 = smul.u32 8, %s21
        %v218 = vld [vmem:[%s207] sm:$0xf]
        %v219 = vld [vmem:[%s207 + $0x4] sm:$0xf]
        %v220 = vld [vmem:[%s207 + $0x8] sm:$0xf]
        %v221 = vld [vmem:[%s207 + $0xc] sm:$0xf]
        %v222 = vld [vmem:[%s207 + $0x10] sm:$0xf]
        %v223 = vld [vmem:[%s207 + $0x14] sm:$0xf]
        %v224 = vld [vmem:[%s207 + $0x18] sm:$0xf]
        %v225 = vld [vmem:[%s207 + $0x1c] sm:$0xf]
        %v226 = vld [vmem:[%s212] sm:$0xf]
        %v227 = vld [vmem:[%s212 + $0x4] sm:$0xf]
        %v228 = vld [vmem:[%s212 + $0x8] sm:$0xf]
        %v229 = vld [vmem:[%s212 + $0xc] sm:$0xf]
        %v230 = vld [vmem:[%s215] sm:$0x1]
        %v232 = vperm.slane %v230, 0
        %v242 = vunpack.c.l.b16 %v218
        %v243 = vunpack.c.l.b16 %v219
        %v244 = vunpack.c.l.b16 %v220
        %v245 = vunpack.c.l.b16 %v221
        %v246 = vunpack.c.l.b16 %v222
        %v247 = vunpack.c.l.b16 %v223
        %v248 = vunpack.c.l.b16 %v224
        %v249 = vunpack.c.l.b16 %v225
        %v250 = vpack.c.b16 %v243, %v242
        %v251 = vpack.c.b16 %v245, %v244
        %v252 = vpack.c.b16 %v247, %v246
        %v253 = vpack.c.b16 %v249, %v248
        %v258 = vunpack.c.l.b16 %v226
        %v259 = vunpack.c.l.b16 %v227
        %v260 = vunpack.c.l.b16 %v228
        %v261 = vunpack.c.l.b16 %v229
        %v262 = vpack.c.b16 %v259, %v258
        %v263 = vpack.c.b16 %v261, %v260
        %vm266 = vcmask 261120
        %v268 = vsel %vm266, %v250, 0
        %v271 = vsel %vm266, %v251, 0
        %v274 = vsel %vm266, %v252, 0
        %v277 = vsel %vm266, %v253, 0
        %279 = vmatpush.bf16.msra.mxu0 0
        %280 = vmatpush.bf16.msra.mxu0 0
        %281 = vmatpush.bf16.msra.mxu0 0
        %282 = vmatpush.bf16.msra.mxu0 0
        %283 = vmatpush.bf16.msra.mxu0 0
        %284 = vmatpush.bf16.msra.mxu0 0
        %285 = vmatpush.bf16.msra.mxu0 %v263
        %286 = vmatpush.bf16.msra.mxu0 %v262
        %287 = vmatmul.bf16.gmra.mxu0 %v268
        %v288 = vpop.f32.mrf.mxu0
        %v289 = vadd.f32 %v232, %v288
        %v290 = vpop.f32.mrf.mxu0
        %v291 = vadd.f32 %v232, %v290
        %292 = vmatmul.bf16.gmra.mxu0 %v271
        %v293 = vpop.f32.mrf.mxu0
        %v294 = vadd.f32 %v232, %v293
        %v295 = vpop.f32.mrf.mxu0
        %v296 = vadd.f32 %v232, %v295
        %297 = vmatmul.bf16.gmra.mxu0 %v274
        %v298 = vpop.f32.mrf.mxu0
        %v299 = vadd.f32 %v232, %v298
        %v300 = vpop.f32.mrf.mxu0
        %v301 = vadd.f32 %v232, %v300
        %302 = vmatmul.bf16.gmra.mxu0 %v277
        %v303 = vpop.f32.mrf.mxu0
        %v304 = vadd.f32 %v232, %v303
        %v305 = vpop.f32.mrf.mxu0
        %v306 = vadd.f32 %v232, %v305
        %307 = vdwg.mxu0
        %vm308 = vcmask 171008
        %309 = vst.msk [vmem:[%s202] sm:$0xff] %vm308, %v289
        %310 = vst.msk [vmem:[%s202 + $0x8] sm:$0xff] %vm308, %v291
        %311 = vst.msk [vmem:[%s202 + $0x10] sm:$0xff] %vm308, %v294
        %312 = vst.msk [vmem:[%s202 + $0x18] sm:$0xff] %vm308, %v296
        %313 = vst.msk [vmem:[%s202 + $0x20] sm:$0xff] %vm308, %v299
        %314 = vst.msk [vmem:[%s202 + $0x28] sm:$0xff] %vm308, %v301
        %315 = vst.msk [vmem:[%s202 + $0x30] sm:$0xff] %vm308, %v304
        %316 = vst.msk [vmem:[%s202 + $0x38] sm:$0xff] %vm308, %v306
        %s317 = sand.u32 %s117, 1
        %s318 = scalar_lea.sflag [#allocation3], %s317
        %s319 = sand.u32 %s117, 1
        %s320 = smul.addr %s319, 64
        %s321 = scalar_lea.vmem [#allocation2], %s320
        // Predicated region
        $region33: #{deeplab_forward.21} parent=31 // pred_check
          %p322 = pneg %p127
        $region34: #{deeplab_forward.21} parent=31 // pred_check_branch
          %324 = sbr.rel (%p322) target = $region36
        $region35: #{deeplab_forward.21} parent=31 // pred_region
          %s325 = smul.u32 8, %s21
          %327 = vsyncadd %s318, 0
          %s328 = sadd.s32 %s22, %s325
          %s329 = smul.addr %s328, 8
          %s330 = scalar_lea.hbm %s3, %s329
          %s331 = sshll.u32 %s321, 4
          %s332 = int_to_ptr.vmem [resolvable:$true] %s331
          %s333 = sshll.u32 %s330, 4
          %s334 = int_to_ptr.hbm [resolvable:$true] %s333
          %339 = dma.vmem_to_hbm [thread:$0]  %s332, 1024, %s334, %s318, 128, 128, 8
        $region36: #{deeplab_forward.21} parent=31 // pred_fallthru
          _
      $region32: #{deeplab_forward.21} parent=5 // pred_fallthru
        _
      %p340 = scmp.le.s32.totalorder 2, %s12
      // Predicated region
      $region37: #{deeplab_forward.21} parent=5 // pred_check
        %p341 = pneg %p340
      $region38: #{deeplab_forward.21} parent=5 // pred_check_branch
        %343 = sbr.rel (%p341) target = $region40
      $region39: #{deeplab_forward.21} parent=5 // pred_region
        %s344 = ssub.s32 %s12, 2
        // Predicated region
        $region41: #{deeplab_forward.21} parent=39 // pred_check
          %p345 = pneg %p133
        $region42: #{deeplab_forward.21} parent=39 // pred_check_branch
          %347 = sbr.rel (%p345) target = $region44
        $region43: #{deeplab_forward.21} parent=39 // pred_region
          %s348 = sand.u32 %s118, 1
          %s349 = scalar_lea.sflag [#allocation3], %s348
          %s350 = sand.u32 %s118, 1
          %s351 = smul.addr %s350, 64
          %s352 = scalar_lea.vmem [#allocation2], %s351
          %354 = dma.done %s349, 1024
        $region44: #{deeplab_forward.21} parent=39 // pred_fallthru
          _
      $region40: #{deeplab_forward.21} parent=5 // pred_fallthru
        _
    $region6: #{deeplab_forward.21} parent=1 // loop_footer
      %s16 = sadd.s32 1, %s12
    $region7: #{deeplab_forward.21} parent=1 // loop_footer_branch
      %11 = sbr.rel target = $region3
    $region8: #{deeplab_forward.21} parent=1 // loop_exit
      _
    %355 = vsyncpa [#allocation3], 1
    %s356 = scalar_lea.sflag [#allocation3], 1
    %357 = vsyncpa %s356, 1

// kernel: deeplab_forward.20
$region0: #{deeplab_forward.20}
  #allocation0 [shape = 'u32[]', space=smem, size = 0x4, offset = 0x4, fixed_abs, tag = 'smem constant byte address 0x4 - core index']
  #allocation1 [shape = 'u32[72,128]{1,0:T(1,128)}', space=vmem, size = 0x9000, scoped, tag = 'internal scratch']
  %s0 = inlined_call_operand.vmem [shape: bf16[128,288], index: 0, kind: input, shape index: {}]
  %s1 = inlined_call_operand.vmem [shape: bf16[288,32], index: 1, kind: input, shape index: {}]
  %s2 = inlined_call_operand.vmem [shape: f32[1,32], index: 2, kind: input, shape index: {}]
  %s3 = inlined_call_operand.vmem [shape: f32[128,32], index: 3, kind: output, shape index: {}]
  %s4 = sld [smem:[#allocation0]]
  $region45: #{deeplab_forward.20} parent=0
    _
  %s6 = ssub.s32 1, %s4
  %s7 = scalar_select 0, %s6, %s4
  loop: start=0, step=1, limit=4
  $region2: #{deeplab_forward.20} parent=0 // loop_pre_header
    _
  $region3: #{deeplab_forward.20} parent=0 // loop_header
    %s9 = sphi 0, %s13
    %p10 = scmp.ge.s32.totalorder %s9, 4
    %s16 = sphi 0, %s28
    %s17 = sphi 0, %s24
    %s18 = sphi 0, %s16
    %s19 = sphi 0, %s17
    %s20 = sphi 0, %s18
    %s21 = sphi 0, %s19
    %s31 = sphi 0, %s33
    %s34 = sphi 0, %s31
    %s35 = sphi 0, %s34
    %s51 = sphi 0, %s35
    %s57 = sphi 0, %s59
    %s60 = sphi 0, %s57
    %s61 = sphi 0, %s60
    %s77 = sphi 0, %s61
    %s83 = sphi 0, %s85
    %s86 = sphi 0, %s83
    %s87 = sphi 0, %s86
    %s103 = sphi 0, %s87
    %s111 = sphi 0, %s113
    %s114 = sphi 0, %s111
    %s115 = sphi 0, %s114
    %s131 = sphi 0, %s115
  $region4: #{deeplab_forward.20} parent=0 // loop_header_branch
    %12 = sbr.rel (%p10) target = $region8
  $region5: #{deeplab_forward.20} parent=0 // loop_body
    %s14 = ssub.s32 %s9, 1
    %s15 = ssub.s32 %s9, 2
    %s22 = sadd.s32 1, %s17
    %p23 = scmp.ge.s32.totalorder %s22, 1
    %s24 = scalar_select %p23, 0, %s22
    %s25 = sadd.s32 1, %s16
    %s26 = scalar_select %p23, %s25, %s16
    %p27 = scmp.ge.s32.totalorder %s26, 2
    %s28 = scalar_select %p27, 0, %s26
    %s29 = ssub.s32 %s16, %s28
    %p30 = scmp.eq.s32.totalorder %s29, 0
    %s32 = sadd.s32 %s31, 1
    %s33 = scalar_select %p30, %s31, %s32
    %p36 = pneg %p30
    %p37 = scmp.eq.s32.totalorder %s9, 1
    %p38 = por %p36, %p37
    %p39 = scmp.ne.s32.totalorder %s31, %s34
    %p40 = scmp.eq.s32.totalorder %s9, 0
    %p41 = por %p39, %p40
    %p42 = scmp.ne.s32.totalorder %s31, %s34
    %p43 = scmp.eq.s32.totalorder %s14, 1
    %p44 = por %p42, %p43
    %p45 = scmp.ne.s32.totalorder %s34, %s35
    %p46 = scmp.eq.s32.totalorder %s14, 0
    %p47 = por %p45, %p46
    %p48 = scmp.ne.s32.totalorder %s34, %s35
    %p49 = scmp.eq.s32.totalorder %s15, 1
    %p50 = por %p48, %p49
    %p52 = scmp.ne.s32.totalorder %s35, %s51
    %p53 = scmp.eq.s32.totalorder %s15, 0
    %p54 = por %p52, %p53
    %s55 = ssub.s32 %s17, %s24
    %p56 = scmp.eq.s32.totalorder %s55, 0
    %s58 = sadd.s32 %s57, 1
    %s59 = scalar_select %p56, %s57, %s58
    %p62 = pneg %p56
    %p63 = scmp.eq.s32.totalorder %s9, 1
    %p64 = por %p62, %p63
    %p65 = scmp.ne.s32.totalorder %s57, %s60
    %p66 = scmp.eq.s32.totalorder %s9, 0
    %p67 = por %p65, %p66
    %p68 = scmp.ne.s32.totalorder %s57, %s60
    %p69 = scmp.eq.s32.totalorder %s14, 1
    %p70 = por %p68, %p69
    %p71 = scmp.ne.s32.totalorder %s60, %s61
    %p72 = scmp.eq.s32.totalorder %s14, 0
    %p73 = por %p71, %p72
    %p74 = scmp.ne.s32.totalorder %s60, %s61
    %p75 = scmp.eq.s32.totalorder %s15, 1
    %p76 = por %p74, %p75
    %p78 = scmp.ne.s32.totalorder %s61, %s77
    %p79 = scmp.eq.s32.totalorder %s15, 0
    %p80 = por %p78, %p79
    %s81 = ssub.s32 %s17, %s24
    %p82 = scmp.eq.s32.totalorder %s81, 0
    %s84 = sadd.s32 %s83, 1
    %s85 = scalar_select %p82, %s83, %s84
    %p88 = pneg %p82
    %p89 = scmp.eq.s32.totalorder %s9, 1
    %p90 = por %p88, %p89
    %p91 = scmp.ne.s32.totalorder %s83, %s86
    %p92 = scmp.eq.s32.totalorder %s9, 0
    %p93 = por %p91, %p92
    %p94 = scmp.ne.s32.totalorder %s83, %s86
    %p95 = scmp.eq.s32.totalorder %s14, 1
    %p96 = por %p94, %p95
    %p97 = scmp.ne.s32.totalorder %s86, %s87
    %p98 = scmp.eq.s32.totalorder %s14, 0
    %p99 = por %p97, %p98
    %p100 = scmp.ne.s32.totalorder %s86, %s87
    %p101 = scmp.eq.s32.totalorder %s15, 1
    %p102 = por %p100, %p101
    %p104 = scmp.ne.s32.totalorder %s87, %s103
    %p105 = scmp.eq.s32.totalorder %s15, 0
    %p106 = por %p104, %p105
    %s107 = ssub.s32 %s16, %s28
    %s108 = ssub.s32 %s17, %s24
    %s109 = sor.u32 %s107, %s108
    %p110 = scmp.eq.s32.totalorder %s109, 0
    %s112 = sadd.s32 %s111, 1
    %s113 = scalar_select %p110, %s111, %s112
    %p116 = pneg %p110
    %p117 = scmp.eq.s32.totalorder %s9, 1
    %p118 = por %p116, %p117
    %p119 = scmp.ne.s32.totalorder %s111, %s114
    %p120 = scmp.eq.s32.totalorder %s9, 0
    %p121 = por %p119, %p120
    %p122 = scmp.ne.s32.totalorder %s111, %s114
    %p123 = scmp.eq.s32.totalorder %s14, 1
    %p124 = por %p122, %p123
    %p125 = scmp.ne.s32.totalorder %s114, %s115
    %p126 = scmp.eq.s32.totalorder %s14, 0
    %p127 = por %p125, %p126
    %p128 = scmp.ne.s32.totalorder %s114, %s115
    %p129 = scmp.eq.s32.totalorder %s15, 1
    %p130 = por %p128, %p129
    %p132 = scmp.ne.s32.totalorder %s115, %s131
    %p133 = scmp.eq.s32.totalorder %s15, 0
    %p134 = por %p132, %p133
    %p135 = scmp.le.s32.totalorder 1, %s9
    %p136 = scmp.lt.s32.totalorder %s9, 3
    %p137 = pnand %p135, %p136
    %p138 = pneg %p137
    // Predicated region
    $region9: #{deeplab_forward.20} parent=5 // pred_check
      _
    $region10: #{deeplab_forward.20} parent=5 // pred_check_branch
      %140 = sbr.rel (%p137) target = $region12
    $region11: #{deeplab_forward.20} parent=5 // pred_region
      %s141 = ssub.s32 %s9, 1
      // Predicated region
      $region13: #{deeplab_forward.20} parent=11 // pred_check
        %p142 = pneg %p73
      $region14: #{deeplab_forward.20} parent=11 // pred_check_branch
        %144 = sbr.rel (%p142) target = $region16
      $region15: #{deeplab_forward.20} parent=11 // pred_region
        %p145 = scmp.lt.s32.totalorder %s19, 0
        %s146 = scalar_select %p145, %s19, 0
        %s147 = smul.addr %s146, 4
        %s148 = scalar_lea.vmem %s1, %s147
      $region16: #{deeplab_forward.20} parent=11 // pred_fallthru
        _
      // Predicated region
      $region17: #{deeplab_forward.20} parent=11 // pred_check
        %p149 = pneg %p99
      $region18: #{deeplab_forward.20} parent=11 // pred_check_branch
        %151 = sbr.rel (%p149) target = $region20
      $region19: #{deeplab_forward.20} parent=11 // pred_region
        %p152 = scmp.lt.s32.totalorder %s19, 0
        %s153 = scalar_select %p152, %s19, 0
        %s154 = scalar_lea.vmem %s2, %s153
      $region20: #{deeplab_forward.20} parent=11 // pred_fallthru
        _
    $region12: #{deeplab_forward.20} parent=5 // pred_fallthru
      _
    %p155 = scmp.lt.s32.totalorder %s9, 2
    // Predicated region
    $region21: #{deeplab_forward.20} parent=5 // pred_check
      %p156 = pneg %p155
    $region22: #{deeplab_forward.20} parent=5 // pred_check_branch
      %158 = sbr.rel (%p156) target = $region24
    $region23: #{deeplab_forward.20} parent=5 // pred_region
      // Predicated region
      $region25: #{deeplab_forward.20} parent=23 // pred_check
        %p159 = pneg %p41
      $region26: #{deeplab_forward.20} parent=23 // pred_check_branch
        %161 = sbr.rel (%p159) target = $region28
      $region27: #{deeplab_forward.20} parent=23 // pred_region
        %s162 = smul.u32 8, %s16
        %p163 = scmp.lt.s32.totalorder %s162, 15
        %s164 = scalar_select %p163, %s162, 15
        %s165 = smul.addr %s164, 3
        %s166 = smul.addr %s165, 4
        %s167 = scalar_lea.vmem %s0, %s166
        %s168 = smul.u32 8, %s16
      $region28: #{deeplab_forward.20} parent=23 // pred_fallthru
        _
    $region24: #{deeplab_forward.20} parent=5 // pred_fallthru
      _
    %p169 = scmp.le.s32.totalorder 1, %s9
    %p170 = scmp.lt.s32.totalorder %s9, 3
    %p171 = pnand %p169, %p170
    %p172 = pneg %p171
    // Predicated region
    $region29: #{deeplab_forward.20} parent=5 // pred_check
      _
    $region30: #{deeplab_forward.20} parent=5 // pred_check_branch
      %174 = sbr.rel (%p171) target = $region32
    $region31: #{deeplab_forward.20} parent=5 // pred_region
      %s175 = ssub.s32 %s9, 1
      %s176 = smul.u32 8, %s18
      %p177 = scmp.lt.s32.totalorder %s176, 15
      %s178 = scalar_select %p177, %s176, 15
      %s179 = smul.addr %s178, 3
      %s180 = smul.addr %s179, 4
      %s181 = scalar_lea.vmem %s0, %s180
      %p182 = pneg %p47
      %p183 = pneg %p44
      %p184 = scmp.lt.s32.totalorder %s19, 0
      %s185 = scalar_select %p184, %s19, 0
      %s186 = smul.addr %s185, 4
      %s187 = scalar_lea.vmem %s1, %s186
      %p188 = pneg %p73
      %p189 = pneg %p70
      %p190 = scmp.lt.s32.totalorder %s19, 0
      %s191 = scalar_select %p190, %s19, 0
      %s192 = scalar_lea.vmem %s2, %s191
      %p193 = pneg %p99
      %p194 = pneg %p96
      %p195 = pneg %p127
      %p196 = pneg %p124
      %s197 = smul.u32 8, %s18
      %p198 = scmp.lt.s32.totalorder %s197, 15
      %s199 = scalar_select %p198, %s197, 15
      %p200 = scmp.lt.s32.totalorder %s19, 0
      %s201 = scalar_select %p200, %s19, 0
      %s202 = sadd.s32 %s201, %s199
      %s203 = smul.addr %s202, 8
      %s204 = scalar_lea.vmem %s3, %s203
      %s205 = smul.u32 8, %s18
      %p206 = scmp.lt.s32.totalorder %s205, 15
      %s207 = scalar_select %p206, %s205, 15
      %s208 = smul.addr %s207, 3
      %s209 = smul.addr %s208, 4
      %s210 = scalar_lea.vmem %s0, %s209
      %s211 = smul.u32 8, %s18
      %p212 = scmp.lt.s32.totalorder %s19, 0
      %s213 = scalar_select %p212, %s19, 0
      %s214 = smul.addr %s213, 4
      %s215 = scalar_lea.vmem %s1, %s214
      %p216 = scmp.lt.s32.totalorder %s19, 0
      %s217 = scalar_select %p216, %s19, 0
      %s218 = scalar_lea.vmem %s2, %s217
      %s219 = smul.u32 8, %s18
      %p220 = scmp.lt.s32.totalorder %s219, 15
      %s221 = scalar_select %p220, %s219, 15
      %p222 = scmp.lt.s32.totalorder %s19, 0
      %s223 = scalar_select %p222, %s19, 0
      %s224 = sadd.s32 %s223, %s221
      %s225 = smul.addr %s224, 8
      %s226 = scalar_lea.vmem %s3, %s225
      %s227 = smul.u32 8, %s18
      %v229 = vld [vmem:[%s210] sm:$0xff]
      %v230 = vld [vmem:[%s210 + $0x8] sm:$0xf]
      %v231 = vld [vmem:[%s210 + $0xc] sm:$0xff]
      %v232 = vld [vmem:[%s210 + $0x14] sm:$0xf]
      %v233 = vld [vmem:[%s210 + $0x18] sm:$0xff]
      %v234 = vld [vmem:[%s210 + $0x20] sm:$0xf]
      %v235 = vld [vmem:[%s210 + $0x24] sm:$0xff]
      %v236 = vld [vmem:[%s210 + $0x2c] sm:$0xf]
      %v237 = vld [vmem:[%s210 + $0x30] sm:$0xff]
      %v238 = vld [vmem:[%s210 + $0x38] sm:$0xf]
      %v239 = vld [vmem:[%s210 + $0x3c] sm:$0xff]
      %v240 = vld [vmem:[%s210 + $0x44] sm:$0xf]
      %v241 = vld [vmem:[%s210 + $0x48] sm:$0xff]
      %v242 = vld [vmem:[%s210 + $0x50] sm:$0xf]
      %v243 = vld [vmem:[%s210 + $0x54] sm:$0xff]
      %v244 = vld [vmem:[%s210 + $0x5c] sm:$0xf]
      %v245 = vld [vmem:[%s215] sm:$0xf]
      %v246 = vld [vmem:[%s215 + $0x4] sm:$0xf]
      %v247 = vld [vmem:[%s215 + $0x8] sm:$0xf]
      %v248 = vld [vmem:[%s215 + $0xc] sm:$0xf]
      %v249 = vld [vmem:[%s215 + $0x10] sm:$0xf]
      %v250 = vld [vmem:[%s215 + $0x14] sm:$0xf]
      %v251 = vld [vmem:[%s215 + $0x18] sm:$0xf]
      %v252 = vld [vmem:[%s215 + $0x1c] sm:$0xf]
      %v253 = vld [vmem:[%s215 + $0x20] sm:$0xf]
      %v254 = vld [vmem:[%s215 + $0x24] sm:$0xf]
      %v255 = vld [vmem:[%s215 + $0x28] sm:$0xf]
      %v256 = vld [vmem:[%s215 + $0x2c] sm:$0xf]
      %v257 = vld [vmem:[%s215 + $0x30] sm:$0xf]
      %v258 = vld [vmem:[%s215 + $0x34] sm:$0xf]
      %v259 = vld [vmem:[%s215 + $0x38] sm:$0xf]
      %v260 = vld [vmem:[%s215 + $0x3c] sm:$0xf]
      %v261 = vld [vmem:[%s215 + $0x40] sm:$0xf]
      %v262 = vld [vmem:[%s215 + $0x44] sm:$0xf]
      %v263 = vld [vmem:[%s215 + $0x48] sm:$0xf]
      %v264 = vld [vmem:[%s215 + $0x4c] sm:$0xf]
      %v265 = vld [vmem:[%s215 + $0x50] sm:$0xf]
      %v266 = vld [vmem:[%s215 + $0x54] sm:$0xf]
      %v267 = vld [vmem:[%s215 + $0x58] sm:$0xf]
      %v268 = vld [vmem:[%s215 + $0x5c] sm:$0xf]
      %v269 = vld [vmem:[%s215 + $0x60] sm:$0xf]
      %v270 = vld [vmem:[%s215 + $0x64] sm:$0xf]
      %v271 = vld [vmem:[%s215 + $0x68] sm:$0xf]
      %v272 = vld [vmem:[%s215 + $0x6c] sm:$0xf]
      %v273 = vld [vmem:[%s215 + $0x70] sm:$0xf]
      %v274 = vld [vmem:[%s215 + $0x74] sm:$0xf]
      %v275 = vld [vmem:[%s215 + $0x78] sm:$0xf]
      %v276 = vld [vmem:[%s215 + $0x7c] sm:$0xf]
      %v277 = vld [vmem:[%s215 + $0x80] sm:$0xf]
      %v278 = vld [vmem:[%s215 + $0x84] sm:$0xf]
      %v279 = vld [vmem:[%s215 + $0x88] sm:$0xf]
      %v280 = vld [vmem:[%s215 + $0x8c] sm:$0xf]
      %v281 = vld [vmem:[%s218] sm:$0x1]
      %v283 = vperm.slane %v281, 0
      %v301 = vunpack.c.l.b16 %v229
      %v302 = vunpack.c.h.b16 %v229
      %v303 = vunpack.c.l.b16 %v230
      %v304 = vunpack.c.l.b16 %v231
      %v305 = vunpack.c.h.b16 %v231
      %v306 = vunpack.c.l.b16 %v232
      %v307 = vunpack.c.l.b16 %v233
      %v308 = vunpack.c.h.b16 %v233
      %v309 = vunpack.c.l.b16 %v234
      %v310 = vunpack.c.l.b16 %v235
      %v311 = vunpack.c.h.b16 %v235
      %v312 = vunpack.c.l.b16 %v236
      %v313 = vunpack.c.l.b16 %v237
      %v314 = vunpack.c.h.b16 %v237
      %v315 = vunpack.c.l.b16 %v238
      %v316 = vunpack.c.l.b16 %v239
      %v317 = vunpack.c.h.b16 %v239
      %v318 = vunpack.c.l.b16 %v240
      %v319 = vunpack.c.l.b16 %v241
      %v320 = vunpack.c.h.b16 %v241
      %v321 = vunpack.c.l.b16 %v242
      %v322 = vunpack.c.l.b16 %v243
      %v323 = vunpack.c.h.b16 %v243
      %v324 = vunpack.c.l.b16 %v244
      %v325 = vpack.c.b16 %v304, %v301
      %v326 = vpack.c.b16 %v305, %v302
      %v327 = vpack.c.b16 %v306, %v303
      %v328 = vpack.c.b16 %v310, %v307
      %v329 = vpack.c.b16 %v311, %v308
      %v330 = vpack.c.b16 %v312, %v309
      %v331 = vpack.c.b16 %v316, %v313
      %v332 = vpack.c.b16 %v317, %v314
      %v333 = vpack.c.b16 %v318, %v315
      %v334 = vpack.c.b16 %v322, %v319
      %v335 = vpack.c.b16 %v323, %v320
      %v336 = vpack.c.b16 %v324, %v321
      %v381 = vunpack.c.l.b16 %v245
      %v382 = vunpack.c.l.b16 %v246
      %v383 = vunpack.c.l.b16 %v247
      %v384 = vunpack.c.l.b16 %v248
      %v385 = vunpack.c.l.b16 %v249
      %v386 = vunpack.c.l.b16 %v250
      %v387 = vunpack.c.l.b16 %v251
      %v388 = vunpack.c.l.b16 %v252
      %v389 = vunpack.c.l.b16 %v253
      %v390 = vunpack.c.l.b16 %v254
      %v391 = vunpack.c.l.b16 %v255
      %v392 = vunpack.c.l.b16 %v256
      %v393 = vunpack.c.l.b16 %v257
      %v394 = vunpack.c.l.b16 %v258
      %v395 = vunpack.c.l.b16 %v259
      %v396 = vunpack.c.l.b16 %v260
      %v397 = vunpack.c.l.b16 %v261
      %v398 = vunpack.c.l.b16 %v262
      %v399 = vunpack.c.l.b16 %v263
      %v400 = vunpack.c.l.b16 %v264
      %v401 = vunpack.c.l.b16 %v265
      %v402 = vunpack.c.l.b16 %v266
      %v403 = vunpack.c.l.b16 %v267
      %v404 = vunpack.c.l.b16 %v268
      %v405 = vunpack.c.l.b16 %v269
      %v406 = vunpack.c.l.b16 %v270
      %v407 = vunpack.c.l.b16 %v271
      %v408 = vunpack.c.l.b16 %v272
      %v409 = vunpack.c.l.b16 %v273
      %v410 = vunpack.c.l.b16 %v274
      %v411 = vunpack.c.l.b16 %v275
      %v412 = vunpack.c.l.b16 %v276
      %v413 = vunpack.c.l.b16 %v277
      %v414 = vunpack.c.l.b16 %v278
      %v415 = vunpack.c.l.b16 %v279
      %v416 = vunpack.c.l.b16 %v280
      %v417 = vpack.c.b16 %v382, %v381
      %v418 = vpack.c.b16 %v384, %v383
      %v419 = vpack.c.b16 %v386, %v385
      %v420 = vpack.c.b16 %v388, %v387
      %v421 = vpack.c.b16 %v390, %v389
      %v422 = vpack.c.b16 %v392, %v391
      %v423 = vpack.c.b16 %v394, %v393
      %v424 = vpack.c.b16 %v396, %v395
      %v425 = vpack.c.b16 %v398, %v397
      %v426 = vpack.c.b16 %v400, %v399
      %v427 = vpack.c.b16 %v402, %v401
      %v428 = vpack.c.b16 %v404, %v403
      %v429 = vpack.c.b16 %v406, %v405
      %v430 = vpack.c.b16 %v408, %v407
      %v431 = vpack.c.b16 %v410, %v409
      %v432 = vpack.c.b16 %v412, %v411
      %v433 = vpack.c.b16 %v414, %v413
      %v434 = vpack.c.b16 %v416, %v415
      %vm453 = vcmask 261120
      %v455 = vsel %vm453, %v327, 0
      %v458 = vsel %vm453, %v330, 0
      %v461 = vsel %vm453, %v333, 0
      %v464 = vsel %vm453, %v336, 0
      %466 = vmatpush.bf16.msra.mxu0 %v424
      %467 = vmatpush.bf16.msra.mxu0 %v423
      %468 = vmatpush.bf16.msra.mxu0 %v422
      %469 = vmatpush.bf16.msra.mxu0 %v421
      %470 = vmatpush.bf16.msra.mxu0 %v420
      %471 = vmatpush.bf16.msra.mxu0 %v419
      %472 = vmatpush.bf16.msra.mxu0 %v418
      %473 = vmatpush.bf16.msra.mxu0 %v417
      %474 = vmatmul.bf16.gmra.mxu0 %v325
      %v475 = vpop.f32.mrf.mxu0
      %v476 = vadd.f32 %v283, %v475
      %v477 = vpop.f32.mrf.mxu0
      %v478 = vadd.f32 %v283, %v477
      %479 = vmatmul.bf16.gmra.mxu0 %v328
      %v480 = vpop.f32.mrf.mxu0
      %v481 = vadd.f32 %v283, %v480
      %v482 = vpop.f32.mrf.mxu0
      %v483 = vadd.f32 %v283, %v482
      %484 = vmatmul.bf16.gmra.mxu0 %v331
      %v485 = vpop.f32.mrf.mxu0
      %v486 = vadd.f32 %v283, %v485
      %v487 = vpop.f32.mrf.mxu0
      %v488 = vadd.f32 %v283, %v487
      %489 = vmatmul.bf16.gmra.mxu0 %v334
      %v490 = vpop.f32.mrf.mxu0
      %v491 = vadd.f32 %v283, %v490
      %v492 = vpop.f32.mrf.mxu0
      %v493 = vadd.f32 %v283, %v492
      %494 = vdwg.mxu0
      %495 = vmatpush.bf16.msra.mxu0 %v432
      %496 = vmatpush.bf16.msra.mxu0 %v431
      %497 = vmatpush.bf16.msra.mxu0 %v430
      %498 = vmatpush.bf16.msra.mxu0 %v429
      %499 = vmatpush.bf16.msra.mxu0 %v428
      %500 = vmatpush.bf16.msra.mxu0 %v427
      %501 = vmatpush.bf16.msra.mxu0 %v426
      %502 = vmatpush.bf16.msra.mxu0 %v425
      %503 = vmatmul.bf16.gmra.mxu0 %v326
      %v504 = vpop.f32.mrf.mxu0
      %v505 = vadd.f32 %v476, %v504
      %v506 = vpop.f32.mrf.mxu0
      %v507 = vadd.f32 %v478, %v506
      %508 = vmatmul.bf16.gmra.mxu0 %v329
      %v509 = vpop.f32.mrf.mxu0
      %v510 = vadd.f32 %v481, %v509
      %v511 = vpop.f32.mrf.mxu0
      %v512 = vadd.f32 %v483, %v511
      %513 = vmatmul.bf16.gmra.mxu0 %v332
      %v514 = vpop.f32.mrf.mxu0
      %v515 = vadd.f32 %v486, %v514
      %v516 = vpop.f32.mrf.mxu0
      %v517 = vadd.f32 %v488, %v516
      %518 = vmatmul.bf16.gmra.mxu0 %v335
      %v519 = vpop.f32.mrf.mxu0
      %v520 = vadd.f32 %v491, %v519
      %v521 = vpop.f32.mrf.mxu0
      %v522 = vadd.f32 %v493, %v521
      %523 = vdwg.mxu0
      %524 = vmatpush.bf16.msra.mxu0 0
      %525 = vmatpush.bf16.msra.mxu0 0
      %526 = vmatpush.bf16.msra.mxu0 0
      %527 = vmatpush.bf16.msra.mxu0 0
      %528 = vmatpush.bf16.msra.mxu0 0
      %529 = vmatpush.bf16.msra.mxu0 0
      %530 = vmatpush.bf16.msra.mxu0 %v434
      %531 = vmatpush.bf16.msra.mxu0 %v433
      %532 = vmatmul.bf16.gmra.mxu0 %v455
      %v533 = vpop.f32.mrf.mxu0
      %v534 = vadd.f32 %v505, %v533
      %v535 = vpop.f32.mrf.mxu0
      %v536 = vadd.f32 %v507, %v535
      %537 = vmatmul.bf16.gmra.mxu0 %v458
      %v538 = vpop.f32.mrf.mxu0
      %v539 = vadd.f32 %v510, %v538
      %v540 = vpop.f32.mrf.mxu0
      %v541 = vadd.f32 %v512, %v540
      %542 = vmatmul.bf16.gmra.mxu0 %v461
      %v543 = vpop.f32.mrf.mxu0
      %v544 = vadd.f32 %v515, %v543
      %v545 = vpop.f32.mrf.mxu0
      %v546 = vadd.f32 %v517, %v545
      %547 = vmatmul.bf16.gmra.mxu0 %v464
      %v548 = vpop.f32.mrf.mxu0
      %v549 = vadd.f32 %v520, %v548
      %v550 = vpop.f32.mrf.mxu0
      %v551 = vadd.f32 %v522, %v550
      %552 = vdwg.mxu0
      %v553 = vmax.f32 %v534, 0.0
      %v554 = vmax.f32 %v536, 0.0
      %v555 = vmax.f32 %v539, 0.0
      %v556 = vmax.f32 %v541, 0.0
      %v557 = vmax.f32 %v544, 0.0
      %v558 = vmax.f32 %v546, 0.0
      %v559 = vmax.f32 %v549, 0.0
      %v560 = vmax.f32 %v551, 0.0
      %561 = vst.msk [vmem:[%s226] sm:$0xff] %vm453, %v553
      %562 = vst.msk [vmem:[%s226 + $0x8] sm:$0xff] %vm453, %v554
      %563 = vst.msk [vmem:[%s226 + $0x10] sm:$0xff] %vm453, %v555
      %564 = vst.msk [vmem:[%s226 + $0x18] sm:$0xff] %vm453, %v556
      %565 = vst.msk [vmem:[%s226 + $0x20] sm:$0xff] %vm453, %v557
      %566 = vst.msk [vmem:[%s226 + $0x28] sm:$0xff] %vm453, %v558
      %567 = vst.msk [vmem:[%s226 + $0x30] sm:$0xff] %vm453, %v559
      %568 = vst.msk [vmem:[%s226 + $0x38] sm:$0xff] %vm453, %v560
      %s569 = smul.u32 8, %s18
      %p570 = scmp.lt.s32.totalorder %s569, 15
      %s571 = scalar_select %p570, %s569, 15
      %p572 = scmp.lt.s32.totalorder %s19, 0
      %s573 = scalar_select %p572, %s19, 0
      %s574 = sadd.s32 %s573, %s571
      %s575 = smul.addr %s574, 8
      %s576 = scalar_lea.vmem %s3, %s575
      // Predicated region
      $region33: #{deeplab_forward.20} parent=31 // pred_check
        %p577 = pneg %p124
      $region34: #{deeplab_forward.20} parent=31 // pred_check_branch
        %579 = sbr.rel (%p577) target = $region36
      $region35: #{deeplab_forward.20} parent=31 // pred_region
        %s580 = smul.u32 8, %s18
      $region36: #{deeplab_forward.20} parent=31 // pred_fallthru
        _
    $region32: #{deeplab_forward.20} parent=5 // pred_fallthru
      _
    %p581 = scmp.le.s32.totalorder 2, %s9
    // Predicated region
    $region37: #{deeplab_forward.20} parent=5 // pred_check
      %p582 = pneg %p581
    $region38: #{deeplab_forward.20} parent=5 // pred_check_branch
      %584 = sbr.rel (%p582) target = $region40
    $region39: #{deeplab_forward.20} parent=5 // pred_region
      %s585 = ssub.s32 %s9, 2
      // Predicated region
      $region41: #{deeplab_forward.20} parent=39 // pred_check
        %p586 = pneg %p130
      $region42: #{deeplab_forward.20} parent=39 // pred_check_branch
        %588 = sbr.rel (%p586) target = $region44
      $region43: #{deeplab_forward.20} parent=39 // pred_region
        %s589 = smul.u32 8, %s20
        %p590 = scmp.lt.s32.totalorder %s589, 15
        %s591 = scalar_select %p590, %s589, 15
        %p592 = scmp.lt.s32.totalorder %s21, 0
        %s593 = scalar_select %p592, %s21, 0
        %s594 = sadd.s32 %s593, %s591
        %s595 = smul.addr %s594, 8
        %s596 = scalar_lea.vmem %s3, %s595
      $region44: #{deeplab_forward.20} parent=39 // pred_fallthru
        _
    $region40: #{deeplab_forward.20} parent=5 // pred_fallthru
      _
  $region6: #{deeplab_forward.20} parent=0 // loop_footer
    %s13 = sadd.s32 1, %s9
  $region7: #{deeplab_forward.20} parent=0 // loop_footer_branch
    %8 = sbr.rel target = $region3
  $region8: #{deeplab_forward.20} parent=0 // loop_exit
    _

</llo_original>
